<compile_context>
chip_gen: v6e
topology: v6e:2x2x1
jax: 0.10.0
libtpu: 0.0.40
codegen_flags: <defaults>
</compile_context>

<pallas_src>
import functools

import jax
import jax.numpy as jnp
from jax.experimental import pallas as pl
from jax.experimental.pallas import tpu as pltpu


def _hl_kernel(gdst_ref, gsrcT_ref, A_ref, hd_ref, d_dst_ref, wrl_ref, brl_ref,
               out_ref, zacc_ref, *, in_dim, p_l, p_h):
    D = in_dim
    k = pl.program_id(1)
    nk = pl.num_programs(1)

    @pl.when(k == 0)
    def _():
        zacc_ref[...] = jnp.zeros_like(zacc_ref)

    A_f32 = A_ref[...].astype(jnp.float32)        # (TM, TK) edge mask
    hd_blk = hd_ref[...]                          # (TK, D)  bf16, d_src pre-folded
    gd = gdst_ref[...]                            # (TM, 2)  dst gate scores (+bias)
    gsT = gsrcT_ref[...]                          # (2, TK)  src gate scores

    # ---- low-pass plane (serialized: only this plane's temps live now) ------
    _low = gd[:, 0:1] + gsT[0:1, :]               # (TM, TK)
    # relu(where(x>0, x, -p*x)) == where(x>0, x, -p*x) for p >= 0.
    g_low = jnp.where(_low > 0, _low, -p_l * _low)
    e_low = (g_low * A_f32).astype(jnp.bfloat16)  # masked, bf16 for the MXU
    zacc_ref[:, :D] += jnp.dot(e_low, hd_blk, preferred_element_type=jnp.float32)

    # ---- high-pass plane (sign of g_high folded into wrl_adj) ---------------
    _high = gd[:, 1:2] + gsT[1:2, :]
    g_high = jnp.where(_high > 0, _high, -p_h * _high)
    e_high = (g_high * A_f32).astype(jnp.bfloat16)
    zacc_ref[:, D:] += jnp.dot(e_high, hd_blk, preferred_element_type=jnp.float32)

    # ---- finalize: apply d_dst, fused WRL projection, store ------------------
    @pl.when(k == nk - 1)
    def _():
        z = zacc_ref[...] * d_dst_ref[...]        # (TM, 2D) * (TM, 1)
        out = jnp.dot(z, wrl_ref[...], preferred_element_type=jnp.float32) + brl_ref[...]
        out_ref[...] = out.astype(out_ref.dtype)


def hl_layer(h, A_int8, d, params, p_l, p_h, *, tile_m=256, tile_k=512):
    """h: (N, D) f32, A_int8: (N, N) int8 adjacency (A[dst, src]), d: (N, 1) f32.

    params = (wl, bl, wh, bh, wrl, brl) with
      wl  (2D, 1) : gate_low.weight.T     bl () : gate_low.bias
      wh  (2D, 1) : gate_high.weight.T    bh () : gate_high.bias
      wrl (2D, D) : WRL.weight.T          brl (1, D) : WRL.bias
    """
    N, D = h.shape
    assert p_l >= 0.0 and p_h >= 0.0, "relu elision requires non-negative p_l, p_h"
    wl, bl, wh, bh, wrl, brl = params

    tile_m = min(tile_m, N)
    tile_k = min(tile_k, N)
    assert N % tile_m == 0 and N % tile_k == 0, "N must be a multiple of tile_m/tile_k"
    grid = (N // tile_m, N // tile_k)

    # ---- hoisted gate scoring (one (N,D)x(D,4) matmul in XLA) ---------------
    wg_dst = jnp.concatenate([wl[:D], wh[:D]], axis=1)                 # (D, 2)
    wg_src = jnp.concatenate([wl[D:], wh[D:]], axis=1)                 # (D, 2)
    gdst = h @ wg_dst + jnp.stack([bl, bh]).reshape(1, 2)              # (N, 2) biases folded
    gsrcT = (h @ wg_src).T                                             # (2, N)

    # ---- fold d_src into the bf16 aggregation operand, sign into WRL --------
    hd = (d * h).astype(jnp.bfloat16)                                  # (N, D)
    wrl_adj = jnp.concatenate([wrl[:D], -wrl[D:]], axis=0)             # (2D, D)

    # ---- explicit scoped-VMEM limit sized from the resident set -------------
    def _vmem_estimate():
        a_b = 2 * tile_m * tile_k                     # int8 A, double-buffered
        hd_b = 2 * tile_k * D * 2                     # bf16 hd, double-buffered
        gdst_b = 2 * tile_m * 128 * 4                 # lane-padded small blocks
        gsrc_b = 2 * 8 * tile_k * 4
        dd_b = 2 * tile_m * 128 * 4
        w_b = 2 * (2 * D * D + D) * 4                 # wrl_adj + brl
        out_b = 2 * tile_m * D * 4
        acc_b = tile_m * 2 * D * 4                    # accumulator scratch
        temps = 4 * tile_m * tile_k * 4               # live elementwise planes
        return a_b + hd_b + gdst_b + gsrc_b + dd_b + w_b + out_b + acc_b + temps

    vmem_limit = int(min(max(2 * _vmem_estimate(), 32 * 1024 * 1024),
                         64 * 1024 * 1024))

    kernel = functools.partial(_hl_kernel, in_dim=D, p_l=float(p_l), p_h=float(p_h))
    return pl.pallas_call(
        kernel,
        out_shape=jax.ShapeDtypeStruct((N, D), jnp.float32),
        grid=grid,
        in_specs=[
            pl.BlockSpec((tile_m, 2), lambda i, k: (i, 0)),       # dst gate scores
            pl.BlockSpec((2, tile_k), lambda i, k: (0, k)),       # src gate scores^T
            pl.BlockSpec((tile_m, tile_k), lambda i, k: (i, k)),  # A int8 tile
            pl.BlockSpec((tile_k, D), lambda i, k: (k, 0)),       # hd bf16 tile
            pl.BlockSpec((tile_m, 1), lambda i, k: (i, 0)),       # d for dst rows
            pl.BlockSpec((2 * D, D), lambda i, k: (0, 0)),        # WRL weight (sign-folded)
            pl.BlockSpec((1, D), lambda i, k: (0, 0)),            # WRL bias
        ],
        out_specs=pl.BlockSpec((tile_m, D), lambda i, k: (i, 0)),
        scratch_shapes=[pltpu.VMEM((tile_m, 2 * D), jnp.float32)],  # [z_low | z_high]
        compiler_params=pltpu.CompilerParams(
            dimension_semantics=("parallel", "arbitrary"),
            vmem_limit_bytes=vmem_limit),
    )(gdst, gsrcT, A_int8, hd, d, wrl_adj, brl)


def hl_layer_ref(h, A, d, params, p_l, p_h):
    """Pure-JAX f32 reference with the original (unfused) math, for correctness."""
    D = h.shape[1]
    wl, bl, wh, bh, wrl, brl = params
    _low = h @ wl[:D] + (h @ wl[D:]).T + bl
    g_low = jnp.maximum(jnp.where(_low > 0, _low, -p_l * _low), 0.0)
    z_low = (g_low * d * d.T * A) @ h
    _high = h @ wh[:D] + (h @ wh[D:]).T + bh
    g_high = -jnp.maximum(jnp.where(_high > 0, _high, -p_h * _high), 0.0)
    z_high = (g_high * d * d.T * A) @ h
    return jnp.concatenate([z_low, z_high], axis=1) @ wrl + brl


def _xavier_normal(key, shape, gain=1.414):
    # shape follows PyTorch Linear.weight convention: (out_features, in_features)
    fan_out, fan_in = shape
    std = gain * (2.0 / (fan_in + fan_out)) ** 0.5
    return std * jax.random.normal(key, shape, dtype=jnp.float32)


if __name__ == "__main__":
    # Small, tile-friendly shapes: D lane-dense (128); grid (2, 2) exercises
    # both the parallel dst axis and the K accumulation axis.
    N, D = 512, 128
    TM, TK = 256, 256
    p_l, p_h = 0.3, 0.2

    root = jax.random.PRNGKey(0)
    k_h, k_adj, k_wl, k_wh, k_wrl, k_bl, k_bh, k_brl = jax.random.split(root, 8)

    # Node features.
    h = jax.random.normal(k_h, (N, D), dtype=jnp.float32)

    # Deterministic random graph (with self-loops), dense adjacency A[dst, src].
    A = (jax.random.uniform(k_adj, (N, N)) < 0.05).astype(jnp.float32)
    A = jnp.maximum(A, jnp.eye(N, dtype=jnp.float32))
    A_i8 = A.astype(jnp.int8)                           # kernel streams int8 A
    # Per-node norm d = 1/sqrt(in-degree) (self-loops guarantee degree >= 1).
    deg = jnp.sum(A, axis=1, keepdims=True)             # (N, 1)
    d = 1.0 / jnp.sqrt(deg)

    # Parameters (xavier_normal_(gain=1.414) for weights; small biases).
    gate_low_w = _xavier_normal(k_wl, (1, 2 * D))       # nn.Linear(2D, 1).weight
    gate_high_w = _xavier_normal(k_wh, (1, 2 * D))
    wrl_w = _xavier_normal(k_wrl, (D, 2 * D))           # nn.Linear(2D, D).weight
    gate_low_b = 0.01 * jax.random.normal(k_bl, (), dtype=jnp.float32)
    gate_high_b = 0.01 * jax.random.normal(k_bh, (), dtype=jnp.float32)
    wrl_b = 0.01 * jax.random.normal(k_brl, (1, D), dtype=jnp.float32)

    wl = gate_low_w.T                                   # (2D, 1)
    wh = gate_high_w.T                                  # (2D, 1)
    wrl = wrl_w.T                                       # (2D, D)

    params = (wl, gate_low_b, wh, gate_high_b, wrl, wrl_b)

    out = hl_layer(h, A_i8, d, params, p_l, p_h, tile_m=TM, tile_k=TK)
    out = jax.block_until_ready(out)

    ref = hl_layer_ref(h, A, d, params, p_l, p_h)
    assert out.shape == (N, D)
    # bf16 aggregation (f32 accumulation) -> loosened tolerance vs f32 reference.
    err = float(jnp.max(jnp.abs(out - ref)) / (jnp.max(jnp.abs(ref)) + 1e-6))
    assert err < 5e-2, f"mismatch vs JAX reference: scaled max error {err}"

    print("KERNEL_OK")
</pallas_src>

<mosaic_0001>
module attributes {stable_mosaic.version = 11 : i64} {
  func.func @_hl_kernel(%arg0: i32, %arg1: i32, %arg2: memref<256x2xf32, #tpu.memory_space<vmem>>, %arg3: memref<2x256xf32, #tpu.memory_space<vmem>>, %arg4: memref<256x256xi8, #tpu.memory_space<vmem>>, %arg5: memref<256x128xbf16, #tpu.memory_space<vmem>>, %arg6: memref<256x1xf32, #tpu.memory_space<vmem>>, %arg7: memref<256x128xf32, #tpu.memory_space<vmem>>, %arg8: memref<1x128xf32, #tpu.memory_space<vmem>>, %arg9: memref<256x128xf32, #tpu.memory_space<vmem>>, %arg10: memref<256x256xf32, #tpu.memory_space<vmem>>) attributes {dimension_semantics = [#tpu.dimension_semantics<parallel>, #tpu.dimension_semantics<arbitrary>], iteration_bounds = array<i64: 2, 2>, scalar_prefetch = 0 : i64, scratch_operands = 1 : i64, tpu.core_type = #tpu.core_type<tc>, window_params = [{transform_indices = @transform_0, window_bounds = array<i64: 256, 2>}, {transform_indices = @transform_1, window_bounds = array<i64: 2, 256>}, {transform_indices = @transform_2, window_bounds = array<i64: 256, 256>}, {transform_indices = @transform_3, window_bounds = array<i64: 256, 128>}, {transform_indices = @transform_4, window_bounds = array<i64: 256, 1>}, {pipeline_mode = #tpu.pipeline_mode<synchronous>, transform_indices = @transform_5, window_bounds = array<i64: 256, 128>}, {pipeline_mode = #tpu.pipeline_mode<synchronous>, transform_indices = @transform_6, window_bounds = array<i64: 1, 128>}, {transform_indices = @transform_7, window_bounds = array<i64: 256, 128>}]} {
    %c0_i32 = arith.constant 0 : i32
    %0 = arith.cmpi eq, %arg1, %c0_i32 : i32
    %1 = arith.extui %0 : i1 to i32
    %c0_i32_0 = arith.constant 0 : i32
    %2 = arith.cmpi ne, %1, %c0_i32_0 : i32
    scf.if %2 {
      %cst_21 = arith.constant 0.000000e+00 : f32
      %43 = vector.broadcast %cst_21 : f32 to vector<256x256xf32>
      %c0_22 = arith.constant 0 : index
      %c0_23 = arith.constant 0 : index
      %44 = vector.load %arg10[%c0_22, %c0_23] : memref<256x256xf32, #tpu.memory_space<vmem>>, vector<256x256xf32>
      tpu.vector_store %arg10[%c0_22, %c0_23], %43 {strides = array<i32>} : memref<256x256xf32, #tpu.memory_space<vmem>>, vector<256x256xf32>,
    } else {
    }
    %c0 = arith.constant 0 : index
    %c0_1 = arith.constant 0 : index
    %3 = vector.load %arg4[%c0, %c0_1] : memref<256x256xi8, #tpu.memory_space<vmem>>, vector<256x256xi8>
    %4 = arith.sitofp %3 : vector<256x256xi8> to vector<256x256xf32>
    %c0_2 = arith.constant 0 : index
    %c0_3 = arith.constant 0 : index
    %5 = vector.load %arg5[%c0_2, %c0_3] : memref<256x128xbf16, #tpu.memory_space<vmem>>, vector<256x128xbf16>
    %c0_4 = arith.constant 0 : index
    %c0_5 = arith.constant 0 : index
    %6 = vector.load %arg2[%c0_4, %c0_5] : memref<256x2xf32, #tpu.memory_space<vmem>>, vector<256x2xf32>
    %c0_6 = arith.constant 0 : index
    %c0_7 = arith.constant 0 : index
    %7 = vector.load %arg3[%c0_6, %c0_7] : memref<2x256xf32, #tpu.memory_space<vmem>>, vector<2x256xf32>
    %8 = vector.extract_strided_slice %6 {offsets = [0, 0], sizes = [256, 1], strides = [1, 1]} : vector<256x2xf32> to vector<256x1xf32>
    %9 = vector.extract_strided_slice %7 {offsets = [0, 0], sizes = [1, 256], strides = [1, 1]} : vector<2x256xf32> to vector<1x256xf32>
    %10 = vector.broadcast %8 : vector<256x1xf32> to vector<256x256xf32>
    %11 = vector.broadcast %9 : vector<1x256xf32> to vector<256x256xf32>
    %12 = arith.addf %10, %11 : vector<256x256xf32>
    %cst = arith.constant 0.000000e+00 : f32
    %13 = vector.broadcast %cst : f32 to vector<256x256xf32>
    %14 = arith.cmpf ogt, %12, %13 : vector<256x256xf32>
    %cst_8 = arith.constant -3.000000e-01 : f32
    %15 = vector.broadcast %cst_8 : f32 to vector<256x256xf32>
    %16 = arith.mulf %15, %12 : vector<256x256xf32>
    %17 = arith.select %14, %12, %16 : vector<256x256xi1>, vector<256x256xf32>
    %18 = arith.mulf %17, %4 : vector<256x256xf32>
    %19 = arith.truncf %18 : vector<256x256xf32> to vector<256x256xbf16>
    %c0_9 = arith.constant 0 : index
    %c0_10 = arith.constant 0 : index
    %20 = vector.load %arg10[%c0_9, %c0_10] : memref<256x256xf32, #tpu.memory_space<vmem>>, vector<256x128xf32>
    %cst_11 = arith.constant dense<0.000000e+00> : vector<256x128xf32>
    %21 = tpu.matmul %19, %5, %cst_11 {dimension_numbers = #tpu.dot_dimension_numbers<[1], [0], [0], [1], [0, 0, 1, 1], [], []>} : vector<256x256xbf16>, vector<256x128xbf16>, vector<256x128xf32> -> vector<256x128xf32>
    %22 = arith.addf %20, %21 : vector<256x128xf32>
    %c0_12 = arith.constant 0 : index
    %c0_13 = arith.constant 0 : index
    %23 = vector.load %arg10[%c0_12, %c0_13] : memref<256x256xf32, #tpu.memory_space<vmem>>, vector<256x128xf32>
    tpu.vector_store %arg10[%c0_12, %c0_13], %22 {strides = array<i32>} : memref<256x256xf32, #tpu.memory_space<vmem>>, vector<256x128xf32>,
    %24 = vector.extract_strided_slice %6 {offsets = [0, 1], sizes = [256, 1], strides = [1, 1]} : vector<256x2xf32> to vector<256x1xf32>
    %25 = vector.extract_strided_slice %7 {offsets = [1, 0], sizes = [1, 256], strides = [1, 1]} : vector<2x256xf32> to vector<1x256xf32>
    %26 = vector.broadcast %24 : vector<256x1xf32> to vector<256x256xf32>
    %27 = vector.broadcast %25 : vector<1x256xf32> to vector<256x256xf32>
    %28 = arith.addf %26, %27 : vector<256x256xf32>
    %cst_14 = arith.constant 0.000000e+00 : f32
    %29 = vector.broadcast %cst_14 : f32 to vector<256x256xf32>
    %30 = arith.cmpf ogt, %28, %29 : vector<256x256xf32>
    %cst_15 = arith.constant -2.000000e-01 : f32
    %31 = vector.broadcast %cst_15 : f32 to vector<256x256xf32>
    %32 = arith.mulf %31, %28 : vector<256x256xf32>
    %33 = arith.select %30, %28, %32 : vector<256x256xi1>, vector<256x256xf32>
    %34 = arith.mulf %33, %4 : vector<256x256xf32>
    %35 = arith.truncf %34 : vector<256x256xf32> to vector<256x256xbf16>
    %c0_16 = arith.constant 0 : index
    %c128 = arith.constant 128 : index
    %36 = vector.load %arg10[%c0_16, %c128] : memref<256x256xf32, #tpu.memory_space<vmem>>, vector<256x128xf32>
    %cst_17 = arith.constant dense<0.000000e+00> : vector<256x128xf32>
    %37 = tpu.matmul %35, %5, %cst_17 {dimension_numbers = #tpu.dot_dimension_numbers<[1], [0], [0], [1], [0, 0, 1, 1], [], []>} : vector<256x256xbf16>, vector<256x128xbf16>, vector<256x128xf32> -> vector<256x128xf32>
    %38 = arith.addf %36, %37 : vector<256x128xf32>
    %c0_18 = arith.constant 0 : index
    %c128_19 = arith.constant 128 : index
    %39 = vector.load %arg10[%c0_18, %c128_19] : memref<256x256xf32, #tpu.memory_space<vmem>>, vector<256x128xf32>
    tpu.vector_store %arg10[%c0_18, %c128_19], %38 {strides = array<i32>} : memref<256x256xf32, #tpu.memory_space<vmem>>, vector<256x128xf32>,
    %c1_i32 = arith.constant 1 : i32
    %40 = arith.cmpi eq, %arg1, %c1_i32 : i32
    %41 = arith.extui %40 : i1 to i32
    %c0_i32_20 = arith.constant 0 : i32
    %42 = arith.cmpi ne, %41, %c0_i32_20 : i32
    scf.if %42 {
      %c0_21 = arith.constant 0 : index
      %c0_22 = arith.constant 0 : index
      %43 = vector.load %arg10[%c0_21, %c0_22] : memref<256x256xf32, #tpu.memory_space<vmem>>, vector<256x256xf32>
      %c0_23 = arith.constant 0 : index
      %c0_24 = arith.constant 0 : index
      %44 = vector.load %arg6[%c0_23, %c0_24] : memref<256x1xf32, #tpu.memory_space<vmem>>, vector<256x1xf32>
      %45 = vector.broadcast %44 : vector<256x1xf32> to vector<256x256xf32>
      %46 = arith.mulf %43, %45 : vector<256x256xf32>
      %c0_25 = arith.constant 0 : index
      %c0_26 = arith.constant 0 : index
      %47 = vector.load %arg7[%c0_25, %c0_26] : memref<256x128xf32, #tpu.memory_space<vmem>>, vector<256x128xf32>
      %cst_27 = arith.constant dense<0.000000e+00> : vector<256x128xf32>
      %48 = tpu.matmul %46, %47, %cst_27 {dimension_numbers = #tpu.dot_dimension_numbers<[1], [0], [0], [1], [0, 0, 1, 1], [], []>} : vector<256x256xf32>, vector<256x128xf32>, vector<256x128xf32> -> vector<256x128xf32>
      %c0_28 = arith.constant 0 : index
      %c0_29 = arith.constant 0 : index
      %49 = vector.load %arg8[%c0_28, %c0_29] : memref<1x128xf32, #tpu.memory_space<vmem>>, vector<1x128xf32>
      %50 = vector.broadcast %49 : vector<1x128xf32> to vector<256x128xf32>
      %51 = arith.addf %48, %50 : vector<256x128xf32>
      %c0_30 = arith.constant 0 : index
      %c0_31 = arith.constant 0 : index
      %52 = vector.load %arg9[%c0_30, %c0_31] : memref<256x128xf32, #tpu.memory_space<vmem>>, vector<256x128xf32>
      tpu.vector_store %arg9[%c0_30, %c0_31], %51 {strides = array<i32>} : memref<256x128xf32, #tpu.memory_space<vmem>>, vector<256x128xf32>,
    } else {
    }
    return
  }
  func.func @transform_0(%arg0: i32, %arg1: i32) -> (i32, i32) {
    %c0_i32 = arith.constant 0 : i32
    %c0_i32_0 = arith.constant 0 : i32
    return %arg0, %c0_i32 : i32, i32
  }
  func.func @transform_1(%arg0: i32, %arg1: i32) -> (i32, i32) {
    %c0_i32 = arith.constant 0 : i32
    %c0_i32_0 = arith.constant 0 : i32
    return %c0_i32, %arg1 : i32, i32
  }
  func.func @transform_2(%arg0: i32, %arg1: i32) -> (i32, i32) {
    %c0_i32 = arith.constant 0 : i32
    return %arg0, %arg1 : i32, i32
  }
  func.func @transform_3(%arg0: i32, %arg1: i32) -> (i32, i32) {
    %c0_i32 = arith.constant 0 : i32
    %c0_i32_0 = arith.constant 0 : i32
    return %arg1, %c0_i32 : i32, i32
  }
  func.func @transform_4(%arg0: i32, %arg1: i32) -> (i32, i32) {
    %c0_i32 = arith.constant 0 : i32
    %c0_i32_0 = arith.constant 0 : i32
    return %arg0, %c0_i32 : i32, i32
  }
  func.func @transform_5(%arg0: i32, %arg1: i32) -> (i32, i32) {
    %c0_i32 = arith.constant 0 : i32
    %c0_i32_0 = arith.constant 0 : i32
    %c0_i32_1 = arith.constant 0 : i32
    return %c0_i32, %c0_i32_0 : i32, i32
  }
  func.func @transform_6(%arg0: i32, %arg1: i32) -> (i32, i32) {
    %c0_i32 = arith.constant 0 : i32
    %c0_i32_0 = arith.constant 0 : i32
    %c0_i32_1 = arith.constant 0 : i32
    return %c0_i32, %c0_i32_0 : i32, i32
  }
  func.func @transform_7(%arg0: i32, %arg1: i32) -> (i32, i32) {
    %c0_i32 = arith.constant 0 : i32
    %c0_i32_0 = arith.constant 0 : i32
    return %arg0, %c0_i32 : i32, i32
  }
}

</mosaic_0001>

<llo_original>
// kernel: tpu_custom_call.1
$region0: #{tpu_custom_call.1}
  #allocation0 [shape = 'u32[]', space=smem, size = 0x4, offset = 0x4, fixed_abs, tag = 'smem constant byte address 0x4 - core index']
  #allocation1 [shape = 'u32[144,128]{1,0:T(1,128)}', space=vmem, size = 0x12000, scoped, tag = 'internal scratch']
  #allocation2 [shape = 'f32[256,256]{1,0:T(8,128)}', space=vmem, size = 0x40000, scoped, tag = 'scratch operand']
  %s0 = inlined_call_operand.vmem [shape: f32[512,2], index: 0, kind: input, shape index: {}]
  %s1 = inlined_call_operand.vmem [shape: f32[2,512], index: 1, kind: input, shape index: {}]
  %s2 = inlined_call_operand.vmem [shape: s8[512,512], index: 2, kind: input, shape index: {}]
  %s3 = inlined_call_operand.vmem [shape: bf16[512,128], index: 3, kind: input, shape index: {}]
  %s4 = inlined_call_operand.vmem [shape: f32[512,1], index: 4, kind: input, shape index: {}]
  %s5 = inlined_call_operand.vmem [shape: f32[256,128], index: 5, kind: input, shape index: {}]
  %s6 = inlined_call_operand.vmem [shape: f32[1,128], index: 6, kind: input, shape index: {}]
  %s7 = inlined_call_operand.hbm [shape: f32[512,128], index: 7, kind: output, shape index: {}]
  %s8 = sld [smem:[#allocation0]]
  $region92: #{tpu_custom_call.1} parent=0
    _
  %s10 = ssub.s32 1, %s8
  %s11 = scalar_select 0, %s10, %s8
  $region1: #{tpu_custom_call.1} parent=0
    #allocation3 [shape = 'u8[131072]{0}', space=vmem, size = 0x20000, scoped, tag = 'input window, operand 2']
    #allocation4 [shape = 'u8[262144]{0}', space=vmem, size = 0x40000, scoped, tag = 'output window, operand 0']
    #allocation5 [shape = 's32[2]{0}', space=sflag, size = 0x8, scoped, tag = 'scoped memory for tpu_custom_call.1']
    %12 = vsyncpa [#allocation5], 0
    %s13 = scalar_lea.sflag [#allocation5], 1
    %14 = vsyncpa %s13, 0
    loop: start=0, step=1, limit=6
    $region2: #{tpu_custom_call.1} parent=1 // loop_pre_header
      _
    $region3: #{tpu_custom_call.1} parent=1 // loop_header
      %s16 = sphi 0, %s20
      %p17 = scmp.ge.s32.totalorder %s16, 6
      %s23 = sphi 0, %s35
      %s24 = sphi 0, %s31
      %s25 = sphi 0, %s23
      %s26 = sphi 0, %s24
      %s27 = sphi 0, %s25
      %s28 = sphi 0, %s26
      %s38 = sphi 0, %s40
      %s41 = sphi 0, %s38
      %s42 = sphi 0, %s41
      %s58 = sphi 0, %s42
      %s64 = sphi 0, %s66
      %s67 = sphi 0, %s64
      %s68 = sphi 0, %s67
      %s84 = sphi 0, %s68
      %s92 = sphi 0, %s94
      %s95 = sphi 0, %s92
      %s96 = sphi 0, %s95
      %s112 = sphi 0, %s96
      %s118 = sphi 0, %s120
      %s121 = sphi 0, %s118
      %s122 = sphi 0, %s121
      %s138 = sphi 0, %s122
      %s144 = sphi 0, %s146
      %s147 = sphi 0, %s144
      %s148 = sphi 0, %s147
      %s164 = sphi 0, %s148
      %s168 = sphi 0, %s168
      %s170 = sphi 0, %s168
      %s171 = sphi 0, %s170
      %s185 = sphi 0, %s171
      %s189 = sphi 0, %s189
      %s191 = sphi 0, %s189
      %s192 = sphi 0, %s191
      %s206 = sphi 0, %s192
      %s212 = sphi 0, %s214
      %s215 = sphi 0, %s212
      %s216 = sphi 0, %s215
      %s232 = sphi 0, %s216
    $region4: #{tpu_custom_call.1} parent=1 // loop_header_branch
      %19 = sbr.rel (%p17) target = $region8
    $region5: #{tpu_custom_call.1} parent=1 // loop_body
      %s21 = ssub.s32 %s16, 1
      %s22 = ssub.s32 %s16, 2
      %s29 = sadd.s32 1, %s24
      %p30 = scmp.ge.s32.totalorder %s29, 2
      %s31 = scalar_select %p30, 0, %s29
      %s32 = sadd.s32 1, %s23
      %s33 = scalar_select %p30, %s32, %s23
      %p34 = scmp.ge.s32.totalorder %s33, 2
      %s35 = scalar_select %p34, 0, %s33
      %s36 = ssub.s32 %s23, %s35
      %p37 = scmp.eq.s32.totalorder %s36, 0
      %s39 = sadd.s32 %s38, 1
      %s40 = scalar_select %p37, %s38, %s39
      %p43 = pneg %p37
      %p44 = scmp.eq.s32.totalorder %s16, 3
      %p45 = por %p43, %p44
      %p46 = scmp.ne.s32.totalorder %s38, %s41
      %p47 = scmp.eq.s32.totalorder %s16, 0
      %p48 = por %p46, %p47
      %p49 = scmp.ne.s32.totalorder %s38, %s41
      %p50 = scmp.eq.s32.totalorder %s21, 3
      %p51 = por %p49, %p50
      %p52 = scmp.ne.s32.totalorder %s41, %s42
      %p53 = scmp.eq.s32.totalorder %s21, 0
      %p54 = por %p52, %p53
      %p55 = scmp.ne.s32.totalorder %s41, %s42
      %p56 = scmp.eq.s32.totalorder %s22, 3
      %p57 = por %p55, %p56
      %p59 = scmp.ne.s32.totalorder %s42, %s58
      %p60 = scmp.eq.s32.totalorder %s22, 0
      %p61 = por %p59, %p60
      %s62 = ssub.s32 %s24, %s31
      %p63 = scmp.eq.s32.totalorder %s62, 0
      %s65 = sadd.s32 %s64, 1
      %s66 = scalar_select %p63, %s64, %s65
      %p69 = pneg %p63
      %p70 = scmp.eq.s32.totalorder %s16, 3
      %p71 = por %p69, %p70
      %p72 = scmp.ne.s32.totalorder %s64, %s67
      %p73 = scmp.eq.s32.totalorder %s16, 0
      %p74 = por %p72, %p73
      %p75 = scmp.ne.s32.totalorder %s64, %s67
      %p76 = scmp.eq.s32.totalorder %s21, 3
      %p77 = por %p75, %p76
      %p78 = scmp.ne.s32.totalorder %s67, %s68
      %p79 = scmp.eq.s32.totalorder %s21, 0
      %p80 = por %p78, %p79
      %p81 = scmp.ne.s32.totalorder %s67, %s68
      %p82 = scmp.eq.s32.totalorder %s22, 3
      %p83 = por %p81, %p82
      %p85 = scmp.ne.s32.totalorder %s68, %s84
      %p86 = scmp.eq.s32.totalorder %s22, 0
      %p87 = por %p85, %p86
      %s88 = ssub.s32 %s23, %s35
      %s89 = ssub.s32 %s24, %s31
      %s90 = sor.u32 %s88, %s89
      %p91 = scmp.eq.s32.totalorder %s90, 0
      %s93 = sadd.s32 %s92, 1
      %s94 = scalar_select %p91, %s92, %s93
      %p97 = pneg %p91
      %p98 = scmp.eq.s32.totalorder %s16, 3
      %p99 = por %p97, %p98
      %p100 = scmp.ne.s32.totalorder %s92, %s95
      %p101 = scmp.eq.s32.totalorder %s16, 0
      %p102 = por %p100, %p101
      %p103 = scmp.ne.s32.totalorder %s92, %s95
      %p104 = scmp.eq.s32.totalorder %s21, 3
      %p105 = por %p103, %p104
      %p106 = scmp.ne.s32.totalorder %s95, %s96
      %p107 = scmp.eq.s32.totalorder %s21, 0
      %p108 = por %p106, %p107
      %p109 = scmp.ne.s32.totalorder %s95, %s96
      %p110 = scmp.eq.s32.totalorder %s22, 3
      %p111 = por %p109, %p110
      %p113 = scmp.ne.s32.totalorder %s96, %s112
      %p114 = scmp.eq.s32.totalorder %s22, 0
      %p115 = por %p113, %p114
      %s116 = ssub.s32 %s24, %s31
      %p117 = scmp.eq.s32.totalorder %s116, 0
      %s119 = sadd.s32 %s118, 1
      %s120 = scalar_select %p117, %s118, %s119
      %p123 = pneg %p117
      %p124 = scmp.eq.s32.totalorder %s16, 3
      %p125 = por %p123, %p124
      %p126 = scmp.ne.s32.totalorder %s118, %s121
      %p127 = scmp.eq.s32.totalorder %s16, 0
      %p128 = por %p126, %p127
      %p129 = scmp.ne.s32.totalorder %s118, %s121
      %p130 = scmp.eq.s32.totalorder %s21, 3
      %p131 = por %p129, %p130
      %p132 = scmp.ne.s32.totalorder %s121, %s122
      %p133 = scmp.eq.s32.totalorder %s21, 0
      %p134 = por %p132, %p133
      %p135 = scmp.ne.s32.totalorder %s121, %s122
      %p136 = scmp.eq.s32.totalorder %s22, 3
      %p137 = por %p135, %p136
      %p139 = scmp.ne.s32.totalorder %s122, %s138
      %p140 = scmp.eq.s32.totalorder %s22, 0
      %p141 = por %p139, %p140
      %s142 = ssub.s32 %s23, %s35
      %p143 = scmp.eq.s32.totalorder %s142, 0
      %s145 = sadd.s32 %s144, 1
      %s146 = scalar_select %p143, %s144, %s145
      %p149 = pneg %p143
      %p150 = scmp.eq.s32.totalorder %s16, 3
      %p151 = por %p149, %p150
      %p152 = scmp.ne.s32.totalorder %s144, %s147
      %p153 = scmp.eq.s32.totalorder %s16, 0
      %p154 = por %p152, %p153
      %p155 = scmp.ne.s32.totalorder %s144, %s147
      %p156 = scmp.eq.s32.totalorder %s21, 3
      %p157 = por %p155, %p156
      %p158 = scmp.ne.s32.totalorder %s147, %s148
      %p159 = scmp.eq.s32.totalorder %s21, 0
      %p160 = por %p158, %p159
      %p161 = scmp.ne.s32.totalorder %s147, %s148
      %p162 = scmp.eq.s32.totalorder %s22, 3
      %p163 = por %p161, %p162
      %p165 = scmp.ne.s32.totalorder %s148, %s164
      %p166 = scmp.eq.s32.totalorder %s22, 0
      %p167 = por %p165, %p166
      %s169 = sadd.s32 %s168, 1
      %p172 = scmp.eq.s32.totalorder %s16, 3
      %p173 = scmp.ne.s32.totalorder %s168, %s170
      %p174 = scmp.eq.s32.totalorder %s16, 0
      %p175 = por %p173, %p174
      %p176 = scmp.ne.s32.totalorder %s168, %s170
      %p177 = scmp.eq.s32.totalorder %s21, 3
      %p178 = por %p176, %p177
      %p179 = scmp.ne.s32.totalorder %s170, %s171
      %p180 = scmp.eq.s32.totalorder %s21, 0
      %p181 = por %p179, %p180
      %p182 = scmp.ne.s32.totalorder %s170, %s171
      %p183 = scmp.eq.s32.totalorder %s22, 3
      %p184 = por %p182, %p183
      %p186 = scmp.ne.s32.totalorder %s171, %s185
      %p187 = scmp.eq.s32.totalorder %s22, 0
      %p188 = por %p186, %p187
      %s190 = sadd.s32 %s189, 1
      %p193 = scmp.eq.s32.totalorder %s16, 3
      %p194 = scmp.ne.s32.totalorder %s189, %s191
      %p195 = scmp.eq.s32.totalorder %s16, 0
      %p196 = por %p194, %p195
      %p197 = scmp.ne.s32.totalorder %s189, %s191
      %p198 = scmp.eq.s32.totalorder %s21, 3
      %p199 = por %p197, %p198
      %p200 = scmp.ne.s32.totalorder %s191, %s192
      %p201 = scmp.eq.s32.totalorder %s21, 0
      %p202 = por %p200, %p201
      %p203 = scmp.ne.s32.totalorder %s191, %s192
      %p204 = scmp.eq.s32.totalorder %s22, 3
      %p205 = por %p203, %p204
      %p207 = scmp.ne.s32.totalorder %s192, %s206
      %p208 = scmp.eq.s32.totalorder %s22, 0
      %p209 = por %p207, %p208
      %s210 = ssub.s32 %s23, %s35
      %p211 = scmp.eq.s32.totalorder %s210, 0
      %s213 = sadd.s32 %s212, 1
      %s214 = scalar_select %p211, %s212, %s213
      %p217 = pneg %p211
      %p218 = scmp.eq.s32.totalorder %s16, 3
      %p219 = por %p217, %p218
      %p220 = scmp.ne.s32.totalorder %s212, %s215
      %p221 = scmp.eq.s32.totalorder %s16, 0
      %p222 = por %p220, %p221
      %p223 = scmp.ne.s32.totalorder %s212, %s215
      %p224 = scmp.eq.s32.totalorder %s21, 3
      %p225 = por %p223, %p224
      %p226 = scmp.ne.s32.totalorder %s215, %s216
      %p227 = scmp.eq.s32.totalorder %s21, 0
      %p228 = por %p226, %p227
      %p229 = scmp.ne.s32.totalorder %s215, %s216
      %p230 = scmp.eq.s32.totalorder %s22, 3
      %p231 = por %p229, %p230
      %p233 = scmp.ne.s32.totalorder %s216, %s232
      %p234 = scmp.eq.s32.totalorder %s22, 0
      %p235 = por %p233, %p234
      %p236 = scmp.le.s32.totalorder 1, %s16
      %p237 = scmp.lt.s32.totalorder %s16, 5
      %p238 = pnand %p236, %p237
      %p239 = pneg %p238
      // Predicated region
      $region9: #{tpu_custom_call.1} parent=5 // pred_check
        _
      $region10: #{tpu_custom_call.1} parent=5 // pred_check_branch
        %241 = sbr.rel (%p238) target = $region12
      $region11: #{tpu_custom_call.1} parent=5 // pred_region
        %s242 = ssub.s32 %s16, 1
        // Predicated region
        $region13: #{tpu_custom_call.1} parent=11 // pred_check
          %p243 = pneg %p181
        $region14: #{tpu_custom_call.1} parent=11 // pred_check_branch
          %245 = sbr.rel (%p243) target = $region16
        $region15: #{tpu_custom_call.1} parent=11 // pred_region
          _
        $region16: #{tpu_custom_call.1} parent=11 // pred_fallthru
          _
        // Predicated region
        $region17: #{tpu_custom_call.1} parent=11 // pred_check
          %p246 = pneg %p202
        $region18: #{tpu_custom_call.1} parent=11 // pred_check_branch
          %248 = sbr.rel (%p246) target = $region20
        $region19: #{tpu_custom_call.1} parent=11 // pred_region
          _
        $region20: #{tpu_custom_call.1} parent=11 // pred_fallthru
          _
      $region12: #{tpu_custom_call.1} parent=5 // pred_fallthru
        _
      %p249 = scmp.lt.s32.totalorder %s16, 4
      // Predicated region
      $region21: #{tpu_custom_call.1} parent=5 // pred_check
        %p250 = pneg %p249
      $region22: #{tpu_custom_call.1} parent=5 // pred_check_branch
        %252 = sbr.rel (%p250) target = $region24
      $region23: #{tpu_custom_call.1} parent=5 // pred_region
        // Predicated region
        $region25: #{tpu_custom_call.1} parent=23 // pred_check
          %p253 = pneg %p48
        $region26: #{tpu_custom_call.1} parent=23 // pred_check_branch
          %255 = sbr.rel (%p253) target = $region28
        $region27: #{tpu_custom_call.1} parent=23 // pred_region
          %s256 = smul.u32 32, %s23
          %p257 = scmp.lt.s32.totalorder %s256, 63
          %s258 = scalar_select %p257, %s256, 63
          %s259 = smul.addr %s258, 8
          %s260 = scalar_lea.vmem %s0, %s259
          %s261 = smul.u32 32, %s23
        $region28: #{tpu_custom_call.1} parent=23 // pred_fallthru
          _
        // Predicated region
        $region29: #{tpu_custom_call.1} parent=23 // pred_check
          %p262 = pneg %p74
        $region30: #{tpu_custom_call.1} parent=23 // pred_check_branch
          %264 = sbr.rel (%p262) target = $region32
        $region31: #{tpu_custom_call.1} parent=23 // pred_region
          %s265 = smul.u32 2, %s24
          %p266 = scmp.lt.s32.totalorder %s265, 3
          %s267 = scalar_select %p266, %s265, 3
          %s268 = smul.addr %s267, 2
          %s269 = scalar_lea.vmem %s1, %s268
          %s270 = smul.u32 2, %s24
        $region32: #{tpu_custom_call.1} parent=23 // pred_fallthru
          _
        // Predicated region
        $region33: #{tpu_custom_call.1} parent=23 // pred_check
          %p271 = pneg %p102
        $region34: #{tpu_custom_call.1} parent=23 // pred_check_branch
          %273 = sbr.rel (%p271) target = $region36
        $region35: #{tpu_custom_call.1} parent=23 // pred_region
          %s274 = sand.u32 %s92, 1
          %s275 = sand.u32 %s92, 1
          %s276 = smul.addr %s275, 128
          %s277 = scalar_lea.vmem [#allocation3], %s276
          %s278 = smul.u32 8, %s23
          %s279 = smul.u32 2, %s24
          %s280 = smul.addr %s278, 4
          %s281 = sadd.s32 %s279, %s280
          %s282 = smul.addr %s281, 8
          %s283 = scalar_lea.vmem %s2, %s282
          // Predicated region
          $region37: #{tpu_custom_call.1} parent=35 // pred_check
            _
          $region38: #{tpu_custom_call.1} parent=35 // pred_check_branch
            %285 = sbr.rel (0) target = $region40
          $region39: #{tpu_custom_call.1} parent=35 // pred_region
            // Predicated region
            $region41: #{tpu_custom_call.1} parent=39 // pred_check
              _
            $region42: #{tpu_custom_call.1} parent=39 // pred_check_branch
              %287 = sbr.rel (0) target = $region44
            $region43: #{tpu_custom_call.1} parent=39 // pred_region
              loop: start=0, step=1, limit=1
              $region45: #{tpu_custom_call.1} parent=43 // loop_pre_header
                _
              $region46: #{tpu_custom_call.1} parent=43 // loop_header
                %s289 = sphi 0, %s293
                %p290 = scmp.ge.s32.totalorder %s289, 1
                %s294 = sphi %s283, %s283
                %s295 = sphi %s277, %s277
              $region47: #{tpu_custom_call.1} parent=43 // loop_header_branch
                %292 = sbr.rel (%p290) target = $region51
              $region48: #{tpu_custom_call.1} parent=43 // loop_body
                %v296 = vld [vmem:[%s294] sm:$0xff]
                %297 = vst [vmem:[%s295] sm:$0xff] %v296
                %v298 = vld [vmem:[%s294 + $0x8] sm:$0xff]
                %299 = vst [vmem:[%s295 + $0x8] sm:$0xff] %v298
                %v300 = vld [vmem:[%s294 + $0x20] sm:$0xff]
                %301 = vst [vmem:[%s295 + $0x10] sm:$0xff] %v300
                %v302 = vld [vmem:[%s294 + $0x28] sm:$0xff]
                %303 = vst [vmem:[%s295 + $0x18] sm:$0xff] %v302
                %v304 = vld [vmem:[%s294 + $0x40] sm:$0xff]
                %305 = vst [vmem:[%s295 + $0x20] sm:$0xff] %v304
                %v306 = vld [vmem:[%s294 + $0x48] sm:$0xff]
                %307 = vst [vmem:[%s295 + $0x28] sm:$0xff] %v306
                %v308 = vld [vmem:[%s294 + $0x60] sm:$0xff]
                %309 = vst [vmem:[%s295 + $0x30] sm:$0xff] %v308
                %v310 = vld [vmem:[%s294 + $0x68] sm:$0xff]
                %311 = vst [vmem:[%s295 + $0x38] sm:$0xff] %v310
                %v312 = vld [vmem:[%s294 + $0x80] sm:$0xff]
                %313 = vst [vmem:[%s295 + $0x40] sm:$0xff] %v312
                %v314 = vld [vmem:[%s294 + $0x88] sm:$0xff]
                %315 = vst [vmem:[%s295 + $0x48] sm:$0xff] %v314
                %v316 = vld [vmem:[%s294 + $0xa0] sm:$0xff]
                %317 = vst [vmem:[%s295 + $0x50] sm:$0xff] %v316
                %v318 = vld [vmem:[%s294 + $0xa8] sm:$0xff]
                %319 = vst [vmem:[%s295 + $0x58] sm:$0xff] %v318
                %v320 = vld [vmem:[%s294 + $0xc0] sm:$0xff]
                %321 = vst [vmem:[%s295 + $0x60] sm:$0xff] %v320
                %v322 = vld [vmem:[%s294 + $0xc8] sm:$0xff]
                %323 = vst [vmem:[%s295 + $0x68] sm:$0xff] %v322
                %v324 = vld [vmem:[%s294 + $0xe0] sm:$0xff]
                %325 = vst [vmem:[%s295 + $0x70] sm:$0xff] %v324
                %v326 = vld [vmem:[%s294 + $0xe8] sm:$0xff]
                %327 = vst [vmem:[%s295 + $0x78] sm:$0xff] %v326
              $region49: #{tpu_custom_call.1} parent=43 // loop_footer
                %s293 = sadd.s32 1, %s289
              $region50: #{tpu_custom_call.1} parent=43 // loop_footer_branch
                %288 = sbr.rel target = $region46
              $region51: #{tpu_custom_call.1} parent=43 // loop_exit
                _
            $region44: #{tpu_custom_call.1} parent=39 // pred_fallthru
              _
            // Predicated region
            $region52: #{tpu_custom_call.1} parent=39 // pred_check
              _
            $region53: #{tpu_custom_call.1} parent=39 // pred_check_branch
              %329 = sbr.rel target = $region55
            $region54: #{tpu_custom_call.1} parent=39 // pred_region
              _
            $region55: #{tpu_custom_call.1} parent=39 // pred_fallthru
              _
          $region40: #{tpu_custom_call.1} parent=35 // pred_fallthru
            _
          %330 = vnop
        $region36: #{tpu_custom_call.1} parent=23 // pred_fallthru
          _
        // Predicated region
        $region56: #{tpu_custom_call.1} parent=23 // pred_check
          %p331 = pneg %p128
        $region57: #{tpu_custom_call.1} parent=23 // pred_check_branch
          %333 = sbr.rel (%p331) target = $region59
        $region58: #{tpu_custom_call.1} parent=23 // pred_region
          %s334 = smul.u32 32, %s24
          %p335 = scmp.lt.s32.totalorder %s334, 63
          %s336 = scalar_select %p335, %s334, 63
          %s337 = smul.addr %s336, 4
          %s338 = scalar_lea.vmem %s3, %s337
          %s339 = smul.u32 32, %s24
        $region59: #{tpu_custom_call.1} parent=23 // pred_fallthru
          _
        // Predicated region
        $region60: #{tpu_custom_call.1} parent=23 // pred_check
          %p340 = pneg %p154
        $region61: #{tpu_custom_call.1} parent=23 // pred_check_branch
          %342 = sbr.rel (%p340) target = $region63
        $region62: #{tpu_custom_call.1} parent=23 // pred_region
          %s343 = smul.u32 32, %s23
          %p344 = scmp.lt.s32.totalorder %s343, 63
          %s345 = scalar_select %p344, %s343, 63
          %s346 = smul.addr %s345, 8
          %s347 = scalar_lea.vmem %s4, %s346
          %s348 = smul.u32 32, %s23
        $region63: #{tpu_custom_call.1} parent=23 // pred_fallthru
          _
      $region24: #{tpu_custom_call.1} parent=5 // pred_fallthru
        _
      %p349 = scmp.le.s32.totalorder 1, %s16
      %p350 = scmp.lt.s32.totalorder %s16, 5
      %p351 = pnand %p349, %p350
      %p352 = pneg %p351
      // Predicated region
      $region64: #{tpu_custom_call.1} parent=5 // pred_check
        _
      $region65: #{tpu_custom_call.1} parent=5 // pred_check_branch
        %354 = sbr.rel (%p351) target = $region67
      $region66: #{tpu_custom_call.1} parent=5 // pred_region
        %s355 = ssub.s32 %s16, 1
        %s356 = sand.u32 %s95, 1
        %s357 = sand.u32 %s95, 1
        %s358 = smul.addr %s357, 128
        %s359 = scalar_lea.vmem [#allocation3], %s358
        // Predicated region
        $region68: #{tpu_custom_call.1} parent=66 // pred_check
          %p360 = pneg %p108
        $region69: #{tpu_custom_call.1} parent=66 // pred_check_branch
          %362 = sbr.rel (%p360) target = $region71
        $region70: #{tpu_custom_call.1} parent=66 // pred_region
          _
        $region71: #{tpu_custom_call.1} parent=66 // pred_fallthru
          _
        %s363 = smul.u32 32, %s25
        %p364 = scmp.lt.s32.totalorder %s363, 63
        %s365 = scalar_select %p364, %s363, 63
        %s366 = smul.addr %s365, 8
        %s367 = scalar_lea.vmem %s0, %s366
        %p368 = pneg %p54
        %p369 = pneg %p51
        %s370 = smul.u32 2, %s26
        %p371 = scmp.lt.s32.totalorder %s370, 3
        %s372 = scalar_select %p371, %s370, 3
        %s373 = smul.addr %s372, 2
        %s374 = scalar_lea.vmem %s1, %s373
        %p375 = pneg %p80
        %p376 = pneg %p77
        %s377 = sand.u32 %s95, 1
        %s378 = sand.u32 %s95, 1
        %s379 = smul.addr %s378, 128
        %s380 = scalar_lea.vmem [#allocation3], %s379
        %p381 = pneg %p108
        %p382 = pneg %p105
        %s383 = smul.u32 32, %s26
        %p384 = scmp.lt.s32.totalorder %s383, 63
        %s385 = scalar_select %p384, %s383, 63
        %s386 = smul.addr %s385, 4
        %s387 = scalar_lea.vmem %s3, %s386
        %p388 = pneg %p134
        %p389 = pneg %p131
        %s390 = smul.u32 32, %s25
        %p391 = scmp.lt.s32.totalorder %s390, 63
        %s392 = scalar_select %p391, %s390, 63
        %s393 = smul.addr %s392, 8
        %s394 = scalar_lea.vmem %s4, %s393
        %p395 = pneg %p160
        %p396 = pneg %p157
        %p397 = pneg %p181
        %p398 = pneg %p178
        %p399 = pneg %p202
        %p400 = pneg %p199
        %p401 = pneg %p228
        %p402 = pneg %p225
        %s403 = sand.u32 %s215, 1
        %s404 = scalar_lea.sflag [#allocation5], %s403
        %s405 = sand.u32 %s215, 1
        %s406 = smul.addr %s405, 256
        %s407 = scalar_lea.vmem [#allocation4], %s406
        %s408 = smul.u32 32, %s25
        %p409 = scmp.lt.s32.totalorder %s408, 63
        %s410 = scalar_select %p409, %s408, 63
        %s411 = smul.addr %s410, 8
        %s412 = scalar_lea.vmem %s0, %s411
        %s413 = smul.u32 32, %s25
        %s414 = smul.u32 2, %s26
        %p415 = scmp.lt.s32.totalorder %s414, 3
        %s416 = scalar_select %p415, %s414, 3
        %s417 = smul.addr %s416, 2
        %s418 = scalar_lea.vmem %s1, %s417
        %s419 = smul.u32 2, %s26
        %s420 = smul.u32 8, %s25
        %s421 = smul.u32 2, %s26
        %s422 = smul.u32 32, %s26
        %p423 = scmp.lt.s32.totalorder %s422, 63
        %s424 = scalar_select %p423, %s422, 63
        %s425 = smul.addr %s424, 4
        %s426 = scalar_lea.vmem %s3, %s425
        %s427 = smul.u32 32, %s26
        %s428 = smul.u32 32, %s25
        %p429 = scmp.lt.s32.totalorder %s428, 63
        %s430 = scalar_select %p429, %s428, 63
        %s431 = smul.addr %s430, 8
        %s432 = scalar_lea.vmem %s4, %s431
        %s433 = smul.u32 32, %s25
        %s434 = smul.u32 32, %s25
        %p436 = scmp.eq.s32.totalorder %s26, 0
        // Predicated region
        $region72: #{tpu_custom_call.1} parent=66 // pred_check
          %p437 = pneg %p436
        $region73: #{tpu_custom_call.1} parent=66 // pred_check_branch
          %439 = sbr.rel (%p437) target = $region75
        $region74: #{tpu_custom_call.1} parent=66 // pred_region
          %440 = vst [vmem:[#allocation2] sm:$0xff] 0.0
          %441 = vst [vmem:[#allocation2 + $0x8] sm:$0xff] 0.0
          %442 = vst [vmem:[#allocation2 + $0x10] sm:$0xff] 0.0
          %443 = vst [vmem:[#allocation2 + $0x18] sm:$0xff] 0.0
          %444 = vst [vmem:[#allocation2 + $0x20] sm:$0xff] 0.0
          %445 = vst [vmem:[#allocation2 + $0x28] sm:$0xff] 0.0
          %446 = vst [vmem:[#allocation2 + $0x30] sm:$0xff] 0.0
          %447 = vst [vmem:[#allocation2 + $0x38] sm:$0xff] 0.0
          %448 = vst [vmem:[#allocation2 + $0x40] sm:$0xff] 0.0
          %449 = vst [vmem:[#allocation2 + $0x48] sm:$0xff] 0.0
          %450 = vst [vmem:[#allocation2 + $0x50] sm:$0xff] 0.0
          %451 = vst [vmem:[#allocation2 + $0x58] sm:$0xff] 0.0
          %452 = vst [vmem:[#allocation2 + $0x60] sm:$0xff] 0.0
          %453 = vst [vmem:[#allocation2 + $0x68] sm:$0xff] 0.0
          %454 = vst [vmem:[#allocation2 + $0x70] sm:$0xff] 0.0
          %455 = vst [vmem:[#allocation2 + $0x78] sm:$0xff] 0.0
          %456 = vst [vmem:[#allocation2 + $0x80] sm:$0xff] 0.0
          %457 = vst [vmem:[#allocation2 + $0x88] sm:$0xff] 0.0
          %458 = vst [vmem:[#allocation2 + $0x90] sm:$0xff] 0.0
          %459 = vst [vmem:[#allocation2 + $0x98] sm:$0xff] 0.0
          %460 = vst [vmem:[#allocation2 + $0xa0] sm:$0xff] 0.0
          %461 = vst [vmem:[#allocation2 + $0xa8] sm:$0xff] 0.0
          %462 = vst [vmem:[#allocation2 + $0xb0] sm:$0xff] 0.0
          %463 = vst [vmem:[#allocation2 + $0xb8] sm:$0xff] 0.0
          %464 = vst [vmem:[#allocation2 + $0xc0] sm:$0xff] 0.0
          %465 = vst [vmem:[#allocation2 + $0xc8] sm:$0xff] 0.0
          %466 = vst [vmem:[#allocation2 + $0xd0] sm:$0xff] 0.0
          %467 = vst [vmem:[#allocation2 + $0xd8] sm:$0xff] 0.0
          %468 = vst [vmem:[#allocation2 + $0xe0] sm:$0xff] 0.0
          %469 = vst [vmem:[#allocation2 + $0xe8] sm:$0xff] 0.0
          %470 = vst [vmem:[#allocation2 + $0xf0] sm:$0xff] 0.0
          %471 = vst [vmem:[#allocation2 + $0xf8] sm:$0xff] 0.0
          %472 = vst [vmem:[#allocation2 + $0x100] sm:$0xff] 0.0
          %473 = vst [vmem:[#allocation2 + $0x108] sm:$0xff] 0.0
          %474 = vst [vmem:[#allocation2 + $0x110] sm:$0xff] 0.0
          %475 = vst [vmem:[#allocation2 + $0x118] sm:$0xff] 0.0
          %476 = vst [vmem:[#allocation2 + $0x120] sm:$0xff] 0.0
          %477 = vst [vmem:[#allocation2 + $0x128] sm:$0xff] 0.0
          %478 = vst [vmem:[#allocation2 + $0x130] sm:$0xff] 0.0
          %479 = vst [vmem:[#allocation2 + $0x138] sm:$0xff] 0.0
          %480 = vst [vmem:[#allocation2 + $0x140] sm:$0xff] 0.0
          %481 = vst [vmem:[#allocation2 + $0x148] sm:$0xff] 0.0
          %482 = vst [vmem:[#allocation2 + $0x150] sm:$0xff] 0.0
          %483 = vst [vmem:[#allocation2 + $0x158] sm:$0xff] 0.0
          %484 = vst [vmem:[#allocation2 + $0x160] sm:$0xff] 0.0
          %485 = vst [vmem:[#allocation2 + $0x168] sm:$0xff] 0.0
          %486 = vst [vmem:[#allocation2 + $0x170] sm:$0xff] 0.0
          %487 = vst [vmem:[#allocation2 + $0x178] sm:$0xff] 0.0
          %488 = vst [vmem:[#allocation2 + $0x180] sm:$0xff] 0.0
          %489 = vst [vmem:[#allocation2 + $0x188] sm:$0xff] 0.0
          %490 = vst [vmem:[#allocation2 + $0x190] sm:$0xff] 0.0
          %491 = vst [vmem:[#allocation2 + $0x198] sm:$0xff] 0.0
          %492 = vst [vmem:[#allocation2 + $0x1a0] sm:$0xff] 0.0
          %493 = vst [vmem:[#allocation2 + $0x1a8] sm:$0xff] 0.0
          %494 = vst [vmem:[#allocation2 + $0x1b0] sm:$0xff] 0.0
          %495 = vst [vmem:[#allocation2 + $0x1b8] sm:$0xff] 0.0
          %496 = vst [vmem:[#allocation2 + $0x1c0] sm:$0xff] 0.0
          %497 = vst [vmem:[#allocation2 + $0x1c8] sm:$0xff] 0.0
          %498 = vst [vmem:[#allocation2 + $0x1d0] sm:$0xff] 0.0
          %499 = vst [vmem:[#allocation2 + $0x1d8] sm:$0xff] 0.0
          %500 = vst [vmem:[#allocation2 + $0x1e0] sm:$0xff] 0.0
          %501 = vst [vmem:[#allocation2 + $0x1e8] sm:$0xff] 0.0
          %502 = vst [vmem:[#allocation2 + $0x1f0] sm:$0xff] 0.0
          %503 = vst [vmem:[#allocation2 + $0x1f8] sm:$0xff] 0.0
        $region75: #{tpu_custom_call.1} parent=66 // pred_fallthru
          _
        %v504 = vld [vmem:[%s359] sm:$0xff]
        %v505 = vld [vmem:[%s359 + $0x8] sm:$0xff]
        %v506 = vld [vmem:[%s359 + $0x10] sm:$0xff]
        %v507 = vld [vmem:[%s359 + $0x18] sm:$0xff]
        %v508 = vld [vmem:[%s359 + $0x20] sm:$0xff]
        %v509 = vld [vmem:[%s359 + $0x28] sm:$0xff]
        %v510 = vld [vmem:[%s359 + $0x30] sm:$0xff]
        %v511 = vld [vmem:[%s359 + $0x38] sm:$0xff]
        %v512 = vld [vmem:[%s359 + $0x40] sm:$0xff]
        %v513 = vld [vmem:[%s359 + $0x48] sm:$0xff]
        %v514 = vld [vmem:[%s359 + $0x50] sm:$0xff]
        %v515 = vld [vmem:[%s359 + $0x58] sm:$0xff]
        %v516 = vld [vmem:[%s359 + $0x60] sm:$0xff]
        %v517 = vld [vmem:[%s359 + $0x68] sm:$0xff]
        %v518 = vld [vmem:[%s359 + $0x70] sm:$0xff]
        %v519 = vld [vmem:[%s359 + $0x78] sm:$0xff]
        %v520 = vunpack.c.0.s8 %v504
        %v521 = vunpack.c.0.s8 %v505
        %v522 = vunpack.c.1.s8 %v504
        %v523 = vunpack.c.1.s8 %v505
        %v524 = vunpack.c.2.s8 %v504
        %v525 = vunpack.c.2.s8 %v505
        %v526 = vunpack.c.3.s8 %v504
        %v527 = vunpack.c.3.s8 %v505
        %v528 = vunpack.c.0.s8 %v506
        %v529 = vunpack.c.0.s8 %v507
        %v530 = vunpack.c.1.s8 %v506
        %v531 = vunpack.c.1.s8 %v507
        %v532 = vunpack.c.2.s8 %v506
        %v533 = vunpack.c.2.s8 %v507
        %v534 = vunpack.c.3.s8 %v506
        %v535 = vunpack.c.3.s8 %v507
        %v536 = vunpack.c.0.s8 %v508
        %v537 = vunpack.c.0.s8 %v509
        %v538 = vunpack.c.1.s8 %v508
        %v539 = vunpack.c.1.s8 %v509
        %v540 = vunpack.c.2.s8 %v508
        %v541 = vunpack.c.2.s8 %v509
        %v542 = vunpack.c.3.s8 %v508
        %v543 = vunpack.c.3.s8 %v509
        %v544 = vunpack.c.0.s8 %v510
        %v545 = vunpack.c.0.s8 %v511
        %v546 = vunpack.c.1.s8 %v510
        %v547 = vunpack.c.1.s8 %v511
        %v548 = vunpack.c.2.s8 %v510
        %v549 = vunpack.c.2.s8 %v511
        %v550 = vunpack.c.3.s8 %v510
        %v551 = vunpack.c.3.s8 %v511
        %v552 = vunpack.c.0.s8 %v512
        %v553 = vunpack.c.0.s8 %v513
        %v554 = vunpack.c.1.s8 %v512
        %v555 = vunpack.c.1.s8 %v513
        %v556 = vunpack.c.2.s8 %v512
        %v557 = vunpack.c.2.s8 %v513
        %v558 = vunpack.c.3.s8 %v512
        %v559 = vunpack.c.3.s8 %v513
        %v560 = vunpack.c.0.s8 %v514
        %v561 = vunpack.c.0.s8 %v515
        %v562 = vunpack.c.1.s8 %v514
        %v563 = vunpack.c.1.s8 %v515
        %v564 = vunpack.c.2.s8 %v514
        %v565 = vunpack.c.2.s8 %v515
        %v566 = vunpack.c.3.s8 %v514
        %v567 = vunpack.c.3.s8 %v515
        %v568 = vunpack.c.0.s8 %v516
        %v569 = vunpack.c.0.s8 %v517
        %v570 = vunpack.c.1.s8 %v516
        %v571 = vunpack.c.1.s8 %v517
        %v572 = vunpack.c.2.s8 %v516
        %v573 = vunpack.c.2.s8 %v517
        %v574 = vunpack.c.3.s8 %v516
        %v575 = vunpack.c.3.s8 %v517
        %v576 = vunpack.c.0.s8 %v518
        %v577 = vunpack.c.0.s8 %v519
        %v578 = vunpack.c.1.s8 %v518
        %v579 = vunpack.c.1.s8 %v519
        %v580 = vunpack.c.2.s8 %v518
        %v581 = vunpack.c.2.s8 %v519
        %v582 = vunpack.c.3.s8 %v518
        %v583 = vunpack.c.3.s8 %v519
        %v584 = vcvt.s32.f32 %v520
        %v585 = vcvt.s32.f32 %v521
        %v586 = vcvt.s32.f32 %v522
        %v587 = vcvt.s32.f32 %v523
        %v588 = vcvt.s32.f32 %v524
        %v589 = vcvt.s32.f32 %v525
        %v590 = vcvt.s32.f32 %v526
        %v591 = vcvt.s32.f32 %v527
        %v592 = vcvt.s32.f32 %v528
        %v593 = vcvt.s32.f32 %v529
        %v594 = vcvt.s32.f32 %v530
        %v595 = vcvt.s32.f32 %v531
        %v596 = vcvt.s32.f32 %v532
        %v597 = vcvt.s32.f32 %v533
        %v598 = vcvt.s32.f32 %v534
        %v599 = vcvt.s32.f32 %v535
        %v600 = vcvt.s32.f32 %v536
        %v601 = vcvt.s32.f32 %v537
        %v602 = vcvt.s32.f32 %v538
        %v603 = vcvt.s32.f32 %v539
        %v604 = vcvt.s32.f32 %v540
        %v605 = vcvt.s32.f32 %v541
        %v606 = vcvt.s32.f32 %v542
        %v607 = vcvt.s32.f32 %v543
        %v608 = vcvt.s32.f32 %v544
        %v609 = vcvt.s32.f32 %v545
        %v610 = vcvt.s32.f32 %v546
        %v611 = vcvt.s32.f32 %v547
        %v612 = vcvt.s32.f32 %v548
        %v613 = vcvt.s32.f32 %v549
        %v614 = vcvt.s32.f32 %v550
        %v615 = vcvt.s32.f32 %v551
        %v616 = vcvt.s32.f32 %v552
        %v617 = vcvt.s32.f32 %v553
        %v618 = vcvt.s32.f32 %v554
        %v619 = vcvt.s32.f32 %v555
        %v620 = vcvt.s32.f32 %v556
        %v621 = vcvt.s32.f32 %v557
        %v622 = vcvt.s32.f32 %v558
        %v623 = vcvt.s32.f32 %v559
        %v624 = vcvt.s32.f32 %v560
        %v625 = vcvt.s32.f32 %v561
        %v626 = vcvt.s32.f32 %v562
        %v627 = vcvt.s32.f32 %v563
        %v628 = vcvt.s32.f32 %v564
        %v629 = vcvt.s32.f32 %v565
        %v630 = vcvt.s32.f32 %v566
        %v631 = vcvt.s32.f32 %v567
        %v632 = vcvt.s32.f32 %v568
        %v633 = vcvt.s32.f32 %v569
        %v634 = vcvt.s32.f32 %v570
        %v635 = vcvt.s32.f32 %v571
        %v636 = vcvt.s32.f32 %v572
        %v637 = vcvt.s32.f32 %v573
        %v638 = vcvt.s32.f32 %v574
        %v639 = vcvt.s32.f32 %v575
        %v640 = vcvt.s32.f32 %v576
        %v641 = vcvt.s32.f32 %v577
        %v642 = vcvt.s32.f32 %v578
        %v643 = vcvt.s32.f32 %v579
        %v644 = vcvt.s32.f32 %v580
        %v645 = vcvt.s32.f32 %v581
        %v646 = vcvt.s32.f32 %v582
        %v647 = vcvt.s32.f32 %v583
        %v648 = vld [vmem:[%s426] sm:$0xf]
        %v649 = vld [vmem:[%s426 + $0x4] sm:$0xf]
        %v650 = vld [vmem:[%s426 + $0x8] sm:$0xf]
        %v651 = vld [vmem:[%s426 + $0xc] sm:$0xf]
        %v652 = vld [vmem:[%s426 + $0x10] sm:$0xf]
        %v653 = vld [vmem:[%s426 + $0x14] sm:$0xf]
        %v654 = vld [vmem:[%s426 + $0x18] sm:$0xf]
        %v655 = vld [vmem:[%s426 + $0x1c] sm:$0xf]
        %v656 = vld [vmem:[%s426 + $0x20] sm:$0xf]
        %v657 = vld [vmem:[%s426 + $0x24] sm:$0xf]
        %v658 = vld [vmem:[%s426 + $0x28] sm:$0xf]
        %v659 = vld [vmem:[%s426 + $0x2c] sm:$0xf]
        %v660 = vld [vmem:[%s426 + $0x30] sm:$0xf]
        %v661 = vld [vmem:[%s426 + $0x34] sm:$0xf]
        %v662 = vld [vmem:[%s426 + $0x38] sm:$0xf]
        %v663 = vld [vmem:[%s426 + $0x3c] sm:$0xf]
        %v664 = vld [vmem:[%s426 + $0x40] sm:$0xf]
        %v665 = vld [vmem:[%s426 + $0x44] sm:$0xf]
        %v666 = vld [vmem:[%s426 + $0x48] sm:$0xf]
        %v667 = vld [vmem:[%s426 + $0x4c] sm:$0xf]
        %v668 = vld [vmem:[%s426 + $0x50] sm:$0xf]
        %v669 = vld [vmem:[%s426 + $0x54] sm:$0xf]
        %v670 = vld [vmem:[%s426 + $0x58] sm:$0xf]
        %v671 = vld [vmem:[%s426 + $0x5c] sm:$0xf]
        %v672 = vld [vmem:[%s426 + $0x60] sm:$0xf]
        %v673 = vld [vmem:[%s426 + $0x64] sm:$0xf]
        %v674 = vld [vmem:[%s426 + $0x68] sm:$0xf]
        %v675 = vld [vmem:[%s426 + $0x6c] sm:$0xf]
        %v676 = vld [vmem:[%s426 + $0x70] sm:$0xf]
        %v677 = vld [vmem:[%s426 + $0x74] sm:$0xf]
        %v678 = vld [vmem:[%s426 + $0x78] sm:$0xf]
        %v679 = vld [vmem:[%s426 + $0x7c] sm:$0xf]
        %v680 = vld [vmem:[%s412] sm:$0xff]
        %v681 = vld [vmem:[%s412 + $0x8] sm:$0xff]
        %v682 = vld [vmem:[%s412 + $0x10] sm:$0xff]
        %v683 = vld [vmem:[%s412 + $0x18] sm:$0xff]
        %v684 = vld [vmem:[%s412 + $0x20] sm:$0xff]
        %v685 = vld [vmem:[%s412 + $0x28] sm:$0xff]
        %v686 = vld [vmem:[%s412 + $0x30] sm:$0xff]
        %v687 = vld [vmem:[%s412 + $0x38] sm:$0xff]
        %v688 = vld [vmem:[%s412 + $0x40] sm:$0xff]
        %v689 = vld [vmem:[%s412 + $0x48] sm:$0xff]
        %v690 = vld [vmem:[%s412 + $0x50] sm:$0xff]
        %v691 = vld [vmem:[%s412 + $0x58] sm:$0xff]
        %v692 = vld [vmem:[%s412 + $0x60] sm:$0xff]
        %v693 = vld [vmem:[%s412 + $0x68] sm:$0xff]
        %v694 = vld [vmem:[%s412 + $0x70] sm:$0xff]
        %v695 = vld [vmem:[%s412 + $0x78] sm:$0xff]
        %v696 = vld [vmem:[%s412 + $0x80] sm:$0xff]
        %v697 = vld [vmem:[%s412 + $0x88] sm:$0xff]
        %v698 = vld [vmem:[%s412 + $0x90] sm:$0xff]
        %v699 = vld [vmem:[%s412 + $0x98] sm:$0xff]
        %v700 = vld [vmem:[%s412 + $0xa0] sm:$0xff]
        %v701 = vld [vmem:[%s412 + $0xa8] sm:$0xff]
        %v702 = vld [vmem:[%s412 + $0xb0] sm:$0xff]
        %v703 = vld [vmem:[%s412 + $0xb8] sm:$0xff]
        %v704 = vld [vmem:[%s412 + $0xc0] sm:$0xff]
        %v705 = vld [vmem:[%s412 + $0xc8] sm:$0xff]
        %v706 = vld [vmem:[%s412 + $0xd0] sm:$0xff]
        %v707 = vld [vmem:[%s412 + $0xd8] sm:$0xff]
        %v708 = vld [vmem:[%s412 + $0xe0] sm:$0xff]
        %v709 = vld [vmem:[%s412 + $0xe8] sm:$0xff]
        %v710 = vld [vmem:[%s412 + $0xf0] sm:$0xff]
        %v711 = vld [vmem:[%s412 + $0xf8] sm:$0xff]
        %v712 = vld [vmem:[%s418] sm:$0xf]
        %714 = vset.pattern.permute.xlu0 0
        %715 = vperm.xlu0 %714, %v680
        %v716 = vpop.permute.xlu0 %715
        %719 = vset.pattern.permute.xlu0 0
        %720 = vperm.xlu0 %719, %v681
        %v721 = vpop.permute.xlu0 %720
        %724 = vset.pattern.permute.xlu0 0
        %725 = vperm.xlu0 %724, %v682
        %v726 = vpop.permute.xlu0 %725
        %729 = vset.pattern.permute.xlu0 0
        %730 = vperm.xlu0 %729, %v683
        %v731 = vpop.permute.xlu0 %730
        %734 = vset.pattern.permute.xlu0 0
        %735 = vperm.xlu0 %734, %v684
        %v736 = vpop.permute.xlu0 %735
        %739 = vset.pattern.permute.xlu0 0
        %740 = vperm.xlu0 %739, %v685
        %v741 = vpop.permute.xlu0 %740
        %744 = vset.pattern.permute.xlu0 0
        %745 = vperm.xlu0 %744, %v686
        %v746 = vpop.permute.xlu0 %745
        %749 = vset.pattern.permute.xlu0 0
        %750 = vperm.xlu0 %749, %v687
        %v751 = vpop.permute.xlu0 %750
        %754 = vset.pattern.permute.xlu0 0
        %755 = vperm.xlu0 %754, %v688
        %v756 = vpop.permute.xlu0 %755
        %759 = vset.pattern.permute.xlu0 0
        %760 = vperm.xlu0 %759, %v689
        %v761 = vpop.permute.xlu0 %760
        %764 = vset.pattern.permute.xlu0 0
        %765 = vperm.xlu0 %764, %v690
        %v766 = vpop.permute.xlu0 %765
        %769 = vset.pattern.permute.xlu0 0
        %770 = vperm.xlu0 %769, %v691
        %v771 = vpop.permute.xlu0 %770
        %774 = vset.pattern.permute.xlu0 0
        %775 = vperm.xlu0 %774, %v692
        %v776 = vpop.permute.xlu0 %775
        %779 = vset.pattern.permute.xlu0 0
        %780 = vperm.xlu0 %779, %v693
        %v781 = vpop.permute.xlu0 %780
        %784 = vset.pattern.permute.xlu0 0
        %785 = vperm.xlu0 %784, %v694
        %v786 = vpop.permute.xlu0 %785
        %789 = vset.pattern.permute.xlu0 0
        %790 = vperm.xlu0 %789, %v695
        %v791 = vpop.permute.xlu0 %790
        %794 = vset.pattern.permute.xlu0 0
        %795 = vperm.xlu0 %794, %v696
        %v796 = vpop.permute.xlu0 %795
        %799 = vset.pattern.permute.xlu0 0
        %800 = vperm.xlu0 %799, %v697
        %v801 = vpop.permute.xlu0 %800
        %804 = vset.pattern.permute.xlu0 0
        %805 = vperm.xlu0 %804, %v698
        %v806 = vpop.permute.xlu0 %805
        %809 = vset.pattern.permute.xlu0 0
        %810 = vperm.xlu0 %809, %v699
        %v811 = vpop.permute.xlu0 %810
        %814 = vset.pattern.permute.xlu0 0
        %815 = vperm.xlu0 %814, %v700
        %v816 = vpop.permute.xlu0 %815
        %819 = vset.pattern.permute.xlu0 0
        %820 = vperm.xlu0 %819, %v701
        %v821 = vpop.permute.xlu0 %820
        %824 = vset.pattern.permute.xlu0 0
        %825 = vperm.xlu0 %824, %v702
        %v826 = vpop.permute.xlu0 %825
        %829 = vset.pattern.permute.xlu0 0
        %830 = vperm.xlu0 %829, %v703
        %v831 = vpop.permute.xlu0 %830
        %834 = vset.pattern.permute.xlu0 0
        %835 = vperm.xlu0 %834, %v704
        %v836 = vpop.permute.xlu0 %835
        %839 = vset.pattern.permute.xlu0 0
        %840 = vperm.xlu0 %839, %v705
        %v841 = vpop.permute.xlu0 %840
        %844 = vset.pattern.permute.xlu0 0
        %845 = vperm.xlu0 %844, %v706
        %v846 = vpop.permute.xlu0 %845
        %849 = vset.pattern.permute.xlu0 0
        %850 = vperm.xlu0 %849, %v707
        %v851 = vpop.permute.xlu0 %850
        %854 = vset.pattern.permute.xlu0 0
        %855 = vperm.xlu0 %854, %v708
        %v856 = vpop.permute.xlu0 %855
        %859 = vset.pattern.permute.xlu0 0
        %860 = vperm.xlu0 %859, %v709
        %v861 = vpop.permute.xlu0 %860
        %864 = vset.pattern.permute.xlu0 0
        %865 = vperm.xlu0 %864, %v710
        %v866 = vpop.permute.xlu0 %865
        %869 = vset.pattern.permute.xlu0 0
        %870 = vperm.xlu0 %869, %v711
        %v871 = vpop.permute.xlu0 %870
        %v874 = vlaneseq
        %v875 = vshrl.u32 %v874, 7
        %v876 = vsub.s32 0, %v875
        %v877 = vrot.slane %v712, %v876
        %v878 = vlaneseq
        %v879 = vshrl.u32 %v878, 7
        %v880 = vsub.s32 2, %v879
        %v881 = vrot.slane %v712, %v880
        %v884 = vlaneseq
        %v885 = vshrl.u32 %v884, 7
        %v886 = vsub.s32 0, %v885
        %v887 = vrot.slane %v877, %v886
        %v888 = vlaneseq
        %v889 = vshrl.u32 %v888, 7
        %v890 = vsub.s32 0, %v889
        %v891 = vrot.slane %v881, %v890
        %v892 = vadd.f32 %v716, %v887
        %v893 = vadd.f32 %v716, %v891
        %v894 = vadd.f32 %v721, %v887
        %v895 = vadd.f32 %v721, %v891
        %v896 = vadd.f32 %v726, %v887
        %v897 = vadd.f32 %v726, %v891
        %v898 = vadd.f32 %v731, %v887
        %v899 = vadd.f32 %v731, %v891
        %v900 = vadd.f32 %v736, %v887
        %v901 = vadd.f32 %v736, %v891
        %v902 = vadd.f32 %v741, %v887
        %v903 = vadd.f32 %v741, %v891
        %v904 = vadd.f32 %v746, %v887
        %v905 = vadd.f32 %v746, %v891
        %v906 = vadd.f32 %v751, %v887
        %v907 = vadd.f32 %v751, %v891
        %v908 = vadd.f32 %v756, %v887
        %v909 = vadd.f32 %v756, %v891
        %v910 = vadd.f32 %v761, %v887
        %v911 = vadd.f32 %v761, %v891
        %v912 = vadd.f32 %v766, %v887
        %v913 = vadd.f32 %v766, %v891
        %v914 = vadd.f32 %v771, %v887
        %v915 = vadd.f32 %v771, %v891
        %v916 = vadd.f32 %v776, %v887
        %v917 = vadd.f32 %v776, %v891
        %v918 = vadd.f32 %v781, %v887
        %v919 = vadd.f32 %v781, %v891
        %v920 = vadd.f32 %v786, %v887
        %v921 = vadd.f32 %v786, %v891
        %v922 = vadd.f32 %v791, %v887
        %v923 = vadd.f32 %v791, %v891
        %v924 = vadd.f32 %v796, %v887
        %v925 = vadd.f32 %v796, %v891
        %v926 = vadd.f32 %v801, %v887
        %v927 = vadd.f32 %v801, %v891
        %v928 = vadd.f32 %v806, %v887
        %v929 = vadd.f32 %v806, %v891
        %v930 = vadd.f32 %v811, %v887
        %v931 = vadd.f32 %v811, %v891
        %v932 = vadd.f32 %v816, %v887
        %v933 = vadd.f32 %v816, %v891
        %v934 = vadd.f32 %v821, %v887
        %v935 = vadd.f32 %v821, %v891
        %v936 = vadd.f32 %v826, %v887
        %v937 = vadd.f32 %v826, %v891
        %v938 = vadd.f32 %v831, %v887
        %v939 = vadd.f32 %v831, %v891
        %v940 = vadd.f32 %v836, %v887
        %v941 = vadd.f32 %v836, %v891
        %v942 = vadd.f32 %v841, %v887
        %v943 = vadd.f32 %v841, %v891
        %v944 = vadd.f32 %v846, %v887
        %v945 = vadd.f32 %v846, %v891
        %v946 = vadd.f32 %v851, %v887
        %v947 = vadd.f32 %v851, %v891
        %v948 = vadd.f32 %v856, %v887
        %v949 = vadd.f32 %v856, %v891
        %v950 = vadd.f32 %v861, %v887
        %v951 = vadd.f32 %v861, %v891
        %v952 = vadd.f32 %v866, %v887
        %v953 = vadd.f32 %v866, %v891
        %v954 = vadd.f32 %v871, %v887
        %v955 = vadd.f32 %v871, %v891
        %vm956 = vcmp.gt.f32.partialorder %v892, 0.0
        %vm957 = vcmp.gt.f32.partialorder %v893, 0.0
        %vm958 = vcmp.gt.f32.partialorder %v894, 0.0
        %vm959 = vcmp.gt.f32.partialorder %v895, 0.0
        %vm960 = vcmp.gt.f32.partialorder %v896, 0.0
        %vm961 = vcmp.gt.f32.partialorder %v897, 0.0
        %vm962 = vcmp.gt.f32.partialorder %v898, 0.0
        %vm963 = vcmp.gt.f32.partialorder %v899, 0.0
        %vm964 = vcmp.gt.f32.partialorder %v900, 0.0
        %vm965 = vcmp.gt.f32.partialorder %v901, 0.0
        %vm966 = vcmp.gt.f32.partialorder %v902, 0.0
        %vm967 = vcmp.gt.f32.partialorder %v903, 0.0
        %vm968 = vcmp.gt.f32.partialorder %v904, 0.0
        %vm969 = vcmp.gt.f32.partialorder %v905, 0.0
        %vm970 = vcmp.gt.f32.partialorder %v906, 0.0
        %vm971 = vcmp.gt.f32.partialorder %v907, 0.0
        %vm972 = vcmp.gt.f32.partialorder %v908, 0.0
        %vm973 = vcmp.gt.f32.partialorder %v909, 0.0
        %vm974 = vcmp.gt.f32.partialorder %v910, 0.0
        %vm975 = vcmp.gt.f32.partialorder %v911, 0.0
        %vm976 = vcmp.gt.f32.partialorder %v912, 0.0
        %vm977 = vcmp.gt.f32.partialorder %v913, 0.0
        %vm978 = vcmp.gt.f32.partialorder %v914, 0.0
        %vm979 = vcmp.gt.f32.partialorder %v915, 0.0
        %vm980 = vcmp.gt.f32.partialorder %v916, 0.0
        %vm981 = vcmp.gt.f32.partialorder %v917, 0.0
        %vm982 = vcmp.gt.f32.partialorder %v918, 0.0
        %vm983 = vcmp.gt.f32.partialorder %v919, 0.0
        %vm984 = vcmp.gt.f32.partialorder %v920, 0.0
        %vm985 = vcmp.gt.f32.partialorder %v921, 0.0
        %vm986 = vcmp.gt.f32.partialorder %v922, 0.0
        %vm987 = vcmp.gt.f32.partialorder %v923, 0.0
        %vm988 = vcmp.gt.f32.partialorder %v924, 0.0
        %vm989 = vcmp.gt.f32.partialorder %v925, 0.0
        %vm990 = vcmp.gt.f32.partialorder %v926, 0.0
        %vm991 = vcmp.gt.f32.partialorder %v927, 0.0
        %vm992 = vcmp.gt.f32.partialorder %v928, 0.0
        %vm993 = vcmp.gt.f32.partialorder %v929, 0.0
        %vm994 = vcmp.gt.f32.partialorder %v930, 0.0
        %vm995 = vcmp.gt.f32.partialorder %v931, 0.0
        %vm996 = vcmp.gt.f32.partialorder %v932, 0.0
        %vm997 = vcmp.gt.f32.partialorder %v933, 0.0
        %vm998 = vcmp.gt.f32.partialorder %v934, 0.0
        %vm999 = vcmp.gt.f32.partialorder %v935, 0.0
        %vm1000 = vcmp.gt.f32.partialorder %v936, 0.0
        %vm1001 = vcmp.gt.f32.partialorder %v937, 0.0
        %vm1002 = vcmp.gt.f32.partialorder %v938, 0.0
        %vm1003 = vcmp.gt.f32.partialorder %v939, 0.0
        %vm1004 = vcmp.gt.f32.partialorder %v940, 0.0
        %vm1005 = vcmp.gt.f32.partialorder %v941, 0.0
        %vm1006 = vcmp.gt.f32.partialorder %v942, 0.0
        %vm1007 = vcmp.gt.f32.partialorder %v943, 0.0
        %vm1008 = vcmp.gt.f32.partialorder %v944, 0.0
        %vm1009 = vcmp.gt.f32.partialorder %v945, 0.0
        %vm1010 = vcmp.gt.f32.partialorder %v946, 0.0
        %vm1011 = vcmp.gt.f32.partialorder %v947, 0.0
        %vm1012 = vcmp.gt.f32.partialorder %v948, 0.0
        %vm1013 = vcmp.gt.f32.partialorder %v949, 0.0
        %vm1014 = vcmp.gt.f32.partialorder %v950, 0.0
        %vm1015 = vcmp.gt.f32.partialorder %v951, 0.0
        %vm1016 = vcmp.gt.f32.partialorder %v952, 0.0
        %vm1017 = vcmp.gt.f32.partialorder %v953, 0.0
        %vm1018 = vcmp.gt.f32.partialorder %v954, 0.0
        %vm1019 = vcmp.gt.f32.partialorder %v955, 0.0
        %v1020 = vmul.f32 %v892, -0.3
        %v1021 = vmul.f32 %v893, -0.3
        %v1022 = vmul.f32 %v894, -0.3
        %v1023 = vmul.f32 %v895, -0.3
        %v1024 = vmul.f32 %v896, -0.3
        %v1025 = vmul.f32 %v897, -0.3
        %v1026 = vmul.f32 %v898, -0.3
        %v1027 = vmul.f32 %v899, -0.3
        %v1028 = vmul.f32 %v900, -0.3
        %v1029 = vmul.f32 %v901, -0.3
        %v1030 = vmul.f32 %v902, -0.3
        %v1031 = vmul.f32 %v903, -0.3
        %v1032 = vmul.f32 %v904, -0.3
        %v1033 = vmul.f32 %v905, -0.3
        %v1034 = vmul.f32 %v906, -0.3
        %v1035 = vmul.f32 %v907, -0.3
        %v1036 = vmul.f32 %v908, -0.3
        %v1037 = vmul.f32 %v909, -0.3
        %v1038 = vmul.f32 %v910, -0.3
        %v1039 = vmul.f32 %v911, -0.3
        %v1040 = vmul.f32 %v912, -0.3
        %v1041 = vmul.f32 %v913, -0.3
        %v1042 = vmul.f32 %v914, -0.3
        %v1043 = vmul.f32 %v915, -0.3
        %v1044 = vmul.f32 %v916, -0.3
        %v1045 = vmul.f32 %v917, -0.3
        %v1046 = vmul.f32 %v918, -0.3
        %v1047 = vmul.f32 %v919, -0.3
        %v1048 = vmul.f32 %v920, -0.3
        %v1049 = vmul.f32 %v921, -0.3
        %v1050 = vmul.f32 %v922, -0.3
        %v1051 = vmul.f32 %v923, -0.3
        %v1052 = vmul.f32 %v924, -0.3
        %v1053 = vmul.f32 %v925, -0.3
        %v1054 = vmul.f32 %v926, -0.3
        %v1055 = vmul.f32 %v927, -0.3
        %v1056 = vmul.f32 %v928, -0.3
        %v1057 = vmul.f32 %v929, -0.3
        %v1058 = vmul.f32 %v930, -0.3
        %v1059 = vmul.f32 %v931, -0.3
        %v1060 = vmul.f32 %v932, -0.3
        %v1061 = vmul.f32 %v933, -0.3
        %v1062 = vmul.f32 %v934, -0.3
        %v1063 = vmul.f32 %v935, -0.3
        %v1064 = vmul.f32 %v936, -0.3
        %v1065 = vmul.f32 %v937, -0.3
        %v1066 = vmul.f32 %v938, -0.3
        %v1067 = vmul.f32 %v939, -0.3
        %v1068 = vmul.f32 %v940, -0.3
        %v1069 = vmul.f32 %v941, -0.3
        %v1070 = vmul.f32 %v942, -0.3
        %v1071 = vmul.f32 %v943, -0.3
        %v1072 = vmul.f32 %v944, -0.3
        %v1073 = vmul.f32 %v945, -0.3
        %v1074 = vmul.f32 %v946, -0.3
        %v1075 = vmul.f32 %v947, -0.3
        %v1076 = vmul.f32 %v948, -0.3
        %v1077 = vmul.f32 %v949, -0.3
        %v1078 = vmul.f32 %v950, -0.3
        %v1079 = vmul.f32 %v951, -0.3
        %v1080 = vmul.f32 %v952, -0.3
        %v1081 = vmul.f32 %v953, -0.3
        %v1082 = vmul.f32 %v954, -0.3
        %v1083 = vmul.f32 %v955, -0.3
        %v1084 = vsel %vm956, %v892, %v1020
        %v1085 = vsel %vm957, %v893, %v1021
        %v1086 = vsel %vm958, %v894, %v1022
        %v1087 = vsel %vm959, %v895, %v1023
        %v1088 = vsel %vm960, %v896, %v1024
        %v1089 = vsel %vm961, %v897, %v1025
        %v1090 = vsel %vm962, %v898, %v1026
        %v1091 = vsel %vm963, %v899, %v1027
        %v1092 = vsel %vm964, %v900, %v1028
        %v1093 = vsel %vm965, %v901, %v1029
        %v1094 = vsel %vm966, %v902, %v1030
        %v1095 = vsel %vm967, %v903, %v1031
        %v1096 = vsel %vm968, %v904, %v1032
        %v1097 = vsel %vm969, %v905, %v1033
        %v1098 = vsel %vm970, %v906, %v1034
        %v1099 = vsel %vm971, %v907, %v1035
        %v1100 = vsel %vm972, %v908, %v1036
        %v1101 = vsel %vm973, %v909, %v1037
        %v1102 = vsel %vm974, %v910, %v1038
        %v1103 = vsel %vm975, %v911, %v1039
        %v1104 = vsel %vm976, %v912, %v1040
        %v1105 = vsel %vm977, %v913, %v1041
        %v1106 = vsel %vm978, %v914, %v1042
        %v1107 = vsel %vm979, %v915, %v1043
        %v1108 = vsel %vm980, %v916, %v1044
        %v1109 = vsel %vm981, %v917, %v1045
        %v1110 = vsel %vm982, %v918, %v1046
        %v1111 = vsel %vm983, %v919, %v1047
        %v1112 = vsel %vm984, %v920, %v1048
        %v1113 = vsel %vm985, %v921, %v1049
        %v1114 = vsel %vm986, %v922, %v1050
        %v1115 = vsel %vm987, %v923, %v1051
        %v1116 = vsel %vm988, %v924, %v1052
        %v1117 = vsel %vm989, %v925, %v1053
        %v1118 = vsel %vm990, %v926, %v1054
        %v1119 = vsel %vm991, %v927, %v1055
        %v1120 = vsel %vm992, %v928, %v1056
        %v1121 = vsel %vm993, %v929, %v1057
        %v1122 = vsel %vm994, %v930, %v1058
        %v1123 = vsel %vm995, %v931, %v1059
        %v1124 = vsel %vm996, %v932, %v1060
        %v1125 = vsel %vm997, %v933, %v1061
        %v1126 = vsel %vm998, %v934, %v1062
        %v1127 = vsel %vm999, %v935, %v1063
        %v1128 = vsel %vm1000, %v936, %v1064
        %v1129 = vsel %vm1001, %v937, %v1065
        %v1130 = vsel %vm1002, %v938, %v1066
        %v1131 = vsel %vm1003, %v939, %v1067
        %v1132 = vsel %vm1004, %v940, %v1068
        %v1133 = vsel %vm1005, %v941, %v1069
        %v1134 = vsel %vm1006, %v942, %v1070
        %v1135 = vsel %vm1007, %v943, %v1071
        %v1136 = vsel %vm1008, %v944, %v1072
        %v1137 = vsel %vm1009, %v945, %v1073
        %v1138 = vsel %vm1010, %v946, %v1074
        %v1139 = vsel %vm1011, %v947, %v1075
        %v1140 = vsel %vm1012, %v948, %v1076
        %v1141 = vsel %vm1013, %v949, %v1077
        %v1142 = vsel %vm1014, %v950, %v1078
        %v1143 = vsel %vm1015, %v951, %v1079
        %v1144 = vsel %vm1016, %v952, %v1080
        %v1145 = vsel %vm1017, %v953, %v1081
        %v1146 = vsel %vm1018, %v954, %v1082
        %v1147 = vsel %vm1019, %v955, %v1083
        %v1148 = vmul.f32 %v1084, %v584
        %v1149 = vmul.f32 %v1085, %v585
        %v1150 = vmul.f32 %v1086, %v586
        %v1151 = vmul.f32 %v1087, %v587
        %v1152 = vmul.f32 %v1088, %v588
        %v1153 = vmul.f32 %v1089, %v589
        %v1154 = vmul.f32 %v1090, %v590
        %v1155 = vmul.f32 %v1091, %v591
        %v1156 = vmul.f32 %v1092, %v592
        %v1157 = vmul.f32 %v1093, %v593
        %v1158 = vmul.f32 %v1094, %v594
        %v1159 = vmul.f32 %v1095, %v595
        %v1160 = vmul.f32 %v1096, %v596
        %v1161 = vmul.f32 %v1097, %v597
        %v1162 = vmul.f32 %v1098, %v598
        %v1163 = vmul.f32 %v1099, %v599
        %v1164 = vmul.f32 %v1100, %v600
        %v1165 = vmul.f32 %v1101, %v601
        %v1166 = vmul.f32 %v1102, %v602
        %v1167 = vmul.f32 %v1103, %v603
        %v1168 = vmul.f32 %v1104, %v604
        %v1169 = vmul.f32 %v1105, %v605
        %v1170 = vmul.f32 %v1106, %v606
        %v1171 = vmul.f32 %v1107, %v607
        %v1172 = vmul.f32 %v1108, %v608
        %v1173 = vmul.f32 %v1109, %v609
        %v1174 = vmul.f32 %v1110, %v610
        %v1175 = vmul.f32 %v1111, %v611
        %v1176 = vmul.f32 %v1112, %v612
        %v1177 = vmul.f32 %v1113, %v613
        %v1178 = vmul.f32 %v1114, %v614
        %v1179 = vmul.f32 %v1115, %v615
        %v1180 = vmul.f32 %v1116, %v616
        %v1181 = vmul.f32 %v1117, %v617
        %v1182 = vmul.f32 %v1118, %v618
        %v1183 = vmul.f32 %v1119, %v619
        %v1184 = vmul.f32 %v1120, %v620
        %v1185 = vmul.f32 %v1121, %v621
        %v1186 = vmul.f32 %v1122, %v622
        %v1187 = vmul.f32 %v1123, %v623
        %v1188 = vmul.f32 %v1124, %v624
        %v1189 = vmul.f32 %v1125, %v625
        %v1190 = vmul.f32 %v1126, %v626
        %v1191 = vmul.f32 %v1127, %v627
        %v1192 = vmul.f32 %v1128, %v628
        %v1193 = vmul.f32 %v1129, %v629
        %v1194 = vmul.f32 %v1130, %v630
        %v1195 = vmul.f32 %v1131, %v631
        %v1196 = vmul.f32 %v1132, %v632
        %v1197 = vmul.f32 %v1133, %v633
        %v1198 = vmul.f32 %v1134, %v634
        %v1199 = vmul.f32 %v1135, %v635
        %v1200 = vmul.f32 %v1136, %v636
        %v1201 = vmul.f32 %v1137, %v637
        %v1202 = vmul.f32 %v1138, %v638
        %v1203 = vmul.f32 %v1139, %v639
        %v1204 = vmul.f32 %v1140, %v640
        %v1205 = vmul.f32 %v1141, %v641
        %v1206 = vmul.f32 %v1142, %v642
        %v1207 = vmul.f32 %v1143, %v643
        %v1208 = vmul.f32 %v1144, %v644
        %v1209 = vmul.f32 %v1145, %v645
        %v1210 = vmul.f32 %v1146, %v646
        %v1211 = vmul.f32 %v1147, %v647
        %v1212 = vpack.c.bf16 %v1150, %v1148
        %v1213 = vpack.c.bf16 %v1151, %v1149
        %v1214 = vpack.c.bf16 %v1154, %v1152
        %v1215 = vpack.c.bf16 %v1155, %v1153
        %v1216 = vpack.c.bf16 %v1158, %v1156
        %v1217 = vpack.c.bf16 %v1159, %v1157
        %v1218 = vpack.c.bf16 %v1162, %v1160
        %v1219 = vpack.c.bf16 %v1163, %v1161
        %v1220 = vpack.c.bf16 %v1166, %v1164
        %v1221 = vpack.c.bf16 %v1167, %v1165
        %v1222 = vpack.c.bf16 %v1170, %v1168
        %v1223 = vpack.c.bf16 %v1171, %v1169
        %v1224 = vpack.c.bf16 %v1174, %v1172
        %v1225 = vpack.c.bf16 %v1175, %v1173
        %v1226 = vpack.c.bf16 %v1178, %v1176
        %v1227 = vpack.c.bf16 %v1179, %v1177
        %v1228 = vpack.c.bf16 %v1182, %v1180
        %v1229 = vpack.c.bf16 %v1183, %v1181
        %v1230 = vpack.c.bf16 %v1186, %v1184
        %v1231 = vpack.c.bf16 %v1187, %v1185
        %v1232 = vpack.c.bf16 %v1190, %v1188
        %v1233 = vpack.c.bf16 %v1191, %v1189
        %v1234 = vpack.c.bf16 %v1194, %v1192
        %v1235 = vpack.c.bf16 %v1195, %v1193
        %v1236 = vpack.c.bf16 %v1198, %v1196
        %v1237 = vpack.c.bf16 %v1199, %v1197
        %v1238 = vpack.c.bf16 %v1202, %v1200
        %v1239 = vpack.c.bf16 %v1203, %v1201
        %v1240 = vpack.c.bf16 %v1206, %v1204
        %v1241 = vpack.c.bf16 %v1207, %v1205
        %v1242 = vpack.c.bf16 %v1210, %v1208
        %v1243 = vpack.c.bf16 %v1211, %v1209
        %v1244 = vld [vmem:[#allocation2] sm:$0xff]
        %v1245 = vld [vmem:[#allocation2 + $0x10] sm:$0xff]
        %v1246 = vld [vmem:[#allocation2 + $0x20] sm:$0xff]
        %v1247 = vld [vmem:[#allocation2 + $0x30] sm:$0xff]
        %v1248 = vld [vmem:[#allocation2 + $0x40] sm:$0xff]
        %v1249 = vld [vmem:[#allocation2 + $0x50] sm:$0xff]
        %v1250 = vld [vmem:[#allocation2 + $0x60] sm:$0xff]
        %v1251 = vld [vmem:[#allocation2 + $0x70] sm:$0xff]
        %v1252 = vld [vmem:[#allocation2 + $0x80] sm:$0xff]
        %v1253 = vld [vmem:[#allocation2 + $0x90] sm:$0xff]
        %v1254 = vld [vmem:[#allocation2 + $0xa0] sm:$0xff]
        %v1255 = vld [vmem:[#allocation2 + $0xb0] sm:$0xff]
        %v1256 = vld [vmem:[#allocation2 + $0xc0] sm:$0xff]
        %v1257 = vld [vmem:[#allocation2 + $0xd0] sm:$0xff]
        %v1258 = vld [vmem:[#allocation2 + $0xe0] sm:$0xff]
        %v1259 = vld [vmem:[#allocation2 + $0xf0] sm:$0xff]
        %v1260 = vld [vmem:[#allocation2 + $0x100] sm:$0xff]
        %v1261 = vld [vmem:[#allocation2 + $0x110] sm:$0xff]
        %v1262 = vld [vmem:[#allocation2 + $0x120] sm:$0xff]
        %v1263 = vld [vmem:[#allocation2 + $0x130] sm:$0xff]
        %v1264 = vld [vmem:[#allocation2 + $0x140] sm:$0xff]
        %v1265 = vld [vmem:[#allocation2 + $0x150] sm:$0xff]
        %v1266 = vld [vmem:[#allocation2 + $0x160] sm:$0xff]
        %v1267 = vld [vmem:[#allocation2 + $0x170] sm:$0xff]
        %v1268 = vld [vmem:[#allocation2 + $0x180] sm:$0xff]
        %v1269 = vld [vmem:[#allocation2 + $0x190] sm:$0xff]
        %v1270 = vld [vmem:[#allocation2 + $0x1a0] sm:$0xff]
        %v1271 = vld [vmem:[#allocation2 + $0x1b0] sm:$0xff]
        %v1272 = vld [vmem:[#allocation2 + $0x1c0] sm:$0xff]
        %v1273 = vld [vmem:[#allocation2 + $0x1d0] sm:$0xff]
        %v1274 = vld [vmem:[#allocation2 + $0x1e0] sm:$0xff]
        %v1275 = vld [vmem:[#allocation2 + $0x1f0] sm:$0xff]
        %v1308 = vunpack.c.l.b16 %v648
        %v1309 = vunpack.c.l.b16 %v649
        %v1310 = vunpack.c.l.b16 %v650
        %v1311 = vunpack.c.l.b16 %v651
        %v1312 = vunpack.c.l.b16 %v652
        %v1313 = vunpack.c.l.b16 %v653
        %v1314 = vunpack.c.l.b16 %v654
        %v1315 = vunpack.c.l.b16 %v655
        %v1316 = vunpack.c.l.b16 %v656
        %v1317 = vunpack.c.l.b16 %v657
        %v1318 = vunpack.c.l.b16 %v658
        %v1319 = vunpack.c.l.b16 %v659
        %v1320 = vunpack.c.l.b16 %v660
        %v1321 = vunpack.c.l.b16 %v661
        %v1322 = vunpack.c.l.b16 %v662
        %v1323 = vunpack.c.l.b16 %v663
        %v1324 = vunpack.c.l.b16 %v664
        %v1325 = vunpack.c.l.b16 %v665
        %v1326 = vunpack.c.l.b16 %v666
        %v1327 = vunpack.c.l.b16 %v667
        %v1328 = vunpack.c.l.b16 %v668
        %v1329 = vunpack.c.l.b16 %v669
        %v1330 = vunpack.c.l.b16 %v670
        %v1331 = vunpack.c.l.b16 %v671
        %v1332 = vunpack.c.l.b16 %v672
        %v1333 = vunpack.c.l.b16 %v673
        %v1334 = vunpack.c.l.b16 %v674
        %v1335 = vunpack.c.l.b16 %v675
        %v1336 = vunpack.c.l.b16 %v676
        %v1337 = vunpack.c.l.b16 %v677
        %v1338 = vunpack.c.l.b16 %v678
        %v1339 = vunpack.c.l.b16 %v679
        %v1340 = vpack.c.b16 %v1309, %v1308
        %v1341 = vpack.c.b16 %v1311, %v1310
        %v1342 = vpack.c.b16 %v1313, %v1312
        %v1343 = vpack.c.b16 %v1315, %v1314
        %v1344 = vpack.c.b16 %v1317, %v1316
        %v1345 = vpack.c.b16 %v1319, %v1318
        %v1346 = vpack.c.b16 %v1321, %v1320
        %v1347 = vpack.c.b16 %v1323, %v1322
        %v1348 = vpack.c.b16 %v1325, %v1324
        %v1349 = vpack.c.b16 %v1327, %v1326
        %v1350 = vpack.c.b16 %v1329, %v1328
        %v1351 = vpack.c.b16 %v1331, %v1330
        %v1352 = vpack.c.b16 %v1333, %v1332
        %v1353 = vpack.c.b16 %v1335, %v1334
        %v1354 = vpack.c.b16 %v1337, %v1336
        %v1355 = vpack.c.b16 %v1339, %v1338
        %1372 = vmatprep.subr.bf16.mxu0 0
        %1373 = vmatpush1.bf16.msra.mxu0 %v1347
        %1374 = vmatprep.subr.bf16.mxu0 0
        %1375 = vmatpush1.bf16.msra.mxu0 %v1346
        %1376 = vmatprep.subr.bf16.mxu0 0
        %1377 = vmatpush1.bf16.msra.mxu0 %v1345
        %1378 = vmatprep.subr.bf16.mxu0 0
        %1379 = vmatpush1.bf16.msra.mxu0 %v1344
        %1380 = vmatprep.subr.bf16.mxu0 0
        %1381 = vmatpush1.bf16.msra.mxu0 %v1343
        %1382 = vmatprep.subr.bf16.mxu0 0
        %1383 = vmatpush1.bf16.msra.mxu0 %v1342
        %1384 = vmatprep.subr.bf16.mxu0 0
        %1385 = vmatpush1.bf16.msra.mxu0 %v1341
        %1386 = vmatprep.subr.bf16.mxu0 0
        %1387 = vmatpush1.bf16.msra.mxu0 %v1340
        %1388 = vmatprep.subr.bf16.mxu0 0
        %1389 = vmatpush2.bf16.msra.mxu0 %v1355
        %1390 = vmatprep.subr.bf16.mxu0 0
        %1391 = vmatpush2.bf16.msra.mxu0 %v1354
        %1392 = vmatprep.subr.bf16.mxu0 0
        %1393 = vmatpush2.bf16.msra.mxu0 %v1353
        %1394 = vmatprep.subr.bf16.mxu0 0
        %1395 = vmatpush2.bf16.msra.mxu0 %v1352
        %1396 = vmatprep.subr.bf16.mxu0 0
        %1397 = vmatpush2.bf16.msra.mxu0 %v1351
        %1398 = vmatprep.subr.bf16.mxu0 0
        %1399 = vmatpush2.bf16.msra.mxu0 %v1350
        %1400 = vmatprep.subr.bf16.mxu0 0
        %1401 = vmatpush2.bf16.msra.mxu0 %v1349
        %1402 = vmatprep.subr.bf16.mxu0 0
        %1403 = vmatpush2.bf16.msra.mxu0 %v1348
        %1404 = vmatprep.mubr.bf16.mxu0 %v1213
        %1405 = vmatmul.mubr.bf16.gmra.mxu0 %v1212
        %v1406 = vpop.f32.mrf.mxu0
        %v1407 = vadd.f32 0.0, %v1406
        %v1408 = vpop.f32.mrf.mxu0
        %v1409 = vpop.f32.mrf.mxu0
        %v1410 = vadd.f32 0.0, %v1409
        %v1411 = vpop.f32.mrf.mxu0
        %1412 = vmatprep.mubr.bf16.mxu0 %v1215
        %1413 = vmatmul.mubr.bf16.gmra.mxu0 %v1214
        %v1414 = vpop.f32.mrf.mxu0
        %v1415 = vadd.f32 0.0, %v1414
        %v1416 = vpop.f32.mrf.mxu0
        %v1417 = vpop.f32.mrf.mxu0
        %v1418 = vadd.f32 0.0, %v1417
        %v1419 = vpop.f32.mrf.mxu0
        %1420 = vmatprep.mubr.bf16.mxu0 %v1217
        %1421 = vmatmul.mubr.bf16.gmra.mxu0 %v1216
        %v1422 = vpop.f32.mrf.mxu0
        %v1423 = vadd.f32 0.0, %v1422
        %v1424 = vpop.f32.mrf.mxu0
        %v1425 = vpop.f32.mrf.mxu0
        %v1426 = vadd.f32 0.0, %v1425
        %v1427 = vpop.f32.mrf.mxu0
        %1428 = vmatprep.mubr.bf16.mxu0 %v1219
        %1429 = vmatmul.mubr.bf16.gmra.mxu0 %v1218
        %v1430 = vpop.f32.mrf.mxu0
        %v1431 = vadd.f32 0.0, %v1430
        %v1432 = vpop.f32.mrf.mxu0
        %v1433 = vpop.f32.mrf.mxu0
        %v1434 = vadd.f32 0.0, %v1433
        %v1435 = vpop.f32.mrf.mxu0
        %1436 = vmatprep.mubr.bf16.mxu0 %v1221
        %1437 = vmatmul.mubr.bf16.gmra.mxu0 %v1220
        %v1438 = vpop.f32.mrf.mxu0
        %v1439 = vadd.f32 0.0, %v1438
        %v1440 = vpop.f32.mrf.mxu0
        %v1441 = vpop.f32.mrf.mxu0
        %v1442 = vadd.f32 0.0, %v1441
        %v1443 = vpop.f32.mrf.mxu0
        %1444 = vmatprep.mubr.bf16.mxu0 %v1223
        %1445 = vmatmul.mubr.bf16.gmra.mxu0 %v1222
        %v1446 = vpop.f32.mrf.mxu0
        %v1447 = vadd.f32 0.0, %v1446
        %v1448 = vpop.f32.mrf.mxu0
        %v1449 = vpop.f32.mrf.mxu0
        %v1450 = vadd.f32 0.0, %v1449
        %v1451 = vpop.f32.mrf.mxu0
        %1452 = vmatprep.mubr.bf16.mxu0 %v1225
        %1453 = vmatmul.mubr.bf16.gmra.mxu0 %v1224
        %v1454 = vpop.f32.mrf.mxu0
        %v1455 = vadd.f32 0.0, %v1454
        %v1456 = vpop.f32.mrf.mxu0
        %v1457 = vpop.f32.mrf.mxu0
        %v1458 = vadd.f32 0.0, %v1457
        %v1459 = vpop.f32.mrf.mxu0
        %1460 = vmatprep.mubr.bf16.mxu0 %v1227
        %1461 = vmatmul.mubr.bf16.gmra.mxu0 %v1226
        %v1462 = vpop.f32.mrf.mxu0
        %v1463 = vadd.f32 0.0, %v1462
        %v1464 = vpop.f32.mrf.mxu0
        %v1465 = vpop.f32.mrf.mxu0
        %v1466 = vadd.f32 0.0, %v1465
        %v1467 = vpop.f32.mrf.mxu0
        %1468 = vmatprep.mubr.bf16.mxu0 %v1229
        %1469 = vmatmul.mubr.bf16.gmra.mxu0 %v1228
        %v1470 = vpop.f32.mrf.mxu0
        %v1471 = vadd.f32 0.0, %v1470
        %v1472 = vpop.f32.mrf.mxu0
        %v1473 = vpop.f32.mrf.mxu0
        %v1474 = vadd.f32 0.0, %v1473
        %v1475 = vpop.f32.mrf.mxu0
        %1476 = vmatprep.mubr.bf16.mxu0 %v1231
        %1477 = vmatmul.mubr.bf16.gmra.mxu0 %v1230
        %v1478 = vpop.f32.mrf.mxu0
        %v1479 = vadd.f32 0.0, %v1478
        %v1480 = vpop.f32.mrf.mxu0
        %v1481 = vpop.f32.mrf.mxu0
        %v1482 = vadd.f32 0.0, %v1481
        %v1483 = vpop.f32.mrf.mxu0
        %1484 = vmatprep.mubr.bf16.mxu0 %v1233
        %1485 = vmatmul.mubr.bf16.gmra.mxu0 %v1232
        %v1486 = vpop.f32.mrf.mxu0
        %v1487 = vadd.f32 0.0, %v1486
        %v1488 = vpop.f32.mrf.mxu0
        %v1489 = vpop.f32.mrf.mxu0
        %v1490 = vadd.f32 0.0, %v1489
        %v1491 = vpop.f32.mrf.mxu0
        %1492 = vmatprep.mubr.bf16.mxu0 %v1235
        %1493 = vmatmul.mubr.bf16.gmra.mxu0 %v1234
        %v1494 = vpop.f32.mrf.mxu0
        %v1495 = vadd.f32 0.0, %v1494
        %v1496 = vpop.f32.mrf.mxu0
        %v1497 = vpop.f32.mrf.mxu0
        %v1498 = vadd.f32 0.0, %v1497
        %v1499 = vpop.f32.mrf.mxu0
        %1500 = vmatprep.mubr.bf16.mxu0 %v1237
        %1501 = vmatmul.mubr.bf16.gmra.mxu0 %v1236
        %v1502 = vpop.f32.mrf.mxu0
        %v1503 = vadd.f32 0.0, %v1502
        %v1504 = vpop.f32.mrf.mxu0
        %v1505 = vpop.f32.mrf.mxu0
        %v1506 = vadd.f32 0.0, %v1505
        %v1507 = vpop.f32.mrf.mxu0
        %1508 = vmatprep.mubr.bf16.mxu0 %v1239
        %1509 = vmatmul.mubr.bf16.gmra.mxu0 %v1238
        %v1510 = vpop.f32.mrf.mxu0
        %v1511 = vadd.f32 0.0, %v1510
        %v1512 = vpop.f32.mrf.mxu0
        %v1513 = vpop.f32.mrf.mxu0
        %v1514 = vadd.f32 0.0, %v1513
        %v1515 = vpop.f32.mrf.mxu0
        %1516 = vmatprep.mubr.bf16.mxu0 %v1241
        %1517 = vmatmul.mubr.bf16.gmra.mxu0 %v1240
        %v1518 = vpop.f32.mrf.mxu0
        %v1519 = vadd.f32 0.0, %v1518
        %v1520 = vpop.f32.mrf.mxu0
        %v1521 = vpop.f32.mrf.mxu0
        %v1522 = vadd.f32 0.0, %v1521
        %v1523 = vpop.f32.mrf.mxu0
        %1524 = vmatprep.mubr.bf16.mxu0 %v1243
        %1525 = vmatmul.mubr.bf16.gmra.mxu0 %v1242
        %v1526 = vpop.f32.mrf.mxu0
        %v1527 = vadd.f32 0.0, %v1526
        %v1528 = vpop.f32.mrf.mxu0
        %v1529 = vpop.f32.mrf.mxu0
        %v1530 = vadd.f32 0.0, %v1529
        %v1531 = vpop.f32.mrf.mxu0
        %1532 = vdwg.mxu0
        %v1533 = vadd.f32 %v1244, %v1407
        %v1534 = vadd.f32 %v1245, %v1410
        %v1535 = vadd.f32 %v1246, %v1415
        %v1536 = vadd.f32 %v1247, %v1418
        %v1537 = vadd.f32 %v1248, %v1423
        %v1538 = vadd.f32 %v1249, %v1426
        %v1539 = vadd.f32 %v1250, %v1431
        %v1540 = vadd.f32 %v1251, %v1434
        %v1541 = vadd.f32 %v1252, %v1439
        %v1542 = vadd.f32 %v1253, %v1442
        %v1543 = vadd.f32 %v1254, %v1447
        %v1544 = vadd.f32 %v1255, %v1450
        %v1545 = vadd.f32 %v1256, %v1455
        %v1546 = vadd.f32 %v1257, %v1458
        %v1547 = vadd.f32 %v1258, %v1463
        %v1548 = vadd.f32 %v1259, %v1466
        %v1549 = vadd.f32 %v1260, %v1471
        %v1550 = vadd.f32 %v1261, %v1474
        %v1551 = vadd.f32 %v1262, %v1479
        %v1552 = vadd.f32 %v1263, %v1482
        %v1553 = vadd.f32 %v1264, %v1487
        %v1554 = vadd.f32 %v1265, %v1490
        %v1555 = vadd.f32 %v1266, %v1495
        %v1556 = vadd.f32 %v1267, %v1498
        %v1557 = vadd.f32 %v1268, %v1503
        %v1558 = vadd.f32 %v1269, %v1506
        %v1559 = vadd.f32 %v1270, %v1511
        %v1560 = vadd.f32 %v1271, %v1514
        %v1561 = vadd.f32 %v1272, %v1519
        %v1562 = vadd.f32 %v1273, %v1522
        %v1563 = vadd.f32 %v1274, %v1527
        %v1564 = vadd.f32 %v1275, %v1530
        %1565 = vst [vmem:[#allocation2] sm:$0xff] %v1533
        %1566 = vst [vmem:[#allocation2 + $0x10] sm:$0xff] %v1534
        %1567 = vst [vmem:[#allocation2 + $0x20] sm:$0xff] %v1535
        %1568 = vst [vmem:[#allocation2 + $0x30] sm:$0xff] %v1536
        %1569 = vst [vmem:[#allocation2 + $0x40] sm:$0xff] %v1537
        %1570 = vst [vmem:[#allocation2 + $0x50] sm:$0xff] %v1538
        %1571 = vst [vmem:[#allocation2 + $0x60] sm:$0xff] %v1539
        %1572 = vst [vmem:[#allocation2 + $0x70] sm:$0xff] %v1540
        %1573 = vst [vmem:[#allocation2 + $0x80] sm:$0xff] %v1541
        %1574 = vst [vmem:[#allocation2 + $0x90] sm:$0xff] %v1542
        %1575 = vst [vmem:[#allocation2 + $0xa0] sm:$0xff] %v1543
        %1576 = vst [vmem:[#allocation2 + $0xb0] sm:$0xff] %v1544
        %1577 = vst [vmem:[#allocation2 + $0xc0] sm:$0xff] %v1545
        %1578 = vst [vmem:[#allocation2 + $0xd0] sm:$0xff] %v1546
        %1579 = vst [vmem:[#allocation2 + $0xe0] sm:$0xff] %v1547
        %1580 = vst [vmem:[#allocation2 + $0xf0] sm:$0xff] %v1548
        %1581 = vst [vmem:[#allocation2 + $0x100] sm:$0xff] %v1549
        %1582 = vst [vmem:[#allocation2 + $0x110] sm:$0xff] %v1550
        %1583 = vst [vmem:[#allocation2 + $0x120] sm:$0xff] %v1551
        %1584 = vst [vmem:[#allocation2 + $0x130] sm:$0xff] %v1552
        %1585 = vst [vmem:[#allocation2 + $0x140] sm:$0xff] %v1553
        %1586 = vst [vmem:[#allocation2 + $0x150] sm:$0xff] %v1554
        %1587 = vst [vmem:[#allocation2 + $0x160] sm:$0xff] %v1555
        %1588 = vst [vmem:[#allocation2 + $0x170] sm:$0xff] %v1556
        %1589 = vst [vmem:[#allocation2 + $0x180] sm:$0xff] %v1557
        %1590 = vst [vmem:[#allocation2 + $0x190] sm:$0xff] %v1558
        %1591 = vst [vmem:[#allocation2 + $0x1a0] sm:$0xff] %v1559
        %1592 = vst [vmem:[#allocation2 + $0x1b0] sm:$0xff] %v1560
        %1593 = vst [vmem:[#allocation2 + $0x1c0] sm:$0xff] %v1561
        %1594 = vst [vmem:[#allocation2 + $0x1d0] sm:$0xff] %v1562
        %1595 = vst [vmem:[#allocation2 + $0x1e0] sm:$0xff] %v1563
        %1596 = vst [vmem:[#allocation2 + $0x1f0] sm:$0xff] %v1564
        %1597 = vset.pattern.permute.xlu0 1
        %1598 = vperm.xlu0 %1597, %v680
        %v1599 = vpop.permute.xlu0 %1598
        %1601 = vset.pattern.permute.xlu0 1
        %1602 = vperm.xlu0 %1601, %v681
        %v1603 = vpop.permute.xlu0 %1602
        %1605 = vset.pattern.permute.xlu0 1
        %1606 = vperm.xlu0 %1605, %v682
        %v1607 = vpop.permute.xlu0 %1606
        %1609 = vset.pattern.permute.xlu0 1
        %1610 = vperm.xlu0 %1609, %v683
        %v1611 = vpop.permute.xlu0 %1610
        %1613 = vset.pattern.permute.xlu0 1
        %1614 = vperm.xlu0 %1613, %v684
        %v1615 = vpop.permute.xlu0 %1614
        %1617 = vset.pattern.permute.xlu0 1
        %1618 = vperm.xlu0 %1617, %v685
        %v1619 = vpop.permute.xlu0 %1618
        %1621 = vset.pattern.permute.xlu0 1
        %1622 = vperm.xlu0 %1621, %v686
        %v1623 = vpop.permute.xlu0 %1622
        %1625 = vset.pattern.permute.xlu0 1
        %1626 = vperm.xlu0 %1625, %v687
        %v1627 = vpop.permute.xlu0 %1626
        %1629 = vset.pattern.permute.xlu0 1
        %1630 = vperm.xlu0 %1629, %v688
        %v1631 = vpop.permute.xlu0 %1630
        %1633 = vset.pattern.permute.xlu0 1
        %1634 = vperm.xlu0 %1633, %v689
        %v1635 = vpop.permute.xlu0 %1634
        %1637 = vset.pattern.permute.xlu0 1
        %1638 = vperm.xlu0 %1637, %v690
        %v1639 = vpop.permute.xlu0 %1638
        %1641 = vset.pattern.permute.xlu0 1
        %1642 = vperm.xlu0 %1641, %v691
        %v1643 = vpop.permute.xlu0 %1642
        %1645 = vset.pattern.permute.xlu0 1
        %1646 = vperm.xlu0 %1645, %v692
        %v1647 = vpop.permute.xlu0 %1646
        %1649 = vset.pattern.permute.xlu0 1
        %1650 = vperm.xlu0 %1649, %v693
        %v1651 = vpop.permute.xlu0 %1650
        %1653 = vset.pattern.permute.xlu0 1
        %1654 = vperm.xlu0 %1653, %v694
        %v1655 = vpop.permute.xlu0 %1654
        %1657 = vset.pattern.permute.xlu0 1
        %1658 = vperm.xlu0 %1657, %v695
        %v1659 = vpop.permute.xlu0 %1658
        %1661 = vset.pattern.permute.xlu0 1
        %1662 = vperm.xlu0 %1661, %v696
        %v1663 = vpop.permute.xlu0 %1662
        %1665 = vset.pattern.permute.xlu0 1
        %1666 = vperm.xlu0 %1665, %v697
        %v1667 = vpop.permute.xlu0 %1666
        %1669 = vset.pattern.permute.xlu0 1
        %1670 = vperm.xlu0 %1669, %v698
        %v1671 = vpop.permute.xlu0 %1670
        %1673 = vset.pattern.permute.xlu0 1
        %1674 = vperm.xlu0 %1673, %v699
        %v1675 = vpop.permute.xlu0 %1674
        %1677 = vset.pattern.permute.xlu0 1
        %1678 = vperm.xlu0 %1677, %v700
        %v1679 = vpop.permute.xlu0 %1678
        %1681 = vset.pattern.permute.xlu0 1
        %1682 = vperm.xlu0 %1681, %v701
        %v1683 = vpop.permute.xlu0 %1682
        %1685 = vset.pattern.permute.xlu0 1
        %1686 = vperm.xlu0 %1685, %v702
        %v1687 = vpop.permute.xlu0 %1686
        %1689 = vset.pattern.permute.xlu0 1
        %1690 = vperm.xlu0 %1689, %v703
        %v1691 = vpop.permute.xlu0 %1690
        %1693 = vset.pattern.permute.xlu0 1
        %1694 = vperm.xlu0 %1693, %v704
        %v1695 = vpop.permute.xlu0 %1694
        %1697 = vset.pattern.permute.xlu0 1
        %1698 = vperm.xlu0 %1697, %v705
        %v1699 = vpop.permute.xlu0 %1698
        %1701 = vset.pattern.permute.xlu0 1
        %1702 = vperm.xlu0 %1701, %v706
        %v1703 = vpop.permute.xlu0 %1702
        %1705 = vset.pattern.permute.xlu0 1
        %1706 = vperm.xlu0 %1705, %v707
        %v1707 = vpop.permute.xlu0 %1706
        %1709 = vset.pattern.permute.xlu0 1
        %1710 = vperm.xlu0 %1709, %v708
        %v1711 = vpop.permute.xlu0 %1710
        %1713 = vset.pattern.permute.xlu0 1
        %1714 = vperm.xlu0 %1713, %v709
        %v1715 = vpop.permute.xlu0 %1714
        %1717 = vset.pattern.permute.xlu0 1
        %1718 = vperm.xlu0 %1717, %v710
        %v1719 = vpop.permute.xlu0 %1718
        %1721 = vset.pattern.permute.xlu0 1
        %1722 = vperm.xlu0 %1721, %v711
        %v1723 = vpop.permute.xlu0 %1722
        %v1725 = vlaneseq
        %v1726 = vshrl.u32 %v1725, 7
        %v1727 = vsub.s32 1, %v1726
        %v1728 = vrot.slane %v712, %v1727
        %v1729 = vlaneseq
        %v1730 = vshrl.u32 %v1729, 7
        %v1731 = vsub.s32 3, %v1730
        %v1732 = vrot.slane %v712, %v1731
        %v1735 = vlaneseq
        %v1736 = vshrl.u32 %v1735, 7
        %v1737 = vsub.s32 1, %v1736
        %v1738 = vrot.slane %v1728, %v1737
        %v1739 = vlaneseq
        %v1740 = vshrl.u32 %v1739, 7
        %v1741 = vsub.s32 1, %v1740
        %v1742 = vrot.slane %v1732, %v1741
        %v1743 = vadd.f32 %v1599, %v1738
        %v1744 = vadd.f32 %v1599, %v1742
        %v1745 = vadd.f32 %v1603, %v1738
        %v1746 = vadd.f32 %v1603, %v1742
        %v1747 = vadd.f32 %v1607, %v1738
        %v1748 = vadd.f32 %v1607, %v1742
        %v1749 = vadd.f32 %v1611, %v1738
        %v1750 = vadd.f32 %v1611, %v1742
        %v1751 = vadd.f32 %v1615, %v1738
        %v1752 = vadd.f32 %v1615, %v1742
        %v1753 = vadd.f32 %v1619, %v1738
        %v1754 = vadd.f32 %v1619, %v1742
        %v1755 = vadd.f32 %v1623, %v1738
        %v1756 = vadd.f32 %v1623, %v1742
        %v1757 = vadd.f32 %v1627, %v1738
        %v1758 = vadd.f32 %v1627, %v1742
        %v1759 = vadd.f32 %v1631, %v1738
        %v1760 = vadd.f32 %v1631, %v1742
        %v1761 = vadd.f32 %v1635, %v1738
        %v1762 = vadd.f32 %v1635, %v1742
        %v1763 = vadd.f32 %v1639, %v1738
        %v1764 = vadd.f32 %v1639, %v1742
        %v1765 = vadd.f32 %v1643, %v1738
        %v1766 = vadd.f32 %v1643, %v1742
        %v1767 = vadd.f32 %v1647, %v1738
        %v1768 = vadd.f32 %v1647, %v1742
        %v1769 = vadd.f32 %v1651, %v1738
        %v1770 = vadd.f32 %v1651, %v1742
        %v1771 = vadd.f32 %v1655, %v1738
        %v1772 = vadd.f32 %v1655, %v1742
        %v1773 = vadd.f32 %v1659, %v1738
        %v1774 = vadd.f32 %v1659, %v1742
        %v1775 = vadd.f32 %v1663, %v1738
        %v1776 = vadd.f32 %v1663, %v1742
        %v1777 = vadd.f32 %v1667, %v1738
        %v1778 = vadd.f32 %v1667, %v1742
        %v1779 = vadd.f32 %v1671, %v1738
        %v1780 = vadd.f32 %v1671, %v1742
        %v1781 = vadd.f32 %v1675, %v1738
        %v1782 = vadd.f32 %v1675, %v1742
        %v1783 = vadd.f32 %v1679, %v1738
        %v1784 = vadd.f32 %v1679, %v1742
        %v1785 = vadd.f32 %v1683, %v1738
        %v1786 = vadd.f32 %v1683, %v1742
        %v1787 = vadd.f32 %v1687, %v1738
        %v1788 = vadd.f32 %v1687, %v1742
        %v1789 = vadd.f32 %v1691, %v1738
        %v1790 = vadd.f32 %v1691, %v1742
        %v1791 = vadd.f32 %v1695, %v1738
        %v1792 = vadd.f32 %v1695, %v1742
        %v1793 = vadd.f32 %v1699, %v1738
        %v1794 = vadd.f32 %v1699, %v1742
        %v1795 = vadd.f32 %v1703, %v1738
        %v1796 = vadd.f32 %v1703, %v1742
        %v1797 = vadd.f32 %v1707, %v1738
        %v1798 = vadd.f32 %v1707, %v1742
        %v1799 = vadd.f32 %v1711, %v1738
        %v1800 = vadd.f32 %v1711, %v1742
        %v1801 = vadd.f32 %v1715, %v1738
        %v1802 = vadd.f32 %v1715, %v1742
        %v1803 = vadd.f32 %v1719, %v1738
        %v1804 = vadd.f32 %v1719, %v1742
        %v1805 = vadd.f32 %v1723, %v1738
        %v1806 = vadd.f32 %v1723, %v1742
        %vm1807 = vcmp.gt.f32.partialorder %v1743, 0.0
        %vm1808 = vcmp.gt.f32.partialorder %v1744, 0.0
        %vm1809 = vcmp.gt.f32.partialorder %v1745, 0.0
        %vm1810 = vcmp.gt.f32.partialorder %v1746, 0.0
        %vm1811 = vcmp.gt.f32.partialorder %v1747, 0.0
        %vm1812 = vcmp.gt.f32.partialorder %v1748, 0.0
        %vm1813 = vcmp.gt.f32.partialorder %v1749, 0.0
        %vm1814 = vcmp.gt.f32.partialorder %v1750, 0.0
        %vm1815 = vcmp.gt.f32.partialorder %v1751, 0.0
        %vm1816 = vcmp.gt.f32.partialorder %v1752, 0.0
        %vm1817 = vcmp.gt.f32.partialorder %v1753, 0.0
        %vm1818 = vcmp.gt.f32.partialorder %v1754, 0.0
        %vm1819 = vcmp.gt.f32.partialorder %v1755, 0.0
        %vm1820 = vcmp.gt.f32.partialorder %v1756, 0.0
        %vm1821 = vcmp.gt.f32.partialorder %v1757, 0.0
        %vm1822 = vcmp.gt.f32.partialorder %v1758, 0.0
        %vm1823 = vcmp.gt.f32.partialorder %v1759, 0.0
        %vm1824 = vcmp.gt.f32.partialorder %v1760, 0.0
        %vm1825 = vcmp.gt.f32.partialorder %v1761, 0.0
        %vm1826 = vcmp.gt.f32.partialorder %v1762, 0.0
        %vm1827 = vcmp.gt.f32.partialorder %v1763, 0.0
        %vm1828 = vcmp.gt.f32.partialorder %v1764, 0.0
        %vm1829 = vcmp.gt.f32.partialorder %v1765, 0.0
        %vm1830 = vcmp.gt.f32.partialorder %v1766, 0.0
        %vm1831 = vcmp.gt.f32.partialorder %v1767, 0.0
        %vm1832 = vcmp.gt.f32.partialorder %v1768, 0.0
        %vm1833 = vcmp.gt.f32.partialorder %v1769, 0.0
        %vm1834 = vcmp.gt.f32.partialorder %v1770, 0.0
        %vm1835 = vcmp.gt.f32.partialorder %v1771, 0.0
        %vm1836 = vcmp.gt.f32.partialorder %v1772, 0.0
        %vm1837 = vcmp.gt.f32.partialorder %v1773, 0.0
        %vm1838 = vcmp.gt.f32.partialorder %v1774, 0.0
        %vm1839 = vcmp.gt.f32.partialorder %v1775, 0.0
        %vm1840 = vcmp.gt.f32.partialorder %v1776, 0.0
        %vm1841 = vcmp.gt.f32.partialorder %v1777, 0.0
        %vm1842 = vcmp.gt.f32.partialorder %v1778, 0.0
        %vm1843 = vcmp.gt.f32.partialorder %v1779, 0.0
        %vm1844 = vcmp.gt.f32.partialorder %v1780, 0.0
        %vm1845 = vcmp.gt.f32.partialorder %v1781, 0.0
        %vm1846 = vcmp.gt.f32.partialorder %v1782, 0.0
        %vm1847 = vcmp.gt.f32.partialorder %v1783, 0.0
        %vm1848 = vcmp.gt.f32.partialorder %v1784, 0.0
        %vm1849 = vcmp.gt.f32.partialorder %v1785, 0.0
        %vm1850 = vcmp.gt.f32.partialorder %v1786, 0.0
        %vm1851 = vcmp.gt.f32.partialorder %v1787, 0.0
        %vm1852 = vcmp.gt.f32.partialorder %v1788, 0.0
        %vm1853 = vcmp.gt.f32.partialorder %v1789, 0.0
        %vm1854 = vcmp.gt.f32.partialorder %v1790, 0.0
        %vm1855 = vcmp.gt.f32.partialorder %v1791, 0.0
        %vm1856 = vcmp.gt.f32.partialorder %v1792, 0.0
        %vm1857 = vcmp.gt.f32.partialorder %v1793, 0.0
        %vm1858 = vcmp.gt.f32.partialorder %v1794, 0.0
        %vm1859 = vcmp.gt.f32.partialorder %v1795, 0.0
        %vm1860 = vcmp.gt.f32.partialorder %v1796, 0.0
        %vm1861 = vcmp.gt.f32.partialorder %v1797, 0.0
        %vm1862 = vcmp.gt.f32.partialorder %v1798, 0.0
        %vm1863 = vcmp.gt.f32.partialorder %v1799, 0.0
        %vm1864 = vcmp.gt.f32.partialorder %v1800, 0.0
        %vm1865 = vcmp.gt.f32.partialorder %v1801, 0.0
        %vm1866 = vcmp.gt.f32.partialorder %v1802, 0.0
        %vm1867 = vcmp.gt.f32.partialorder %v1803, 0.0
        %vm1868 = vcmp.gt.f32.partialorder %v1804, 0.0
        %vm1869 = vcmp.gt.f32.partialorder %v1805, 0.0
        %vm1870 = vcmp.gt.f32.partialorder %v1806, 0.0
        %v1871 = vmul.f32 %v1743, -0.2
        %v1872 = vmul.f32 %v1744, -0.2
        %v1873 = vmul.f32 %v1745, -0.2
        %v1874 = vmul.f32 %v1746, -0.2
        %v1875 = vmul.f32 %v1747, -0.2
        %v1876 = vmul.f32 %v1748, -0.2
        %v1877 = vmul.f32 %v1749, -0.2
        %v1878 = vmul.f32 %v1750, -0.2
        %v1879 = vmul.f32 %v1751, -0.2
        %v1880 = vmul.f32 %v1752, -0.2
        %v1881 = vmul.f32 %v1753, -0.2
        %v1882 = vmul.f32 %v1754, -0.2
        %v1883 = vmul.f32 %v1755, -0.2
        %v1884 = vmul.f32 %v1756, -0.2
        %v1885 = vmul.f32 %v1757, -0.2
        %v1886 = vmul.f32 %v1758, -0.2
        %v1887 = vmul.f32 %v1759, -0.2
        %v1888 = vmul.f32 %v1760, -0.2
        %v1889 = vmul.f32 %v1761, -0.2
        %v1890 = vmul.f32 %v1762, -0.2
        %v1891 = vmul.f32 %v1763, -0.2
        %v1892 = vmul.f32 %v1764, -0.2
        %v1893 = vmul.f32 %v1765, -0.2
        %v1894 = vmul.f32 %v1766, -0.2
        %v1895 = vmul.f32 %v1767, -0.2
        %v1896 = vmul.f32 %v1768, -0.2
        %v1897 = vmul.f32 %v1769, -0.2
        %v1898 = vmul.f32 %v1770, -0.2
        %v1899 = vmul.f32 %v1771, -0.2
        %v1900 = vmul.f32 %v1772, -0.2
        %v1901 = vmul.f32 %v1773, -0.2
        %v1902 = vmul.f32 %v1774, -0.2
        %v1903 = vmul.f32 %v1775, -0.2
        %v1904 = vmul.f32 %v1776, -0.2
        %v1905 = vmul.f32 %v1777, -0.2
        %v1906 = vmul.f32 %v1778, -0.2
        %v1907 = vmul.f32 %v1779, -0.2
        %v1908 = vmul.f32 %v1780, -0.2
        %v1909 = vmul.f32 %v1781, -0.2
        %v1910 = vmul.f32 %v1782, -0.2
        %v1911 = vmul.f32 %v1783, -0.2
        %v1912 = vmul.f32 %v1784, -0.2
        %v1913 = vmul.f32 %v1785, -0.2
        %v1914 = vmul.f32 %v1786, -0.2
        %v1915 = vmul.f32 %v1787, -0.2
        %v1916 = vmul.f32 %v1788, -0.2
        %v1917 = vmul.f32 %v1789, -0.2
        %v1918 = vmul.f32 %v1790, -0.2
        %v1919 = vmul.f32 %v1791, -0.2
        %v1920 = vmul.f32 %v1792, -0.2
        %v1921 = vmul.f32 %v1793, -0.2
        %v1922 = vmul.f32 %v1794, -0.2
        %v1923 = vmul.f32 %v1795, -0.2
        %v1924 = vmul.f32 %v1796, -0.2
        %v1925 = vmul.f32 %v1797, -0.2
        %v1926 = vmul.f32 %v1798, -0.2
        %v1927 = vmul.f32 %v1799, -0.2
        %v1928 = vmul.f32 %v1800, -0.2
        %v1929 = vmul.f32 %v1801, -0.2
        %v1930 = vmul.f32 %v1802, -0.2
        %v1931 = vmul.f32 %v1803, -0.2
        %v1932 = vmul.f32 %v1804, -0.2
        %v1933 = vmul.f32 %v1805, -0.2
        %v1934 = vmul.f32 %v1806, -0.2
        %v1935 = vsel %vm1807, %v1743, %v1871
        %v1936 = vsel %vm1808, %v1744, %v1872
        %v1937 = vsel %vm1809, %v1745, %v1873
        %v1938 = vsel %vm1810, %v1746, %v1874
        %v1939 = vsel %vm1811, %v1747, %v1875
        %v1940 = vsel %vm1812, %v1748, %v1876
        %v1941 = vsel %vm1813, %v1749, %v1877
        %v1942 = vsel %vm1814, %v1750, %v1878
        %v1943 = vsel %vm1815, %v1751, %v1879
        %v1944 = vsel %vm1816, %v1752, %v1880
        %v1945 = vsel %vm1817, %v1753, %v1881
        %v1946 = vsel %vm1818, %v1754, %v1882
        %v1947 = vsel %vm1819, %v1755, %v1883
        %v1948 = vsel %vm1820, %v1756, %v1884
        %v1949 = vsel %vm1821, %v1757, %v1885
        %v1950 = vsel %vm1822, %v1758, %v1886
        %v1951 = vsel %vm1823, %v1759, %v1887
        %v1952 = vsel %vm1824, %v1760, %v1888
        %v1953 = vsel %vm1825, %v1761, %v1889
        %v1954 = vsel %vm1826, %v1762, %v1890
        %v1955 = vsel %vm1827, %v1763, %v1891
        %v1956 = vsel %vm1828, %v1764, %v1892
        %v1957 = vsel %vm1829, %v1765, %v1893
        %v1958 = vsel %vm1830, %v1766, %v1894
        %v1959 = vsel %vm1831, %v1767, %v1895
        %v1960 = vsel %vm1832, %v1768, %v1896
        %v1961 = vsel %vm1833, %v1769, %v1897
        %v1962 = vsel %vm1834, %v1770, %v1898
        %v1963 = vsel %vm1835, %v1771, %v1899
        %v1964 = vsel %vm1836, %v1772, %v1900
        %v1965 = vsel %vm1837, %v1773, %v1901
        %v1966 = vsel %vm1838, %v1774, %v1902
        %v1967 = vsel %vm1839, %v1775, %v1903
        %v1968 = vsel %vm1840, %v1776, %v1904
        %v1969 = vsel %vm1841, %v1777, %v1905
        %v1970 = vsel %vm1842, %v1778, %v1906
        %v1971 = vsel %vm1843, %v1779, %v1907
        %v1972 = vsel %vm1844, %v1780, %v1908
        %v1973 = vsel %vm1845, %v1781, %v1909
        %v1974 = vsel %vm1846, %v1782, %v1910
        %v1975 = vsel %vm1847, %v1783, %v1911
        %v1976 = vsel %vm1848, %v1784, %v1912
        %v1977 = vsel %vm1849, %v1785, %v1913
        %v1978 = vsel %vm1850, %v1786, %v1914
        %v1979 = vsel %vm1851, %v1787, %v1915
        %v1980 = vsel %vm1852, %v1788, %v1916
        %v1981 = vsel %vm1853, %v1789, %v1917
        %v1982 = vsel %vm1854, %v1790, %v1918
        %v1983 = vsel %vm1855, %v1791, %v1919
        %v1984 = vsel %vm1856, %v1792, %v1920
        %v1985 = vsel %vm1857, %v1793, %v1921
        %v1986 = vsel %vm1858, %v1794, %v1922
        %v1987 = vsel %vm1859, %v1795, %v1923
        %v1988 = vsel %vm1860, %v1796, %v1924
        %v1989 = vsel %vm1861, %v1797, %v1925
        %v1990 = vsel %vm1862, %v1798, %v1926
        %v1991 = vsel %vm1863, %v1799, %v1927
        %v1992 = vsel %vm1864, %v1800, %v1928
        %v1993 = vsel %vm1865, %v1801, %v1929
        %v1994 = vsel %vm1866, %v1802, %v1930
        %v1995 = vsel %vm1867, %v1803, %v1931
        %v1996 = vsel %vm1868, %v1804, %v1932
        %v1997 = vsel %vm1869, %v1805, %v1933
        %v1998 = vsel %vm1870, %v1806, %v1934
        %v1999 = vmul.f32 %v1935, %v584
        %v2000 = vmul.f32 %v1936, %v585
        %v2001 = vmul.f32 %v1937, %v586
        %v2002 = vmul.f32 %v1938, %v587
        %v2003 = vmul.f32 %v1939, %v588
        %v2004 = vmul.f32 %v1940, %v589
        %v2005 = vmul.f32 %v1941, %v590
        %v2006 = vmul.f32 %v1942, %v591
        %v2007 = vmul.f32 %v1943, %v592
        %v2008 = vmul.f32 %v1944, %v593
        %v2009 = vmul.f32 %v1945, %v594
        %v2010 = vmul.f32 %v1946, %v595
        %v2011 = vmul.f32 %v1947, %v596
        %v2012 = vmul.f32 %v1948, %v597
        %v2013 = vmul.f32 %v1949, %v598
        %v2014 = vmul.f32 %v1950, %v599
        %v2015 = vmul.f32 %v1951, %v600
        %v2016 = vmul.f32 %v1952, %v601
        %v2017 = vmul.f32 %v1953, %v602
        %v2018 = vmul.f32 %v1954, %v603
        %v2019 = vmul.f32 %v1955, %v604
        %v2020 = vmul.f32 %v1956, %v605
        %v2021 = vmul.f32 %v1957, %v606
        %v2022 = vmul.f32 %v1958, %v607
        %v2023 = vmul.f32 %v1959, %v608
        %v2024 = vmul.f32 %v1960, %v609
        %v2025 = vmul.f32 %v1961, %v610
        %v2026 = vmul.f32 %v1962, %v611
        %v2027 = vmul.f32 %v1963, %v612
        %v2028 = vmul.f32 %v1964, %v613
        %v2029 = vmul.f32 %v1965, %v614
        %v2030 = vmul.f32 %v1966, %v615
        %v2031 = vmul.f32 %v1967, %v616
        %v2032 = vmul.f32 %v1968, %v617
        %v2033 = vmul.f32 %v1969, %v618
        %v2034 = vmul.f32 %v1970, %v619
        %v2035 = vmul.f32 %v1971, %v620
        %v2036 = vmul.f32 %v1972, %v621
        %v2037 = vmul.f32 %v1973, %v622
        %v2038 = vmul.f32 %v1974, %v623
        %v2039 = vmul.f32 %v1975, %v624
        %v2040 = vmul.f32 %v1976, %v625
        %v2041 = vmul.f32 %v1977, %v626
        %v2042 = vmul.f32 %v1978, %v627
        %v2043 = vmul.f32 %v1979, %v628
        %v2044 = vmul.f32 %v1980, %v629
        %v2045 = vmul.f32 %v1981, %v630
        %v2046 = vmul.f32 %v1982, %v631
        %v2047 = vmul.f32 %v1983, %v632
        %v2048 = vmul.f32 %v1984, %v633
        %v2049 = vmul.f32 %v1985, %v634
        %v2050 = vmul.f32 %v1986, %v635
        %v2051 = vmul.f32 %v1987, %v636
        %v2052 = vmul.f32 %v1988, %v637
        %v2053 = vmul.f32 %v1989, %v638
        %v2054 = vmul.f32 %v1990, %v639
        %v2055 = vmul.f32 %v1991, %v640
        %v2056 = vmul.f32 %v1992, %v641
        %v2057 = vmul.f32 %v1993, %v642
        %v2058 = vmul.f32 %v1994, %v643
        %v2059 = vmul.f32 %v1995, %v644
        %v2060 = vmul.f32 %v1996, %v645
        %v2061 = vmul.f32 %v1997, %v646
        %v2062 = vmul.f32 %v1998, %v647
        %v2063 = vpack.c.bf16 %v2001, %v1999
        %v2064 = vpack.c.bf16 %v2002, %v2000
        %v2065 = vpack.c.bf16 %v2005, %v2003
        %v2066 = vpack.c.bf16 %v2006, %v2004
        %v2067 = vpack.c.bf16 %v2009, %v2007
        %v2068 = vpack.c.bf16 %v2010, %v2008
        %v2069 = vpack.c.bf16 %v2013, %v2011
        %v2070 = vpack.c.bf16 %v2014, %v2012
        %v2071 = vpack.c.bf16 %v2017, %v2015
        %v2072 = vpack.c.bf16 %v2018, %v2016
        %v2073 = vpack.c.bf16 %v2021, %v2019
        %v2074 = vpack.c.bf16 %v2022, %v2020
        %v2075 = vpack.c.bf16 %v2025, %v2023
        %v2076 = vpack.c.bf16 %v2026, %v2024
        %v2077 = vpack.c.bf16 %v2029, %v2027
        %v2078 = vpack.c.bf16 %v2030, %v2028
        %v2079 = vpack.c.bf16 %v2033, %v2031
        %v2080 = vpack.c.bf16 %v2034, %v2032
        %v2081 = vpack.c.bf16 %v2037, %v2035
        %v2082 = vpack.c.bf16 %v2038, %v2036
        %v2083 = vpack.c.bf16 %v2041, %v2039
        %v2084 = vpack.c.bf16 %v2042, %v2040
        %v2085 = vpack.c.bf16 %v2045, %v2043
        %v2086 = vpack.c.bf16 %v2046, %v2044
        %v2087 = vpack.c.bf16 %v2049, %v2047
        %v2088 = vpack.c.bf16 %v2050, %v2048
        %v2089 = vpack.c.bf16 %v2053, %v2051
        %v2090 = vpack.c.bf16 %v2054, %v2052
        %v2091 = vpack.c.bf16 %v2057, %v2055
        %v2092 = vpack.c.bf16 %v2058, %v2056
        %v2093 = vpack.c.bf16 %v2061, %v2059
        %v2094 = vpack.c.bf16 %v2062, %v2060
        %v2095 = vld [vmem:[#allocation2 + $0x8] sm:$0xff]
        %v2096 = vld [vmem:[#allocation2 + $0x18] sm:$0xff]
        %v2097 = vld [vmem:[#allocation2 + $0x28] sm:$0xff]
        %v2098 = vld [vmem:[#allocation2 + $0x38] sm:$0xff]
        %v2099 = vld [vmem:[#allocation2 + $0x48] sm:$0xff]
        %v2100 = vld [vmem:[#allocation2 + $0x58] sm:$0xff]
        %v2101 = vld [vmem:[#allocation2 + $0x68] sm:$0xff]
        %v2102 = vld [vmem:[#allocation2 + $0x78] sm:$0xff]
        %v2103 = vld [vmem:[#allocation2 + $0x88] sm:$0xff]
        %v2104 = vld [vmem:[#allocation2 + $0x98] sm:$0xff]
        %v2105 = vld [vmem:[#allocation2 + $0xa8] sm:$0xff]
        %v2106 = vld [vmem:[#allocation2 + $0xb8] sm:$0xff]
        %v2107 = vld [vmem:[#allocation2 + $0xc8] sm:$0xff]
        %v2108 = vld [vmem:[#allocation2 + $0xd8] sm:$0xff]
        %v2109 = vld [vmem:[#allocation2 + $0xe8] sm:$0xff]
        %v2110 = vld [vmem:[#allocation2 + $0xf8] sm:$0xff]
        %v2111 = vld [vmem:[#allocation2 + $0x108] sm:$0xff]
        %v2112 = vld [vmem:[#allocation2 + $0x118] sm:$0xff]
        %v2113 = vld [vmem:[#allocation2 + $0x128] sm:$0xff]
        %v2114 = vld [vmem:[#allocation2 + $0x138] sm:$0xff]
        %v2115 = vld [vmem:[#allocation2 + $0x148] sm:$0xff]
        %v2116 = vld [vmem:[#allocation2 + $0x158] sm:$0xff]
        %v2117 = vld [vmem:[#allocation2 + $0x168] sm:$0xff]
        %v2118 = vld [vmem:[#allocation2 + $0x178] sm:$0xff]
        %v2119 = vld [vmem:[#allocation2 + $0x188] sm:$0xff]
        %v2120 = vld [vmem:[#allocation2 + $0x198] sm:$0xff]
        %v2121 = vld [vmem:[#allocation2 + $0x1a8] sm:$0xff]
        %v2122 = vld [vmem:[#allocation2 + $0x1b8] sm:$0xff]
        %v2123 = vld [vmem:[#allocation2 + $0x1c8] sm:$0xff]
        %v2124 = vld [vmem:[#allocation2 + $0x1d8] sm:$0xff]
        %v2125 = vld [vmem:[#allocation2 + $0x1e8] sm:$0xff]
        %v2126 = vld [vmem:[#allocation2 + $0x1f8] sm:$0xff]
        %2127 = vmatprep.subr.bf16.mxu0 0
        %2128 = vmatpush1.bf16.msra.mxu0 %v1347
        %2129 = vmatprep.subr.bf16.mxu0 0
        %2130 = vmatpush1.bf16.msra.mxu0 %v1346
        %2131 = vmatprep.subr.bf16.mxu0 0
        %2132 = vmatpush1.bf16.msra.mxu0 %v1345
        %2133 = vmatprep.subr.bf16.mxu0 0
        %2134 = vmatpush1.bf16.msra.mxu0 %v1344
        %2135 = vmatprep.subr.bf16.mxu0 0
        %2136 = vmatpush1.bf16.msra.mxu0 %v1343
        %2137 = vmatprep.subr.bf16.mxu0 0
        %2138 = vmatpush1.bf16.msra.mxu0 %v1342
        %2139 = vmatprep.subr.bf16.mxu0 0
        %2140 = vmatpush1.bf16.msra.mxu0 %v1341
        %2141 = vmatprep.subr.bf16.mxu0 0
        %2142 = vmatpush1.bf16.msra.mxu0 %v1340
        %2143 = vmatprep.subr.bf16.mxu0 0
        %2144 = vmatpush2.bf16.msra.mxu0 %v1355
        %2145 = vmatprep.subr.bf16.mxu0 0
        %2146 = vmatpush2.bf16.msra.mxu0 %v1354
        %2147 = vmatprep.subr.bf16.mxu0 0
        %2148 = vmatpush2.bf16.msra.mxu0 %v1353
        %2149 = vmatprep.subr.bf16.mxu0 0
        %2150 = vmatpush2.bf16.msra.mxu0 %v1352
        %2151 = vmatprep.subr.bf16.mxu0 0
        %2152 = vmatpush2.bf16.msra.mxu0 %v1351
        %2153 = vmatprep.subr.bf16.mxu0 0
        %2154 = vmatpush2.bf16.msra.mxu0 %v1350
        %2155 = vmatprep.subr.bf16.mxu0 0
        %2156 = vmatpush2.bf16.msra.mxu0 %v1349
        %2157 = vmatprep.subr.bf16.mxu0 0
        %2158 = vmatpush2.bf16.msra.mxu0 %v1348
        %2159 = vmatprep.mubr.bf16.mxu0 %v2064
        %2160 = vmatmul.mubr.bf16.gmra.mxu0 %v2063
        %v2161 = vpop.f32.mrf.mxu0
        %v2162 = vadd.f32 0.0, %v2161
        %v2163 = vpop.f32.mrf.mxu0
        %v2164 = vpop.f32.mrf.mxu0
        %v2165 = vadd.f32 0.0, %v2164
        %v2166 = vpop.f32.mrf.mxu0
        %2167 = vmatprep.mubr.bf16.mxu0 %v2066
        %2168 = vmatmul.mubr.bf16.gmra.mxu0 %v2065
        %v2169 = vpop.f32.mrf.mxu0
        %v2170 = vadd.f32 0.0, %v2169
        %v2171 = vpop.f32.mrf.mxu0
        %v2172 = vpop.f32.mrf.mxu0
        %v2173 = vadd.f32 0.0, %v2172
        %v2174 = vpop.f32.mrf.mxu0
        %2175 = vmatprep.mubr.bf16.mxu0 %v2068
        %2176 = vmatmul.mubr.bf16.gmra.mxu0 %v2067
        %v2177 = vpop.f32.mrf.mxu0
        %v2178 = vadd.f32 0.0, %v2177
        %v2179 = vpop.f32.mrf.mxu0
        %v2180 = vpop.f32.mrf.mxu0
        %v2181 = vadd.f32 0.0, %v2180
        %v2182 = vpop.f32.mrf.mxu0
        %2183 = vmatprep.mubr.bf16.mxu0 %v2070
        %2184 = vmatmul.mubr.bf16.gmra.mxu0 %v2069
        %v2185 = vpop.f32.mrf.mxu0
        %v2186 = vadd.f32 0.0, %v2185
        %v2187 = vpop.f32.mrf.mxu0
        %v2188 = vpop.f32.mrf.mxu0
        %v2189 = vadd.f32 0.0, %v2188
        %v2190 = vpop.f32.mrf.mxu0
        %2191 = vmatprep.mubr.bf16.mxu0 %v2072
        %2192 = vmatmul.mubr.bf16.gmra.mxu0 %v2071
        %v2193 = vpop.f32.mrf.mxu0
        %v2194 = vadd.f32 0.0, %v2193
        %v2195 = vpop.f32.mrf.mxu0
        %v2196 = vpop.f32.mrf.mxu0
        %v2197 = vadd.f32 0.0, %v2196
        %v2198 = vpop.f32.mrf.mxu0
        %2199 = vmatprep.mubr.bf16.mxu0 %v2074
        %2200 = vmatmul.mubr.bf16.gmra.mxu0 %v2073
        %v2201 = vpop.f32.mrf.mxu0
        %v2202 = vadd.f32 0.0, %v2201
        %v2203 = vpop.f32.mrf.mxu0
        %v2204 = vpop.f32.mrf.mxu0
        %v2205 = vadd.f32 0.0, %v2204
        %v2206 = vpop.f32.mrf.mxu0
        %2207 = vmatprep.mubr.bf16.mxu0 %v2076
        %2208 = vmatmul.mubr.bf16.gmra.mxu0 %v2075
        %v2209 = vpop.f32.mrf.mxu0
        %v2210 = vadd.f32 0.0, %v2209
        %v2211 = vpop.f32.mrf.mxu0
        %v2212 = vpop.f32.mrf.mxu0
        %v2213 = vadd.f32 0.0, %v2212
        %v2214 = vpop.f32.mrf.mxu0
        %2215 = vmatprep.mubr.bf16.mxu0 %v2078
        %2216 = vmatmul.mubr.bf16.gmra.mxu0 %v2077
        %v2217 = vpop.f32.mrf.mxu0
        %v2218 = vadd.f32 0.0, %v2217
        %v2219 = vpop.f32.mrf.mxu0
        %v2220 = vpop.f32.mrf.mxu0
        %v2221 = vadd.f32 0.0, %v2220
        %v2222 = vpop.f32.mrf.mxu0
        %2223 = vmatprep.mubr.bf16.mxu0 %v2080
        %2224 = vmatmul.mubr.bf16.gmra.mxu0 %v2079
        %v2225 = vpop.f32.mrf.mxu0
        %v2226 = vadd.f32 0.0, %v2225
        %v2227 = vpop.f32.mrf.mxu0
        %v2228 = vpop.f32.mrf.mxu0
        %v2229 = vadd.f32 0.0, %v2228
        %v2230 = vpop.f32.mrf.mxu0
        %2231 = vmatprep.mubr.bf16.mxu0 %v2082
        %2232 = vmatmul.mubr.bf16.gmra.mxu0 %v2081
        %v2233 = vpop.f32.mrf.mxu0
        %v2234 = vadd.f32 0.0, %v2233
        %v2235 = vpop.f32.mrf.mxu0
        %v2236 = vpop.f32.mrf.mxu0
        %v2237 = vadd.f32 0.0, %v2236
        %v2238 = vpop.f32.mrf.mxu0
        %2239 = vmatprep.mubr.bf16.mxu0 %v2084
        %2240 = vmatmul.mubr.bf16.gmra.mxu0 %v2083
        %v2241 = vpop.f32.mrf.mxu0
        %v2242 = vadd.f32 0.0, %v2241
        %v2243 = vpop.f32.mrf.mxu0
        %v2244 = vpop.f32.mrf.mxu0
        %v2245 = vadd.f32 0.0, %v2244
        %v2246 = vpop.f32.mrf.mxu0
        %2247 = vmatprep.mubr.bf16.mxu0 %v2086
        %2248 = vmatmul.mubr.bf16.gmra.mxu0 %v2085
        %v2249 = vpop.f32.mrf.mxu0
        %v2250 = vadd.f32 0.0, %v2249
        %v2251 = vpop.f32.mrf.mxu0
        %v2252 = vpop.f32.mrf.mxu0
        %v2253 = vadd.f32 0.0, %v2252
        %v2254 = vpop.f32.mrf.mxu0
        %2255 = vmatprep.mubr.bf16.mxu0 %v2088
        %2256 = vmatmul.mubr.bf16.gmra.mxu0 %v2087
        %v2257 = vpop.f32.mrf.mxu0
        %v2258 = vadd.f32 0.0, %v2257
        %v2259 = vpop.f32.mrf.mxu0
        %v2260 = vpop.f32.mrf.mxu0
        %v2261 = vadd.f32 0.0, %v2260
        %v2262 = vpop.f32.mrf.mxu0
        %2263 = vmatprep.mubr.bf16.mxu0 %v2090
        %2264 = vmatmul.mubr.bf16.gmra.mxu0 %v2089
        %v2265 = vpop.f32.mrf.mxu0
        %v2266 = vadd.f32 0.0, %v2265
        %v2267 = vpop.f32.mrf.mxu0
        %v2268 = vpop.f32.mrf.mxu0
        %v2269 = vadd.f32 0.0, %v2268
        %v2270 = vpop.f32.mrf.mxu0
        %2271 = vmatprep.mubr.bf16.mxu0 %v2092
        %2272 = vmatmul.mubr.bf16.gmra.mxu0 %v2091
        %v2273 = vpop.f32.mrf.mxu0
        %v2274 = vadd.f32 0.0, %v2273
        %v2275 = vpop.f32.mrf.mxu0
        %v2276 = vpop.f32.mrf.mxu0
        %v2277 = vadd.f32 0.0, %v2276
        %v2278 = vpop.f32.mrf.mxu0
        %2279 = vmatprep.mubr.bf16.mxu0 %v2094
        %2280 = vmatmul.mubr.bf16.gmra.mxu0 %v2093
        %v2281 = vpop.f32.mrf.mxu0
        %v2282 = vadd.f32 0.0, %v2281
        %v2283 = vpop.f32.mrf.mxu0
        %v2284 = vpop.f32.mrf.mxu0
        %v2285 = vadd.f32 0.0, %v2284
        %v2286 = vpop.f32.mrf.mxu0
        %2287 = vdwg.mxu0
        %v2288 = vadd.f32 %v2095, %v2162
        %v2289 = vadd.f32 %v2096, %v2165
        %v2290 = vadd.f32 %v2097, %v2170
        %v2291 = vadd.f32 %v2098, %v2173
        %v2292 = vadd.f32 %v2099, %v2178
        %v2293 = vadd.f32 %v2100, %v2181
        %v2294 = vadd.f32 %v2101, %v2186
        %v2295 = vadd.f32 %v2102, %v2189
        %v2296 = vadd.f32 %v2103, %v2194
        %v2297 = vadd.f32 %v2104, %v2197
        %v2298 = vadd.f32 %v2105, %v2202
        %v2299 = vadd.f32 %v2106, %v2205
        %v2300 = vadd.f32 %v2107, %v2210
        %v2301 = vadd.f32 %v2108, %v2213
        %v2302 = vadd.f32 %v2109, %v2218
        %v2303 = vadd.f32 %v2110, %v2221
        %v2304 = vadd.f32 %v2111, %v2226
        %v2305 = vadd.f32 %v2112, %v2229
        %v2306 = vadd.f32 %v2113, %v2234
        %v2307 = vadd.f32 %v2114, %v2237
        %v2308 = vadd.f32 %v2115, %v2242
        %v2309 = vadd.f32 %v2116, %v2245
        %v2310 = vadd.f32 %v2117, %v2250
        %v2311 = vadd.f32 %v2118, %v2253
        %v2312 = vadd.f32 %v2119, %v2258
        %v2313 = vadd.f32 %v2120, %v2261
        %v2314 = vadd.f32 %v2121, %v2266
        %v2315 = vadd.f32 %v2122, %v2269
        %v2316 = vadd.f32 %v2123, %v2274
        %v2317 = vadd.f32 %v2124, %v2277
        %v2318 = vadd.f32 %v2125, %v2282
        %v2319 = vadd.f32 %v2126, %v2285
        %2320 = vst [vmem:[#allocation2 + $0x8] sm:$0xff] %v2288
        %2321 = vst [vmem:[#allocation2 + $0x18] sm:$0xff] %v2289
        %2322 = vst [vmem:[#allocation2 + $0x28] sm:$0xff] %v2290
        %2323 = vst [vmem:[#allocation2 + $0x38] sm:$0xff] %v2291
        %2324 = vst [vmem:[#allocation2 + $0x48] sm:$0xff] %v2292
        %2325 = vst [vmem:[#allocation2 + $0x58] sm:$0xff] %v2293
        %2326 = vst [vmem:[#allocation2 + $0x68] sm:$0xff] %v2294
        %2327 = vst [vmem:[#allocation2 + $0x78] sm:$0xff] %v2295
        %2328 = vst [vmem:[#allocation2 + $0x88] sm:$0xff] %v2296
        %2329 = vst [vmem:[#allocation2 + $0x98] sm:$0xff] %v2297
        %2330 = vst [vmem:[#allocation2 + $0xa8] sm:$0xff] %v2298
        %2331 = vst [vmem:[#allocation2 + $0xb8] sm:$0xff] %v2299
        %2332 = vst [vmem:[#allocation2 + $0xc8] sm:$0xff] %v2300
        %2333 = vst [vmem:[#allocation2 + $0xd8] sm:$0xff] %v2301
        %2334 = vst [vmem:[#allocation2 + $0xe8] sm:$0xff] %v2302
        %2335 = vst [vmem:[#allocation2 + $0xf8] sm:$0xff] %v2303
        %2336 = vst [vmem:[#allocation2 + $0x108] sm:$0xff] %v2304
        %2337 = vst [vmem:[#allocation2 + $0x118] sm:$0xff] %v2305
        %2338 = vst [vmem:[#allocation2 + $0x128] sm:$0xff] %v2306
        %2339 = vst [vmem:[#allocation2 + $0x138] sm:$0xff] %v2307
        %2340 = vst [vmem:[#allocation2 + $0x148] sm:$0xff] %v2308
        %2341 = vst [vmem:[#allocation2 + $0x158] sm:$0xff] %v2309
        %2342 = vst [vmem:[#allocation2 + $0x168] sm:$0xff] %v2310
        %2343 = vst [vmem:[#allocation2 + $0x178] sm:$0xff] %v2311
        %2344 = vst [vmem:[#allocation2 + $0x188] sm:$0xff] %v2312
        %2345 = vst [vmem:[#allocation2 + $0x198] sm:$0xff] %v2313
        %2346 = vst [vmem:[#allocation2 + $0x1a8] sm:$0xff] %v2314
        %2347 = vst [vmem:[#allocation2 + $0x1b8] sm:$0xff] %v2315
        %2348 = vst [vmem:[#allocation2 + $0x1c8] sm:$0xff] %v2316
        %2349 = vst [vmem:[#allocation2 + $0x1d8] sm:$0xff] %v2317
        %2350 = vst [vmem:[#allocation2 + $0x1e8] sm:$0xff] %v2318
        %2351 = vst [vmem:[#allocation2 + $0x1f8] sm:$0xff] %v2319
        %p2352 = scmp.eq.s32.totalorder %s26, 1
        // Predicated region
        $region76: #{tpu_custom_call.1} parent=66 // pred_check
          %p2353 = pneg %p2352
        $region77: #{tpu_custom_call.1} parent=66 // pred_check_branch
          %2355 = sbr.rel (%p2353) target = $region79
        $region78: #{tpu_custom_call.1} parent=66 // pred_region
          %v2356 = vld [vmem:[#allocation2] sm:$0xff]
          %v2357 = vld [vmem:[#allocation2 + $0x8] sm:$0xff]
          %v2358 = vld [vmem:[#allocation2 + $0x10] sm:$0xff]
          %v2359 = vld [vmem:[#allocation2 + $0x18] sm:$0xff]
          %v2360 = vld [vmem:[#allocation2 + $0x20] sm:$0xff]
          %v2361 = vld [vmem:[#allocation2 + $0x28] sm:$0xff]
          %v2362 = vld [vmem:[#allocation2 + $0x30] sm:$0xff]
          %v2363 = vld [vmem:[#allocation2 + $0x38] sm:$0xff]
          %v2364 = vld [vmem:[#allocation2 + $0x40] sm:$0xff]
          %v2365 = vld [vmem:[#allocation2 + $0x48] sm:$0xff]
          %v2366 = vld [vmem:[#allocation2 + $0x50] sm:$0xff]
          %v2367 = vld [vmem:[#allocation2 + $0x58] sm:$0xff]
          %v2368 = vld [vmem:[#allocation2 + $0x60] sm:$0xff]
          %v2369 = vld [vmem:[#allocation2 + $0x68] sm:$0xff]
          %v2370 = vld [vmem:[#allocation2 + $0x70] sm:$0xff]
          %v2371 = vld [vmem:[#allocation2 + $0x78] sm:$0xff]
          %v2372 = vld [vmem:[#allocation2 + $0x80] sm:$0xff]
          %v2373 = vld [vmem:[#allocation2 + $0x88] sm:$0xff]
          %v2374 = vld [vmem:[#allocation2 + $0x90] sm:$0xff]
          %v2375 = vld [vmem:[#allocation2 + $0x98] sm:$0xff]
          %v2376 = vld [vmem:[#allocation2 + $0xa0] sm:$0xff]
          %v2377 = vld [vmem:[#allocation2 + $0xa8] sm:$0xff]
          %v2378 = vld [vmem:[#allocation2 + $0xb0] sm:$0xff]
          %v2379 = vld [vmem:[#allocation2 + $0xb8] sm:$0xff]
          %v2380 = vld [vmem:[#allocation2 + $0xc0] sm:$0xff]
          %v2381 = vld [vmem:[#allocation2 + $0xc8] sm:$0xff]
          %v2382 = vld [vmem:[#allocation2 + $0xd0] sm:$0xff]
          %v2383 = vld [vmem:[#allocation2 + $0xd8] sm:$0xff]
          %v2384 = vld [vmem:[#allocation2 + $0xe0] sm:$0xff]
          %v2385 = vld [vmem:[#allocation2 + $0xe8] sm:$0xff]
          %v2386 = vld [vmem:[#allocation2 + $0xf0] sm:$0xff]
          %v2387 = vld [vmem:[#allocation2 + $0xf8] sm:$0xff]
          %v2388 = vld [vmem:[#allocation2 + $0x100] sm:$0xff]
          %v2389 = vld [vmem:[#allocation2 + $0x108] sm:$0xff]
          %v2390 = vld [vmem:[#allocation2 + $0x110] sm:$0xff]
          %v2391 = vld [vmem:[#allocation2 + $0x118] sm:$0xff]
          %v2392 = vld [vmem:[#allocation2 + $0x120] sm:$0xff]
          %v2393 = vld [vmem:[#allocation2 + $0x128] sm:$0xff]
          %v2394 = vld [vmem:[#allocation2 + $0x130] sm:$0xff]
          %v2395 = vld [vmem:[#allocation2 + $0x138] sm:$0xff]
          %v2396 = vld [vmem:[#allocation2 + $0x140] sm:$0xff]
          %v2397 = vld [vmem:[#allocation2 + $0x148] sm:$0xff]
          %v2398 = vld [vmem:[#allocation2 + $0x150] sm:$0xff]
          %v2399 = vld [vmem:[#allocation2 + $0x158] sm:$0xff]
          %v2400 = vld [vmem:[#allocation2 + $0x160] sm:$0xff]
          %v2401 = vld [vmem:[#allocation2 + $0x168] sm:$0xff]
          %v2402 = vld [vmem:[#allocation2 + $0x170] sm:$0xff]
          %v2403 = vld [vmem:[#allocation2 + $0x178] sm:$0xff]
          %v2404 = vld [vmem:[#allocation2 + $0x180] sm:$0xff]
          %v2405 = vld [vmem:[#allocation2 + $0x188] sm:$0xff]
          %v2406 = vld [vmem:[#allocation2 + $0x190] sm:$0xff]
          %v2407 = vld [vmem:[#allocation2 + $0x198] sm:$0xff]
          %v2408 = vld [vmem:[#allocation2 + $0x1a0] sm:$0xff]
          %v2409 = vld [vmem:[#allocation2 + $0x1a8] sm:$0xff]
          %v2410 = vld [vmem:[#allocation2 + $0x1b0] sm:$0xff]
          %v2411 = vld [vmem:[#allocation2 + $0x1b8] sm:$0xff]
          %v2412 = vld [vmem:[#allocation2 + $0x1c0] sm:$0xff]
          %v2413 = vld [vmem:[#allocation2 + $0x1c8] sm:$0xff]
          %v2414 = vld [vmem:[#allocation2 + $0x1d0] sm:$0xff]
          %v2415 = vld [vmem:[#allocation2 + $0x1d8] sm:$0xff]
          %v2416 = vld [vmem:[#allocation2 + $0x1e0] sm:$0xff]
          %v2417 = vld [vmem:[#allocation2 + $0x1e8] sm:$0xff]
          %v2418 = vld [vmem:[#allocation2 + $0x1f0] sm:$0xff]
          %v2419 = vld [vmem:[#allocation2 + $0x1f8] sm:$0xff]
          %v2420 = vld [vmem:[%s432] sm:$0xff]
          %v2421 = vld [vmem:[%s432 + $0x8] sm:$0xff]
          %v2422 = vld [vmem:[%s432 + $0x10] sm:$0xff]
          %v2423 = vld [vmem:[%s432 + $0x18] sm:$0xff]
          %v2424 = vld [vmem:[%s432 + $0x20] sm:$0xff]
          %v2425 = vld [vmem:[%s432 + $0x28] sm:$0xff]
          %v2426 = vld [vmem:[%s432 + $0x30] sm:$0xff]
          %v2427 = vld [vmem:[%s432 + $0x38] sm:$0xff]
          %v2428 = vld [vmem:[%s432 + $0x40] sm:$0xff]
          %v2429 = vld [vmem:[%s432 + $0x48] sm:$0xff]
          %v2430 = vld [vmem:[%s432 + $0x50] sm:$0xff]
          %v2431 = vld [vmem:[%s432 + $0x58] sm:$0xff]
          %v2432 = vld [vmem:[%s432 + $0x60] sm:$0xff]
          %v2433 = vld [vmem:[%s432 + $0x68] sm:$0xff]
          %v2434 = vld [vmem:[%s432 + $0x70] sm:$0xff]
          %v2435 = vld [vmem:[%s432 + $0x78] sm:$0xff]
          %v2436 = vld [vmem:[%s432 + $0x80] sm:$0xff]
          %v2437 = vld [vmem:[%s432 + $0x88] sm:$0xff]
          %v2438 = vld [vmem:[%s432 + $0x90] sm:$0xff]
          %v2439 = vld [vmem:[%s432 + $0x98] sm:$0xff]
          %v2440 = vld [vmem:[%s432 + $0xa0] sm:$0xff]
          %v2441 = vld [vmem:[%s432 + $0xa8] sm:$0xff]
          %v2442 = vld [vmem:[%s432 + $0xb0] sm:$0xff]
          %v2443 = vld [vmem:[%s432 + $0xb8] sm:$0xff]
          %v2444 = vld [vmem:[%s432 + $0xc0] sm:$0xff]
          %v2445 = vld [vmem:[%s432 + $0xc8] sm:$0xff]
          %v2446 = vld [vmem:[%s432 + $0xd0] sm:$0xff]
          %v2447 = vld [vmem:[%s432 + $0xd8] sm:$0xff]
          %v2448 = vld [vmem:[%s432 + $0xe0] sm:$0xff]
          %v2449 = vld [vmem:[%s432 + $0xe8] sm:$0xff]
          %v2450 = vld [vmem:[%s432 + $0xf0] sm:$0xff]
          %v2451 = vld [vmem:[%s432 + $0xf8] sm:$0xff]
          %2453 = vset.pattern.permute.xlu0 0
          %2454 = vperm.xlu0 %2453, %v2420
          %v2455 = vpop.permute.xlu0 %2454
          %2458 = vset.pattern.permute.xlu0 0
          %2459 = vperm.xlu0 %2458, %v2421
          %v2460 = vpop.permute.xlu0 %2459
          %2463 = vset.pattern.permute.xlu0 0
          %2464 = vperm.xlu0 %2463, %v2422
          %v2465 = vpop.permute.xlu0 %2464
          %2468 = vset.pattern.permute.xlu0 0
          %2469 = vperm.xlu0 %2468, %v2423
          %v2470 = vpop.permute.xlu0 %2469
          %2473 = vset.pattern.permute.xlu0 0
          %2474 = vperm.xlu0 %2473, %v2424
          %v2475 = vpop.permute.xlu0 %2474
          %2478 = vset.pattern.permute.xlu0 0
          %2479 = vperm.xlu0 %2478, %v2425
          %v2480 = vpop.permute.xlu0 %2479
          %2483 = vset.pattern.permute.xlu0 0
          %2484 = vperm.xlu0 %2483, %v2426
          %v2485 = vpop.permute.xlu0 %2484
          %2488 = vset.pattern.permute.xlu0 0
          %2489 = vperm.xlu0 %2488, %v2427
          %v2490 = vpop.permute.xlu0 %2489
          %2493 = vset.pattern.permute.xlu0 0
          %2494 = vperm.xlu0 %2493, %v2428
          %v2495 = vpop.permute.xlu0 %2494
          %2498 = vset.pattern.permute.xlu0 0
          %2499 = vperm.xlu0 %2498, %v2429
          %v2500 = vpop.permute.xlu0 %2499
          %2503 = vset.pattern.permute.xlu0 0
          %2504 = vperm.xlu0 %2503, %v2430
          %v2505 = vpop.permute.xlu0 %2504
          %2508 = vset.pattern.permute.xlu0 0
          %2509 = vperm.xlu0 %2508, %v2431
          %v2510 = vpop.permute.xlu0 %2509
          %2513 = vset.pattern.permute.xlu0 0
          %2514 = vperm.xlu0 %2513, %v2432
          %v2515 = vpop.permute.xlu0 %2514
          %2518 = vset.pattern.permute.xlu0 0
          %2519 = vperm.xlu0 %2518, %v2433
          %v2520 = vpop.permute.xlu0 %2519
          %2523 = vset.pattern.permute.xlu0 0
          %2524 = vperm.xlu0 %2523, %v2434
          %v2525 = vpop.permute.xlu0 %2524
          %2528 = vset.pattern.permute.xlu0 0
          %2529 = vperm.xlu0 %2528, %v2435
          %v2530 = vpop.permute.xlu0 %2529
          %2533 = vset.pattern.permute.xlu0 0
          %2534 = vperm.xlu0 %2533, %v2436
          %v2535 = vpop.permute.xlu0 %2534
          %2538 = vset.pattern.permute.xlu0 0
          %2539 = vperm.xlu0 %2538, %v2437
          %v2540 = vpop.permute.xlu0 %2539
          %2543 = vset.pattern.permute.xlu0 0
          %2544 = vperm.xlu0 %2543, %v2438
          %v2545 = vpop.permute.xlu0 %2544
          %2548 = vset.pattern.permute.xlu0 0
          %2549 = vperm.xlu0 %2548, %v2439
          %v2550 = vpop.permute.xlu0 %2549
          %2553 = vset.pattern.permute.xlu0 0
          %2554 = vperm.xlu0 %2553, %v2440
          %v2555 = vpop.permute.xlu0 %2554
          %2558 = vset.pattern.permute.xlu0 0
          %2559 = vperm.xlu0 %2558, %v2441
          %v2560 = vpop.permute.xlu0 %2559
          %2563 = vset.pattern.permute.xlu0 0
          %2564 = vperm.xlu0 %2563, %v2442
          %v2565 = vpop.permute.xlu0 %2564
          %2568 = vset.pattern.permute.xlu0 0
          %2569 = vperm.xlu0 %2568, %v2443
          %v2570 = vpop.permute.xlu0 %2569
          %2573 = vset.pattern.permute.xlu0 0
          %2574 = vperm.xlu0 %2573, %v2444
          %v2575 = vpop.permute.xlu0 %2574
          %2578 = vset.pattern.permute.xlu0 0
          %2579 = vperm.xlu0 %2578, %v2445
          %v2580 = vpop.permute.xlu0 %2579
          %2583 = vset.pattern.permute.xlu0 0
          %2584 = vperm.xlu0 %2583, %v2446
          %v2585 = vpop.permute.xlu0 %2584
          %2588 = vset.pattern.permute.xlu0 0
          %2589 = vperm.xlu0 %2588, %v2447
          %v2590 = vpop.permute.xlu0 %2589
          %2593 = vset.pattern.permute.xlu0 0
          %2594 = vperm.xlu0 %2593, %v2448
          %v2595 = vpop.permute.xlu0 %2594
          %2598 = vset.pattern.permute.xlu0 0
          %2599 = vperm.xlu0 %2598, %v2449
          %v2600 = vpop.permute.xlu0 %2599
          %2603 = vset.pattern.permute.xlu0 0
          %2604 = vperm.xlu0 %2603, %v2450
          %v2605 = vpop.permute.xlu0 %2604
          %2608 = vset.pattern.permute.xlu0 0
          %2609 = vperm.xlu0 %2608, %v2451
          %v2610 = vpop.permute.xlu0 %2609
          %v2612 = vmul.f32 %v2356, %v2455
          %v2613 = vmul.f32 %v2357, %v2455
          %v2614 = vmul.f32 %v2358, %v2460
          %v2615 = vmul.f32 %v2359, %v2460
          %v2616 = vmul.f32 %v2360, %v2465
          %v2617 = vmul.f32 %v2361, %v2465
          %v2618 = vmul.f32 %v2362, %v2470
          %v2619 = vmul.f32 %v2363, %v2470
          %v2620 = vmul.f32 %v2364, %v2475
          %v2621 = vmul.f32 %v2365, %v2475
          %v2622 = vmul.f32 %v2366, %v2480
          %v2623 = vmul.f32 %v2367, %v2480
          %v2624 = vmul.f32 %v2368, %v2485
          %v2625 = vmul.f32 %v2369, %v2485
          %v2626 = vmul.f32 %v2370, %v2490
          %v2627 = vmul.f32 %v2371, %v2490
          %v2628 = vmul.f32 %v2372, %v2495
          %v2629 = vmul.f32 %v2373, %v2495
          %v2630 = vmul.f32 %v2374, %v2500
          %v2631 = vmul.f32 %v2375, %v2500
          %v2632 = vmul.f32 %v2376, %v2505
          %v2633 = vmul.f32 %v2377, %v2505
          %v2634 = vmul.f32 %v2378, %v2510
          %v2635 = vmul.f32 %v2379, %v2510
          %v2636 = vmul.f32 %v2380, %v2515
          %v2637 = vmul.f32 %v2381, %v2515
          %v2638 = vmul.f32 %v2382, %v2520
          %v2639 = vmul.f32 %v2383, %v2520
          %v2640 = vmul.f32 %v2384, %v2525
          %v2641 = vmul.f32 %v2385, %v2525
          %v2642 = vmul.f32 %v2386, %v2530
          %v2643 = vmul.f32 %v2387, %v2530
          %v2644 = vmul.f32 %v2388, %v2535
          %v2645 = vmul.f32 %v2389, %v2535
          %v2646 = vmul.f32 %v2390, %v2540
          %v2647 = vmul.f32 %v2391, %v2540
          %v2648 = vmul.f32 %v2392, %v2545
          %v2649 = vmul.f32 %v2393, %v2545
          %v2650 = vmul.f32 %v2394, %v2550
          %v2651 = vmul.f32 %v2395, %v2550
          %v2652 = vmul.f32 %v2396, %v2555
          %v2653 = vmul.f32 %v2397, %v2555
          %v2654 = vmul.f32 %v2398, %v2560
          %v2655 = vmul.f32 %v2399, %v2560
          %v2656 = vmul.f32 %v2400, %v2565
          %v2657 = vmul.f32 %v2401, %v2565
          %v2658 = vmul.f32 %v2402, %v2570
          %v2659 = vmul.f32 %v2403, %v2570
          %v2660 = vmul.f32 %v2404, %v2575
          %v2661 = vmul.f32 %v2405, %v2575
          %v2662 = vmul.f32 %v2406, %v2580
          %v2663 = vmul.f32 %v2407, %v2580
          %v2664 = vmul.f32 %v2408, %v2585
          %v2665 = vmul.f32 %v2409, %v2585
          %v2666 = vmul.f32 %v2410, %v2590
          %v2667 = vmul.f32 %v2411, %v2590
          %v2668 = vmul.f32 %v2412, %v2595
          %v2669 = vmul.f32 %v2413, %v2595
          %v2670 = vmul.f32 %v2414, %v2600
          %v2671 = vmul.f32 %v2415, %v2600
          %v2672 = vmul.f32 %v2416, %v2605
          %v2673 = vmul.f32 %v2417, %v2605
          %v2674 = vmul.f32 %v2418, %v2610
          %v2675 = vmul.f32 %v2419, %v2610
          %v2676 = vld [vmem:[%s5] sm:$0xff]
          %v2677 = vld [vmem:[%s5 + $0x8] sm:$0xff]
          %v2678 = vld [vmem:[%s5 + $0x10] sm:$0xff]
          %v2679 = vld [vmem:[%s5 + $0x18] sm:$0xff]
          %v2680 = vld [vmem:[%s5 + $0x20] sm:$0xff]
          %v2681 = vld [vmem:[%s5 + $0x28] sm:$0xff]
          %v2682 = vld [vmem:[%s5 + $0x30] sm:$0xff]
          %v2683 = vld [vmem:[%s5 + $0x38] sm:$0xff]
          %v2684 = vld [vmem:[%s5 + $0x40] sm:$0xff]
          %v2685 = vld [vmem:[%s5 + $0x48] sm:$0xff]
          %v2686 = vld [vmem:[%s5 + $0x50] sm:$0xff]
          %v2687 = vld [vmem:[%s5 + $0x58] sm:$0xff]
          %v2688 = vld [vmem:[%s5 + $0x60] sm:$0xff]
          %v2689 = vld [vmem:[%s5 + $0x68] sm:$0xff]
          %v2690 = vld [vmem:[%s5 + $0x70] sm:$0xff]
          %v2691 = vld [vmem:[%s5 + $0x78] sm:$0xff]
          %v2692 = vld [vmem:[%s5 + $0x80] sm:$0xff]
          %v2693 = vld [vmem:[%s5 + $0x88] sm:$0xff]
          %v2694 = vld [vmem:[%s5 + $0x90] sm:$0xff]
          %v2695 = vld [vmem:[%s5 + $0x98] sm:$0xff]
          %v2696 = vld [vmem:[%s5 + $0xa0] sm:$0xff]
          %v2697 = vld [vmem:[%s5 + $0xa8] sm:$0xff]
          %v2698 = vld [vmem:[%s5 + $0xb0] sm:$0xff]
          %v2699 = vld [vmem:[%s5 + $0xb8] sm:$0xff]
          %v2700 = vld [vmem:[%s5 + $0xc0] sm:$0xff]
          %v2701 = vld [vmem:[%s5 + $0xc8] sm:$0xff]
          %v2702 = vld [vmem:[%s5 + $0xd0] sm:$0xff]
          %v2703 = vld [vmem:[%s5 + $0xd8] sm:$0xff]
          %v2704 = vld [vmem:[%s5 + $0xe0] sm:$0xff]
          %v2705 = vld [vmem:[%s5 + $0xe8] sm:$0xff]
          %v2706 = vld [vmem:[%s5 + $0xf0] sm:$0xff]
          %v2707 = vld [vmem:[%s5 + $0xf8] sm:$0xff]
          %v2708 = vld [vmem:[%s6] sm:$0x1]
          %v2710 = vlaneseq
          %v2711 = vshrl.u32 %v2710, 7
          %v2712 = vsub.s32 0, %v2711
          %v2713 = vrot.slane %v2708, %v2712
          %2715 = vmatprep.subr.mxu0 0.0
          %2716 = vmatpush1.msra.mxu0 %v2691
          %2717 = vmatprep.subr.mxu0 0.0
          %2718 = vmatpush1.msra.mxu0 %v2690
          %2719 = vmatprep.subr.mxu0 0.0
          %2720 = vmatpush1.msra.mxu0 %v2689
          %2721 = vmatprep.subr.mxu0 0.0
          %2722 = vmatpush1.msra.mxu0 %v2688
          %2723 = vmatprep.subr.mxu0 0.0
          %2724 = vmatpush1.msra.mxu0 %v2687
          %2725 = vmatprep.subr.mxu0 0.0
          %2726 = vmatpush1.msra.mxu0 %v2686
          %2727 = vmatprep.subr.mxu0 0.0
          %2728 = vmatpush1.msra.mxu0 %v2685
          %2729 = vmatprep.subr.mxu0 0.0
          %2730 = vmatpush1.msra.mxu0 %v2684
          %2731 = vmatprep.subr.mxu0 0.0
          %2732 = vmatpush1.msra.mxu0 %v2683
          %2733 = vmatprep.subr.mxu0 0.0
          %2734 = vmatpush1.msra.mxu0 %v2682
          %2735 = vmatprep.subr.mxu0 0.0
          %2736 = vmatpush1.msra.mxu0 %v2681
          %2737 = vmatprep.subr.mxu0 0.0
          %2738 = vmatpush1.msra.mxu0 %v2680
          %2739 = vmatprep.subr.mxu0 0.0
          %2740 = vmatpush1.msra.mxu0 %v2679
          %2741 = vmatprep.subr.mxu0 0.0
          %2742 = vmatpush1.msra.mxu0 %v2678
          %2743 = vmatprep.subr.mxu0 0.0
          %2744 = vmatpush1.msra.mxu0 %v2677
          %2745 = vmatprep.subr.mxu0 0.0
          %2746 = vmatpush1.msra.mxu0 %v2676
          %2747 = vmatprep.subr.mxu0 0.0
          %2748 = vmatpush2.msra.mxu0 %v2707
          %2749 = vmatprep.subr.mxu0 0.0
          %2750 = vmatpush2.msra.mxu0 %v2706
          %2751 = vmatprep.subr.mxu0 0.0
          %2752 = vmatpush2.msra.mxu0 %v2705
          %2753 = vmatprep.subr.mxu0 0.0
          %2754 = vmatpush2.msra.mxu0 %v2704
          %2755 = vmatprep.subr.mxu0 0.0
          %2756 = vmatpush2.msra.mxu0 %v2703
          %2757 = vmatprep.subr.mxu0 0.0
          %2758 = vmatpush2.msra.mxu0 %v2702
          %2759 = vmatprep.subr.mxu0 0.0
          %2760 = vmatpush2.msra.mxu0 %v2701
          %2761 = vmatprep.subr.mxu0 0.0
          %2762 = vmatpush2.msra.mxu0 %v2700
          %2763 = vmatprep.subr.mxu0 0.0
          %2764 = vmatpush2.msra.mxu0 %v2699
          %2765 = vmatprep.subr.mxu0 0.0
          %2766 = vmatpush2.msra.mxu0 %v2698
          %2767 = vmatprep.subr.mxu0 0.0
          %2768 = vmatpush2.msra.mxu0 %v2697
          %2769 = vmatprep.subr.mxu0 0.0
          %2770 = vmatpush2.msra.mxu0 %v2696
          %2771 = vmatprep.subr.mxu0 0.0
          %2772 = vmatpush2.msra.mxu0 %v2695
          %2773 = vmatprep.subr.mxu0 0.0
          %2774 = vmatpush2.msra.mxu0 %v2694
          %2775 = vmatprep.subr.mxu0 0.0
          %2776 = vmatpush2.msra.mxu0 %v2693
          %2777 = vmatprep.subr.mxu0 0.0
          %2778 = vmatpush2.msra.mxu0 %v2692
          %2779 = vmatprep.mubr.f32.mxu0 %v2613
          %2780 = vmatmul.mubr.f32.gmra.mxu0 %v2612
          %v2781 = vpop.f32.mrf.mxu0
          %v2782 = vadd.f32 %v2713, %v2781
          %v2783 = vpop.f32.mrf.mxu0
          %2784 = vmatprep.mubr.f32.mxu0 %v2615
          %2785 = vmatmul.mubr.f32.gmra.mxu0 %v2614
          %v2786 = vpop.f32.mrf.mxu0
          %v2787 = vadd.f32 %v2713, %v2786
          %v2788 = vpop.f32.mrf.mxu0
          %2789 = vmatprep.mubr.f32.mxu0 %v2617
          %2790 = vmatmul.mubr.f32.gmra.mxu0 %v2616
          %v2791 = vpop.f32.mrf.mxu0
          %v2792 = vadd.f32 %v2713, %v2791
          %v2793 = vpop.f32.mrf.mxu0
          %2794 = vmatprep.mubr.f32.mxu0 %v2619
          %2795 = vmatmul.mubr.f32.gmra.mxu0 %v2618
          %v2796 = vpop.f32.mrf.mxu0
          %v2797 = vadd.f32 %v2713, %v2796
          %v2798 = vpop.f32.mrf.mxu0
          %2799 = vmatprep.mubr.f32.mxu0 %v2621
          %2800 = vmatmul.mubr.f32.gmra.mxu0 %v2620
          %v2801 = vpop.f32.mrf.mxu0
          %v2802 = vadd.f32 %v2713, %v2801
          %v2803 = vpop.f32.mrf.mxu0
          %2804 = vmatprep.mubr.f32.mxu0 %v2623
          %2805 = vmatmul.mubr.f32.gmra.mxu0 %v2622
          %v2806 = vpop.f32.mrf.mxu0
          %v2807 = vadd.f32 %v2713, %v2806
          %v2808 = vpop.f32.mrf.mxu0
          %2809 = vmatprep.mubr.f32.mxu0 %v2625
          %2810 = vmatmul.mubr.f32.gmra.mxu0 %v2624
          %v2811 = vpop.f32.mrf.mxu0
          %v2812 = vadd.f32 %v2713, %v2811
          %v2813 = vpop.f32.mrf.mxu0
          %2814 = vmatprep.mubr.f32.mxu0 %v2627
          %2815 = vmatmul.mubr.f32.gmra.mxu0 %v2626
          %v2816 = vpop.f32.mrf.mxu0
          %v2817 = vadd.f32 %v2713, %v2816
          %v2818 = vpop.f32.mrf.mxu0
          %2819 = vmatprep.mubr.f32.mxu0 %v2629
          %2820 = vmatmul.mubr.f32.gmra.mxu0 %v2628
          %v2821 = vpop.f32.mrf.mxu0
          %v2822 = vadd.f32 %v2713, %v2821
          %v2823 = vpop.f32.mrf.mxu0
          %2824 = vmatprep.mubr.f32.mxu0 %v2631
          %2825 = vmatmul.mubr.f32.gmra.mxu0 %v2630
          %v2826 = vpop.f32.mrf.mxu0
          %v2827 = vadd.f32 %v2713, %v2826
          %v2828 = vpop.f32.mrf.mxu0
          %2829 = vmatprep.mubr.f32.mxu0 %v2633
          %2830 = vmatmul.mubr.f32.gmra.mxu0 %v2632
          %v2831 = vpop.f32.mrf.mxu0
          %v2832 = vadd.f32 %v2713, %v2831
          %v2833 = vpop.f32.mrf.mxu0
          %2834 = vmatprep.mubr.f32.mxu0 %v2635
          %2835 = vmatmul.mubr.f32.gmra.mxu0 %v2634
          %v2836 = vpop.f32.mrf.mxu0
          %v2837 = vadd.f32 %v2713, %v2836
          %v2838 = vpop.f32.mrf.mxu0
          %2839 = vmatprep.mubr.f32.mxu0 %v2637
          %2840 = vmatmul.mubr.f32.gmra.mxu0 %v2636
          %v2841 = vpop.f32.mrf.mxu0
          %v2842 = vadd.f32 %v2713, %v2841
          %v2843 = vpop.f32.mrf.mxu0
          %2844 = vmatprep.mubr.f32.mxu0 %v2639
          %2845 = vmatmul.mubr.f32.gmra.mxu0 %v2638
          %v2846 = vpop.f32.mrf.mxu0
          %v2847 = vadd.f32 %v2713, %v2846
          %v2848 = vpop.f32.mrf.mxu0
          %2849 = vmatprep.mubr.f32.mxu0 %v2641
          %2850 = vmatmul.mubr.f32.gmra.mxu0 %v2640
          %v2851 = vpop.f32.mrf.mxu0
          %v2852 = vadd.f32 %v2713, %v2851
          %v2853 = vpop.f32.mrf.mxu0
          %2854 = vmatprep.mubr.f32.mxu0 %v2643
          %2855 = vmatmul.mubr.f32.gmra.mxu0 %v2642
          %v2856 = vpop.f32.mrf.mxu0
          %v2857 = vadd.f32 %v2713, %v2856
          %v2858 = vpop.f32.mrf.mxu0
          %2859 = vmatprep.mubr.f32.mxu0 %v2645
          %2860 = vmatmul.mubr.f32.gmra.mxu0 %v2644
          %v2861 = vpop.f32.mrf.mxu0
          %v2862 = vadd.f32 %v2713, %v2861
          %v2863 = vpop.f32.mrf.mxu0
          %2864 = vmatprep.mubr.f32.mxu0 %v2647
          %2865 = vmatmul.mubr.f32.gmra.mxu0 %v2646
          %v2866 = vpop.f32.mrf.mxu0
          %v2867 = vadd.f32 %v2713, %v2866
          %v2868 = vpop.f32.mrf.mxu0
          %2869 = vmatprep.mubr.f32.mxu0 %v2649
          %2870 = vmatmul.mubr.f32.gmra.mxu0 %v2648
          %v2871 = vpop.f32.mrf.mxu0
          %v2872 = vadd.f32 %v2713, %v2871
          %v2873 = vpop.f32.mrf.mxu0
          %2874 = vmatprep.mubr.f32.mxu0 %v2651
          %2875 = vmatmul.mubr.f32.gmra.mxu0 %v2650
          %v2876 = vpop.f32.mrf.mxu0
          %v2877 = vadd.f32 %v2713, %v2876
          %v2878 = vpop.f32.mrf.mxu0
          %2879 = vmatprep.mubr.f32.mxu0 %v2653
          %2880 = vmatmul.mubr.f32.gmra.mxu0 %v2652
          %v2881 = vpop.f32.mrf.mxu0
          %v2882 = vadd.f32 %v2713, %v2881
          %v2883 = vpop.f32.mrf.mxu0
          %2884 = vmatprep.mubr.f32.mxu0 %v2655
          %2885 = vmatmul.mubr.f32.gmra.mxu0 %v2654
          %v2886 = vpop.f32.mrf.mxu0
          %v2887 = vadd.f32 %v2713, %v2886
          %v2888 = vpop.f32.mrf.mxu0
          %2889 = vmatprep.mubr.f32.mxu0 %v2657
          %2890 = vmatmul.mubr.f32.gmra.mxu0 %v2656
          %v2891 = vpop.f32.mrf.mxu0
          %v2892 = vadd.f32 %v2713, %v2891
          %v2893 = vpop.f32.mrf.mxu0
          %2894 = vmatprep.mubr.f32.mxu0 %v2659
          %2895 = vmatmul.mubr.f32.gmra.mxu0 %v2658
          %v2896 = vpop.f32.mrf.mxu0
          %v2897 = vadd.f32 %v2713, %v2896
          %v2898 = vpop.f32.mrf.mxu0
          %2899 = vmatprep.mubr.f32.mxu0 %v2661
          %2900 = vmatmul.mubr.f32.gmra.mxu0 %v2660
          %v2901 = vpop.f32.mrf.mxu0
          %v2902 = vadd.f32 %v2713, %v2901
          %v2903 = vpop.f32.mrf.mxu0
          %2904 = vmatprep.mubr.f32.mxu0 %v2663
          %2905 = vmatmul.mubr.f32.gmra.mxu0 %v2662
          %v2906 = vpop.f32.mrf.mxu0
          %v2907 = vadd.f32 %v2713, %v2906
          %v2908 = vpop.f32.mrf.mxu0
          %2909 = vmatprep.mubr.f32.mxu0 %v2665
          %2910 = vmatmul.mubr.f32.gmra.mxu0 %v2664
          %v2911 = vpop.f32.mrf.mxu0
          %v2912 = vadd.f32 %v2713, %v2911
          %v2913 = vpop.f32.mrf.mxu0
          %2914 = vmatprep.mubr.f32.mxu0 %v2667
          %2915 = vmatmul.mubr.f32.gmra.mxu0 %v2666
          %v2916 = vpop.f32.mrf.mxu0
          %v2917 = vadd.f32 %v2713, %v2916
          %v2918 = vpop.f32.mrf.mxu0
          %2919 = vmatprep.mubr.f32.mxu0 %v2669
          %2920 = vmatmul.mubr.f32.gmra.mxu0 %v2668
          %v2921 = vpop.f32.mrf.mxu0
          %v2922 = vadd.f32 %v2713, %v2921
          %v2923 = vpop.f32.mrf.mxu0
          %2924 = vmatprep.mubr.f32.mxu0 %v2671
          %2925 = vmatmul.mubr.f32.gmra.mxu0 %v2670
          %v2926 = vpop.f32.mrf.mxu0
          %v2927 = vadd.f32 %v2713, %v2926
          %v2928 = vpop.f32.mrf.mxu0
          %2929 = vmatprep.mubr.f32.mxu0 %v2673
          %2930 = vmatmul.mubr.f32.gmra.mxu0 %v2672
          %v2931 = vpop.f32.mrf.mxu0
          %v2932 = vadd.f32 %v2713, %v2931
          %v2933 = vpop.f32.mrf.mxu0
          %2934 = vmatprep.mubr.f32.mxu0 %v2675
          %2935 = vmatmul.mubr.f32.gmra.mxu0 %v2674
          %v2936 = vpop.f32.mrf.mxu0
          %v2937 = vadd.f32 %v2713, %v2936
          %v2938 = vpop.f32.mrf.mxu0
          %2939 = vdwg.mxu0
          %2940 = vst [vmem:[%s407] sm:$0xff] %v2782
          %2941 = vst [vmem:[%s407 + $0x8] sm:$0xff] %v2787
          %2942 = vst [vmem:[%s407 + $0x10] sm:$0xff] %v2792
          %2943 = vst [vmem:[%s407 + $0x18] sm:$0xff] %v2797
          %2944 = vst [vmem:[%s407 + $0x20] sm:$0xff] %v2802
          %2945 = vst [vmem:[%s407 + $0x28] sm:$0xff] %v2807
          %2946 = vst [vmem:[%s407 + $0x30] sm:$0xff] %v2812
          %2947 = vst [vmem:[%s407 + $0x38] sm:$0xff] %v2817
          %2948 = vst [vmem:[%s407 + $0x40] sm:$0xff] %v2822
          %2949 = vst [vmem:[%s407 + $0x48] sm:$0xff] %v2827
          %2950 = vst [vmem:[%s407 + $0x50] sm:$0xff] %v2832
          %2951 = vst [vmem:[%s407 + $0x58] sm:$0xff] %v2837
          %2952 = vst [vmem:[%s407 + $0x60] sm:$0xff] %v2842
          %2953 = vst [vmem:[%s407 + $0x68] sm:$0xff] %v2847
          %2954 = vst [vmem:[%s407 + $0x70] sm:$0xff] %v2852
          %2955 = vst [vmem:[%s407 + $0x78] sm:$0xff] %v2857
          %2956 = vst [vmem:[%s407 + $0x80] sm:$0xff] %v2862
          %2957 = vst [vmem:[%s407 + $0x88] sm:$0xff] %v2867
          %2958 = vst [vmem:[%s407 + $0x90] sm:$0xff] %v2872
          %2959 = vst [vmem:[%s407 + $0x98] sm:$0xff] %v2877
          %2960 = vst [vmem:[%s407 + $0xa0] sm:$0xff] %v2882
          %2961 = vst [vmem:[%s407 + $0xa8] sm:$0xff] %v2887
          %2962 = vst [vmem:[%s407 + $0xb0] sm:$0xff] %v2892
          %2963 = vst [vmem:[%s407 + $0xb8] sm:$0xff] %v2897
          %2964 = vst [vmem:[%s407 + $0xc0] sm:$0xff] %v2902
          %2965 = vst [vmem:[%s407 + $0xc8] sm:$0xff] %v2907
          %2966 = vst [vmem:[%s407 + $0xd0] sm:$0xff] %v2912
          %2967 = vst [vmem:[%s407 + $0xd8] sm:$0xff] %v2917
          %2968 = vst [vmem:[%s407 + $0xe0] sm:$0xff] %v2922
          %2969 = vst [vmem:[%s407 + $0xe8] sm:$0xff] %v2927
          %2970 = vst [vmem:[%s407 + $0xf0] sm:$0xff] %v2932
          %2971 = vst [vmem:[%s407 + $0xf8] sm:$0xff] %v2937
        $region79: #{tpu_custom_call.1} parent=66 // pred_fallthru
          _
        %s2972 = sand.u32 %s215, 1
        %s2973 = scalar_lea.sflag [#allocation5], %s2972
        %s2974 = sand.u32 %s215, 1
        %s2975 = smul.addr %s2974, 256
        %s2976 = scalar_lea.vmem [#allocation4], %s2975
        // Predicated region
        $region80: #{tpu_custom_call.1} parent=66 // pred_check
          %p2977 = pneg %p225
        $region81: #{tpu_custom_call.1} parent=66 // pred_check_branch
          %2979 = sbr.rel (%p2977) target = $region83
        $region82: #{tpu_custom_call.1} parent=66 // pred_region
          %s2980 = smul.u32 32, %s25
          %s2982 = ssub.s32 4096, 4096
          %2983 = vsyncadd %s2973, %s2982
          %s2984 = smul.addr %s2980, 128
          %s2985 = scalar_lea.hbm %s7, %s2984
          %s2986 = sshll.u32 %s2976, 4
          %s2987 = int_to_ptr.vmem [resolvable:$true] %s2986
          %2992 = dma.vmem_to_hbm [thread:$0]  %s2987, 4096, %s2985, %s2973, 128, 128, 8
        $region83: #{tpu_custom_call.1} parent=66 // pred_fallthru
          _
      $region67: #{tpu_custom_call.1} parent=5 // pred_fallthru
        _
      %p2993 = scmp.le.s32.totalorder 2, %s16
      // Predicated region
      $region84: #{tpu_custom_call.1} parent=5 // pred_check
        %p2994 = pneg %p2993
      $region85: #{tpu_custom_call.1} parent=5 // pred_check_branch
        %2996 = sbr.rel (%p2994) target = $region87
      $region86: #{tpu_custom_call.1} parent=5 // pred_region
        %s2997 = ssub.s32 %s16, 2
        // Predicated region
        $region88: #{tpu_custom_call.1} parent=86 // pred_check
          %p2998 = pneg %p231
        $region89: #{tpu_custom_call.1} parent=86 // pred_check_branch
          %3000 = sbr.rel (%p2998) target = $region91
        $region90: #{tpu_custom_call.1} parent=86 // pred_region
          %s3001 = sand.u32 %s216, 1
          %s3002 = scalar_lea.sflag [#allocation5], %s3001
          %s3003 = sand.u32 %s216, 1
          %s3004 = smul.addr %s3003, 256
          %s3005 = scalar_lea.vmem [#allocation4], %s3004
          %3006 = dma.done %s3002, 4096
        $region91: #{tpu_custom_call.1} parent=86 // pred_fallthru
          _
      $region87: #{tpu_custom_call.1} parent=5 // pred_fallthru
        _
    $region6: #{tpu_custom_call.1} parent=1 // loop_footer
      %s20 = sadd.s32 1, %s16
    $region7: #{tpu_custom_call.1} parent=1 // loop_footer_branch
      %15 = sbr.rel target = $region3
    $region8: #{tpu_custom_call.1} parent=1 // loop_exit
      _
    %3007 = vsyncpa [#allocation5], 1
    %s3008 = scalar_lea.sflag [#allocation5], 1
    %3009 = vsyncpa %s3008, 1

</llo_original>
